<compile_context>
chip_gen: v7x
topology: tpu7x:2x2x1
jax: 0.10.0
libtpu: 0.0.40
codegen_flags: <defaults>
</compile_context>

<pallas_src>
import functools

import jax
import jax.numpy as jnp
from jax.experimental import pallas as pl
from jax.experimental.pallas import tpu as pltpu


_FUSED_VMEM_BUDGET = 36 * 1024 * 1024   # use fused path only if estimate fits (v7x-safe)
_FUSED_VMEM_LIMIT = 44 * 1024 * 1024    # scoped-VMEM limit for the fused call


# ----------------------------- Pallas kernels ------------------------------

def _fused_decoder_kernel(x_ref, w0_ref, b0_ref, w1_ref, w2_ref, b2_ref,
                          y_ref, pool_ref, *, hw, tile, masked):
    """Fully fused decoder forward for one (sample, hw-tile) grid point.

    y_ref is the per-sample (co, hw_pad) plane, VMEM-resident across the
    row-tile grid axis (index map constant along k).  pool_ref is a (co, 1)
    f32 scratch holding raw channel sums.
    """
    k = pl.program_id(1)
    nk = pl.num_programs(1)

    @pl.when(k == 0)
    def _():
        pool_ref[...] = jnp.zeros_like(pool_ref)

    # conv0 (1x1) + folded BN + ReLU on this hw tile: (co,cin)@(cin,tile).
    yt = jnp.dot(w0_ref[...], x_ref[...].astype(jnp.bfloat16),
                 preferred_element_type=jnp.float32)
    yt = jnp.maximum(yt + b0_ref[...], 0.0)

    col = pl.multiple_of(k * tile, tile)
    y_ref[:, pl.ds(col, tile)] = yt            # stays in VMEM, no HBM traffic

    # Global-average-pool accumulation: raw sums, scaled once at the end.
    if masked:                                  # only traced when hw was padded
        gcol = col + jax.lax.broadcasted_iota(jnp.int32, yt.shape, 1)
        yt = jnp.where(gcol < hw, yt, 0.0)
    pool_ref[...] += jnp.sum(yt, axis=1, keepdims=True)

    # Last tile of this sample: SE MLP + sigmoid gate applied in place, then
    # Pallas writes the finished plane back to HBM exactly once.
    @pl.when(k == nk - 1)
    def _():
        p = (pool_ref[...] * (1.0 / hw)).astype(jnp.bfloat16)          # (co,1)
        hmid = jnp.maximum(
            jnp.dot(w1_ref[...], p, preferred_element_type=jnp.float32), 0.0)
        z = jnp.dot(w2_ref[...], hmid.astype(jnp.bfloat16),
                    preferred_element_type=jnp.float32) + b2_ref[...]
        s = 1.0 + jax.nn.sigmoid(z)             # exact sigmoid (mem-bound: free)
        y_ref[...] = y_ref[...] * s             # gate whole resident plane


def _conv_pool_kernel(x_ref, w0_ref, b0_ref, out_ref, pool_ref, *, hw, tile,
                      masked):
    """Fallback kernel 1: out0 = ReLU(BN(conv0(x))) (bf16) + pooled raw sums."""
    k = pl.program_id(1)

    @pl.when(k == 0)
    def _():
        pool_ref[...] = jnp.zeros_like(pool_ref)

    yt = jnp.dot(w0_ref[...], x_ref[...].astype(jnp.bfloat16),
                 preferred_element_type=jnp.float32)
    yt = jnp.maximum(yt + b0_ref[...], 0.0)
    out_ref[...] = yt.astype(out_ref.dtype)     # bf16 intermediate: half bytes

    if masked:
        gcol = k * tile + jax.lax.broadcasted_iota(jnp.int32, yt.shape, 1)
        yt = jnp.where(gcol < hw, yt, 0.0)
    pool_ref[...] += jnp.sum(yt, axis=1, keepdims=True)


def _gate_kernel(s_ref, o_ref, y_ref):
    """Fallback kernel 2: y = out0 * (1 + sigmoid(SE)); scale precomputed."""
    y_ref[...] = o_ref[...].astype(jnp.float32) * s_ref[...]


# ----------------------------- wrappers / glue ------------------------------

def _pick_tile(hw_pad, cap=1024):
    """Largest multiple of 128 (<= cap) dividing hw_pad (hw_pad % 128 == 0)."""
    cap = min(cap, hw_pad)
    best = 128
    for t in range(128, cap + 1, 128):
        if hw_pad % t == 0:
            best = t
    return best


def fold_bn_into_conv(w, gamma, beta, mean, var, eps=1e-5):
    """Fold eval-mode BN (per output channel) into a (Cout, Cin) 1x1 weight."""
    scale = gamma / jnp.sqrt(var + eps)
    return w * scale[:, None], beta - mean * scale


def decoder_forward(params, x, force_split=False):
    n, cin, h, w = x.shape
    hw = h * w
    co = params['w0'].shape[0]

    hw_pad = ((hw + 127) // 128) * 128
    xr = x.reshape(n, cin, hw)                 # pure reshape, no transpose/copy
    if hw_pad != hw:
        xr = jnp.pad(xr, ((0, 0), (0, 0), (0, hw_pad - hw)))
    masked = hw_pad != hw

    tile = _pick_tile(hw_pad)
    n_tiles = hw_pad // tile
    grid = (n, n_tiles)

    # VMEM estimate for the fused (plane-resident) path.
    est = (2 * co * hw_pad * 4                 # resident y plane (dbl-buffered)
           + 2 * cin * tile * 4                # x tile (dbl-buffered)
           + 2 * (co * cin + 2 * co * co) * 2  # bf16 weights
           + 4 * co * 128)                     # pool scratch (lane-padded)

    if (not force_split) and est <= _FUSED_VMEM_BUDGET:
        # -------- single fused kernel: conv0+BN+ReLU + pool + SE gate --------
        # NOTE (v7x, batch==1): only the batch axis is "parallel"; one core is
        # idle.  Splitting hw across cores with partial pools is a possible
        # follow-up, not done here.
        y_full = pl.pallas_call(
            functools.partial(_fused_decoder_kernel, hw=hw, tile=tile,
                              masked=masked),
            out_shape=jax.ShapeDtypeStruct((n, co, hw_pad), jnp.float32),
            grid=grid,
            in_specs=[
                pl.BlockSpec((None, cin, tile), lambda i, k: (i, 0, k)),
                pl.BlockSpec((co, cin), lambda i, k: (0, 0)),
                pl.BlockSpec((co, 1), lambda i, k: (0, 0)),
                pl.BlockSpec((co, co), lambda i, k: (0, 0)),
                pl.BlockSpec((co, co), lambda i, k: (0, 0)),
                pl.BlockSpec((co, 1), lambda i, k: (0, 0)),
            ],
            out_specs=pl.BlockSpec((None, co, hw_pad), lambda i, k: (i, 0, 0)),
            scratch_shapes=[pltpu.VMEM((co, 1), jnp.float32)],
            compiler_params=pltpu.CompilerParams(
                dimension_semantics=("parallel", "arbitrary"),
                vmem_limit_bytes=_FUSED_VMEM_LIMIT),
        )(xr, params['w0'], params['b0'], params['w1'], params['w2'],
          params['b2'])
    else:
        # -------- fallback: 2 kernels + tiny XLA SE (plane too big for VMEM) --
        out0, pooled = pl.pallas_call(
            functools.partial(_conv_pool_kernel, hw=hw, tile=tile,
                              masked=masked),
            out_shape=(jax.ShapeDtypeStruct((n, co, hw_pad), jnp.bfloat16),
                       jax.ShapeDtypeStruct((n, co, 1), jnp.float32)),
            grid=grid,
            in_specs=[
                pl.BlockSpec((None, cin, tile), lambda i, k: (i, 0, k)),
                pl.BlockSpec((co, cin), lambda i, k: (0, 0)),
                pl.BlockSpec((co, 1), lambda i, k: (0, 0)),
            ],
            out_specs=(pl.BlockSpec((None, co, tile), lambda i, k: (i, 0, k)),
                       pl.BlockSpec((None, co, 1), lambda i, k: (i, 0, 0))),
            compiler_params=pltpu.CompilerParams(
                dimension_semantics=("parallel", "arbitrary")),
        )(xr, params['w0'], params['b0'])

        # SE MLP on an (n, co) vector: negligible work, plain XLA.  Keeps the
        # streaming gate kernel free of cross-step scratch (both axes parallel).
        pool = pooled[:, :, 0] * (1.0 / hw)
        hmid = jnp.maximum(pool @ params['w1'].astype(jnp.float32).T, 0.0)
        z = hmid @ params['w2'].astype(jnp.float32).T + params['b2'][:, 0][None]
        s = (1.0 + jax.nn.sigmoid(z))[:, :, None]            # (n, co, 1) f32

        y_full = pl.pallas_call(
            _gate_kernel,
            out_shape=jax.ShapeDtypeStruct((n, co, hw_pad), jnp.float32),
            grid=grid,
            in_specs=[pl.BlockSpec((None, co, 1), lambda i, k: (i, 0, 0)),
                      pl.BlockSpec((None, co, tile), lambda i, k: (i, 0, k))],
            out_specs=pl.BlockSpec((None, co, tile), lambda i, k: (i, 0, k)),
            compiler_params=pltpu.CompilerParams(
                dimension_semantics=("parallel", "parallel")),
        )(s, out0)

    if masked:
        y_full = y_full[:, :, :hw]
    return y_full.reshape(n, co, h, w)          # pure reshape back to NCHW


def _reference(x, w0f, b0f, w1, w2, b2):
    """Plain-JAX f32 reference of the same forward pass (NCHW throughout)."""
    n, cin, h, w = x.shape
    co = w0f.shape[0]
    xr = x.reshape(n, cin, h * w)
    o0 = jnp.maximum(jnp.einsum('oc,nch->noh', w0f, xr)
                     + b0f[None, :, None], 0.0)
    pool = o0.mean(axis=2)
    se = jax.nn.sigmoid(jnp.maximum(pool @ w1.T, 0.0) @ w2.T + b2[None, :])
    return (o0 * (1.0 + se[:, :, None])).reshape(n, co, h, w)


# --------------------------------- main --------------------------------------

if __name__ == "__main__":
    n, cin, co, h, w = 2, 512, 256, 16, 16     # channel sizes fixed by the module

    root = jax.random.PRNGKey(0)
    ks = jax.random.split(root, 6)
    x = jax.random.normal(ks[0], (n, cin, h, w), jnp.float32)
    w0 = 0.05 * jax.random.normal(ks[1], (co, cin), jnp.float32)   # (out, in)
    w1 = 0.05 * jax.random.normal(ks[2], (co, co), jnp.float32)
    w2 = 0.05 * jax.random.normal(ks[3], (co, co), jnp.float32)
    b2 = 0.05 * jax.random.normal(ks[4], (co,), jnp.float32)

    # Eval-mode InPlaceABNSync (activation='none') with default running stats,
    # folded into conv0's weight/bias.
    gamma = jnp.ones((co,), jnp.float32)
    beta = jnp.zeros((co,), jnp.float32)
    r_mean = jnp.zeros((co,), jnp.float32)
    r_var = jnp.ones((co,), jnp.float32)
    w0f, b0f = fold_bn_into_conv(w0, gamma, beta, r_mean, r_var)

    params = {
        'w0': w0f.astype(jnp.bfloat16),          # MXU operands in bf16
        'b0': b0f.reshape(co, 1),                # elementwise stays f32
        'w1': w1.astype(jnp.bfloat16),
        'w2': w2.astype(jnp.bfloat16),
        'b2': b2.reshape(co, 1),
    }

    fwd = jax.jit(decoder_forward, static_argnames=("force_split",))

    # Primary (fused) path.
    out = jax.block_until_ready(fwd(params, x))
    assert out.shape == (n, co, h, w)
    assert bool(jnp.all(jnp.isfinite(out)))
    ref = _reference(x, w0f, b0f, w1, w2, b2)
    assert bool(jnp.allclose(out, ref, atol=0.1, rtol=0.05))   # bf16 matmul tol

    # Fallback (split) path exercised on the same shapes for correctness.
    out_split = jax.block_until_ready(fwd(params, x, force_split=True))
    assert bool(jnp.allclose(out_split, ref, atol=0.1, rtol=0.05))

    # Odd spatial size: exercises lane padding + masked pool (v7x tiling fix).
    h2, w2s = 9, 9
    x2 = jax.random.normal(ks[5], (n, cin, h2, w2s), jnp.float32)
    out2 = jax.block_until_ready(fwd(params, x2))
    ref2 = _reference(x2, w0f, b0f, w1, w2, b2)
    assert out2.shape == (n, co, h2, w2s)
    assert bool(jnp.allclose(out2, ref2, atol=0.1, rtol=0.05))

    print("KERNEL_OK")
</pallas_src>

<mosaic_0001>
module attributes {stable_mosaic.version = 11 : i64} {
  func.func @_fused_decoder_kernel(%arg0: i32, %arg1: i32, %arg2: memref<1x512x256xf32, #tpu.memory_space<vmem>>, %arg3: memref<256x512xbf16, #tpu.memory_space<vmem>>, %arg4: memref<256x1xf32, #tpu.memory_space<vmem>>, %arg5: memref<256x256xbf16, #tpu.memory_space<vmem>>, %arg6: memref<256x256xbf16, #tpu.memory_space<vmem>>, %arg7: memref<256x1xf32, #tpu.memory_space<vmem>>, %arg8: memref<1x256x256xf32, #tpu.memory_space<vmem>>, %arg9: memref<256x1xf32, #tpu.memory_space<vmem>>) attributes {dimension_semantics = [#tpu.dimension_semantics<parallel>, #tpu.dimension_semantics<arbitrary>], iteration_bounds = array<i64: 2, 1>, scalar_prefetch = 0 : i64, scratch_operands = 1 : i64, tpu.core_type = #tpu.core_type<tc>, window_params = [{transform_indices = @transform_0, window_bounds = array<i64: 1, 512, 256>}, {pipeline_mode = #tpu.pipeline_mode<synchronous>, transform_indices = @transform_1, window_bounds = array<i64: 256, 512>}, {pipeline_mode = #tpu.pipeline_mode<synchronous>, transform_indices = @transform_2, window_bounds = array<i64: 256, 1>}, {pipeline_mode = #tpu.pipeline_mode<synchronous>, transform_indices = @transform_3, window_bounds = array<i64: 256, 256>}, {pipeline_mode = #tpu.pipeline_mode<synchronous>, transform_indices = @transform_4, window_bounds = array<i64: 256, 256>}, {pipeline_mode = #tpu.pipeline_mode<synchronous>, transform_indices = @transform_5, window_bounds = array<i64: 256, 1>}, {transform_indices = @transform_6, window_bounds = array<i64: 1, 256, 256>}]} {
    %c0_i32 = arith.constant 0 : i32
    %0 = arith.cmpi eq, %arg1, %c0_i32 : i32
    %1 = arith.extui %0 : i1 to i32
    %c0_i32_0 = arith.constant 0 : i32
    %2 = arith.cmpi ne, %1, %c0_i32_0 : i32
    scf.if %2 {
      %cst_17 = arith.constant 0.000000e+00 : f32
      %27 = vector.broadcast %cst_17 : f32 to vector<256x1xf32>
      %c0_18 = arith.constant 0 : index
      %c0_19 = arith.constant 0 : index
      %28 = vector.load %arg9[%c0_18, %c0_19] : memref<256x1xf32, #tpu.memory_space<vmem>>, vector<256x1xf32>
      tpu.vector_store %arg9[%c0_18, %c0_19], %27 {strides = array<i32>} : memref<256x1xf32, #tpu.memory_space<vmem>>, vector<256x1xf32>,
    } else {
    }
    %c0 = arith.constant 0 : index
    %c0_1 = arith.constant 0 : index
    %3 = vector.load %arg3[%c0, %c0_1] : memref<256x512xbf16, #tpu.memory_space<vmem>>, vector<256x512xbf16>
    %c0_2 = arith.constant 0 : index
    %c0_3 = arith.constant 0 : index
    %c0_4 = arith.constant 0 : index
    %4 = vector.load %arg2[%c0_2, %c0_3, %c0_4] : memref<1x512x256xf32, #tpu.memory_space<vmem>>, vector<1x512x256xf32>
    %5 = vector.shape_cast %4 : vector<1x512x256xf32> to vector<512x256xf32>
    %6 = arith.truncf %5 : vector<512x256xf32> to vector<512x256xbf16>
    %cst = arith.constant dense<0.000000e+00> : vector<256x256xf32>
    %7 = tpu.matmul %3, %6, %cst {dimension_numbers = #tpu.dot_dimension_numbers<[1], [0], [0], [1], [0, 0, 1, 1], [], []>} : vector<256x512xbf16>, vector<512x256xbf16>, vector<256x256xf32> -> vector<256x256xf32>
    %c0_5 = arith.constant 0 : index
    %c0_6 = arith.constant 0 : index
    %8 = vector.load %arg4[%c0_5, %c0_6] : memref<256x1xf32, #tpu.memory_space<vmem>>, vector<256x1xf32>
    %9 = vector.broadcast %8 : vector<256x1xf32> to vector<256x256xf32>
    %10 = arith.addf %7, %9 : vector<256x256xf32>
    %cst_7 = arith.constant 0.000000e+00 : f32
    %11 = vector.broadcast %cst_7 : f32 to vector<256x256xf32>
    %12 = arith.maximumf %10, %11 : vector<256x256xf32>
    %c256_i32 = arith.constant 256 : i32
    %13 = arith.muli %arg1, %c256_i32 : i32
    %14 = tpu.assume_multiple %13, 256 : i32
    %c0_8 = arith.constant 0 : index
    %c0_9 = arith.constant 0 : index
    %15 = arith.index_cast %14 : i32 to index
    %16 = vector.load %arg8[%c0_8, %c0_9, %15] : memref<1x256x256xf32, #tpu.memory_space<vmem>>, vector<1x256x256xf32>
    %17 = vector.shape_cast %16 : vector<1x256x256xf32> to vector<256x256xf32>
    %18 = vector.shape_cast %12 : vector<256x256xf32> to vector<1x256x256xf32>
    tpu.vector_store %arg8[%c0_8, %c0_9, %15], %18 {strides = array<i32>} : memref<1x256x256xf32, #tpu.memory_space<vmem>>, vector<1x256x256xf32>,
    %c0_10 = arith.constant 0 : index
    %c0_11 = arith.constant 0 : index
    %19 = vector.load %arg9[%c0_10, %c0_11] : memref<256x1xf32, #tpu.memory_space<vmem>>, vector<256x1xf32>
    %cst_12 = arith.constant dense<0.000000e+00> : vector<256xf32>
    %20 = vector.multi_reduction <add>, %12, %cst_12 [1] : vector<256x256xf32> to vector<256xf32>
    %21 = vector.shape_cast %20 : vector<256xf32> to vector<256x1xf32>
    %22 = arith.addf %19, %21 : vector<256x1xf32>
    %c0_13 = arith.constant 0 : index
    %c0_14 = arith.constant 0 : index
    %23 = vector.load %arg9[%c0_13, %c0_14] : memref<256x1xf32, #tpu.memory_space<vmem>>, vector<256x1xf32>
    tpu.vector_store %arg9[%c0_13, %c0_14], %22 {strides = array<i32>} : memref<256x1xf32, #tpu.memory_space<vmem>>, vector<256x1xf32>,
    %c0_i32_15 = arith.constant 0 : i32
    %24 = arith.cmpi eq, %arg1, %c0_i32_15 : i32
    %25 = arith.extui %24 : i1 to i32
    %c0_i32_16 = arith.constant 0 : i32
    %26 = arith.cmpi ne, %25, %c0_i32_16 : i32
    scf.if %26 {
      %c0_17 = arith.constant 0 : index
      %c0_18 = arith.constant 0 : index
      %27 = vector.load %arg9[%c0_17, %c0_18] : memref<256x1xf32, #tpu.memory_space<vmem>>, vector<256x1xf32>
      %cst_19 = arith.constant 3.906250e-03 : f32
      %28 = vector.broadcast %cst_19 : f32 to vector<256x1xf32>
      %29 = arith.mulf %27, %28 : vector<256x1xf32>
      %30 = arith.truncf %29 : vector<256x1xf32> to vector<256x1xbf16>
      %c0_20 = arith.constant 0 : index
      %c0_21 = arith.constant 0 : index
      %31 = vector.load %arg5[%c0_20, %c0_21] : memref<256x256xbf16, #tpu.memory_space<vmem>>, vector<256x256xbf16>
      %cst_22 = arith.constant dense<0.000000e+00> : vector<256x1xf32>
      %32 = tpu.matmul %31, %30, %cst_22 {dimension_numbers = #tpu.dot_dimension_numbers<[1], [0], [0], [1], [0, 0, 1, 1], [], []>} : vector<256x256xbf16>, vector<256x1xbf16>, vector<256x1xf32> -> vector<256x1xf32>
      %cst_23 = arith.constant 0.000000e+00 : f32
      %33 = vector.broadcast %cst_23 : f32 to vector<256x1xf32>
      %34 = arith.maximumf %32, %33 : vector<256x1xf32>
      %c0_24 = arith.constant 0 : index
      %c0_25 = arith.constant 0 : index
      %35 = vector.load %arg6[%c0_24, %c0_25] : memref<256x256xbf16, #tpu.memory_space<vmem>>, vector<256x256xbf16>
      %36 = arith.truncf %34 : vector<256x1xf32> to vector<256x1xbf16>
      %cst_26 = arith.constant dense<0.000000e+00> : vector<256x1xf32>
      %37 = tpu.matmul %35, %36, %cst_26 {dimension_numbers = #tpu.dot_dimension_numbers<[1], [0], [0], [1], [0, 0, 1, 1], [], []>} : vector<256x256xbf16>, vector<256x1xbf16>, vector<256x1xf32> -> vector<256x1xf32>
      %c0_27 = arith.constant 0 : index
      %c0_28 = arith.constant 0 : index
      %38 = vector.load %arg7[%c0_27, %c0_28] : memref<256x1xf32, #tpu.memory_space<vmem>>, vector<256x1xf32>
      %39 = arith.addf %37, %38 : vector<256x1xf32>
      %40 = arith.negf %39 : vector<256x1xf32>
      %41 = math.exp %40 : vector<256x1xf32>
      %cst_29 = arith.constant 1.000000e+00 : f32
      %42 = vector.broadcast %cst_29 : f32 to vector<256x1xf32>
      %43 = arith.addf %42, %41 : vector<256x1xf32>
      %44 = arith.divf %42, %43 : vector<256x1xf32>
      %cst_30 = arith.constant 1.000000e+00 : f32
      %45 = vector.broadcast %cst_30 : f32 to vector<256x1xf32>
      %46 = arith.addf %45, %44 : vector<256x1xf32>
      %c0_31 = arith.constant 0 : index
      %c0_32 = arith.constant 0 : index
      %c0_33 = arith.constant 0 : index
      %47 = vector.load %arg8[%c0_31, %c0_32, %c0_33] : memref<1x256x256xf32, #tpu.memory_space<vmem>>, vector<1x256x256xf32>
      %48 = vector.shape_cast %47 : vector<1x256x256xf32> to vector<256x256xf32>
      %49 = vector.broadcast %46 : vector<256x1xf32> to vector<256x256xf32>
      %50 = arith.mulf %48, %49 : vector<256x256xf32>
      %c0_34 = arith.constant 0 : index
      %c0_35 = arith.constant 0 : index
      %c0_36 = arith.constant 0 : index
      %51 = vector.load %arg8[%c0_34, %c0_35, %c0_36] : memref<1x256x256xf32, #tpu.memory_space<vmem>>, vector<1x256x256xf32>
      %52 = vector.shape_cast %51 : vector<1x256x256xf32> to vector<256x256xf32>
      %53 = vector.shape_cast %50 : vector<256x256xf32> to vector<1x256x256xf32>
      tpu.vector_store %arg8[%c0_34, %c0_35, %c0_36], %53 {strides = array<i32>} : memref<1x256x256xf32, #tpu.memory_space<vmem>>, vector<1x256x256xf32>,
    } else {
    }
    return
  }
  func.func @transform_0(%arg0: i32, %arg1: i32) -> (i32, i32, i32) {
    %c0_i32 = arith.constant 0 : i32
    %c0_i32_0 = arith.constant 0 : i32
    return %arg0, %c0_i32, %arg1 : i32, i32, i32
  }
  func.func @transform_1(%arg0: i32, %arg1: i32) -> (i32, i32) {
    %c0_i32 = arith.constant 0 : i32
    %c0_i32_0 = arith.constant 0 : i32
    %c0_i32_1 = arith.constant 0 : i32
    return %c0_i32, %c0_i32_0 : i32, i32
  }
  func.func @transform_2(%arg0: i32, %arg1: i32) -> (i32, i32) {
    %c0_i32 = arith.constant 0 : i32
    %c0_i32_0 = arith.constant 0 : i32
    %c0_i32_1 = arith.constant 0 : i32
    return %c0_i32, %c0_i32_0 : i32, i32
  }
  func.func @transform_3(%arg0: i32, %arg1: i32) -> (i32, i32) {
    %c0_i32 = arith.constant 0 : i32
    %c0_i32_0 = arith.constant 0 : i32
    %c0_i32_1 = arith.constant 0 : i32
    return %c0_i32, %c0_i32_0 : i32, i32
  }
  func.func @transform_4(%arg0: i32, %arg1: i32) -> (i32, i32) {
    %c0_i32 = arith.constant 0 : i32
    %c0_i32_0 = arith.constant 0 : i32
    %c0_i32_1 = arith.constant 0 : i32
    return %c0_i32, %c0_i32_0 : i32, i32
  }
  func.func @transform_5(%arg0: i32, %arg1: i32) -> (i32, i32) {
    %c0_i32 = arith.constant 0 : i32
    %c0_i32_0 = arith.constant 0 : i32
    %c0_i32_1 = arith.constant 0 : i32
    return %c0_i32, %c0_i32_0 : i32, i32
  }
  func.func @transform_6(%arg0: i32, %arg1: i32) -> (i32, i32, i32) {
    %c0_i32 = arith.constant 0 : i32
    %c0_i32_0 = arith.constant 0 : i32
    %c0_i32_1 = arith.constant 0 : i32
    return %arg0, %c0_i32, %c0_i32_0 : i32, i32, i32
  }
}

</mosaic_0001>

<llo_original>
// kernel: decoder_forward.1
$region0: #{decoder_forward.1}
  #allocation0 [shape = 'u32[]', space=smem, size = 0x4, offset = 0x4, fixed_abs, tag = 'smem constant byte address 0x4 - core index']
  #allocation1 [shape = 'u32[144,128]{1,0:T(1,128)}', space=vmem, size = 0x12000, scoped, tag = 'internal scratch']
  #allocation2 [shape = 'f32[256,1]{1,0:T(8,128)}', space=vmem, size = 0x20000, scoped, tag = 'scratch operand']
  %s0 = inlined_call_operand.vmem [shape: f32[2,512,256], index: 0, kind: input, shape index: {}]
  %s1 = inlined_call_operand.vmem [shape: bf16[256,512], index: 1, kind: input, shape index: {}]
  %s2 = inlined_call_operand.vmem [shape: f32[256,1], index: 2, kind: input, shape index: {}]
  %s3 = inlined_call_operand.vmem [shape: bf16[256,256], index: 3, kind: input, shape index: {}]
  %s4 = inlined_call_operand.vmem [shape: bf16[256,256], index: 4, kind: input, shape index: {}]
  %s5 = inlined_call_operand.vmem [shape: f32[256,1], index: 5, kind: input, shape index: {}]
  %s6 = inlined_call_operand.vmem [shape: f32[2,256,256], index: 6, kind: output, shape index: {}]
  %s7 = sld [smem:[#allocation0]]
  $region65: #{decoder_forward.1} parent=0
    _
  %s9 = ssub.s32 1, %s7
  %s10 = scalar_select 0, %s9, %s7
  loop: start=0, step=1, limit=4
  $region2: #{decoder_forward.1} parent=0 // loop_pre_header
    _
  $region3: #{decoder_forward.1} parent=0 // loop_header
    %s12 = sphi 0, %s16
    %p13 = scmp.ge.s32.totalorder %s12, 4
    %s19 = sphi 0, %s31
    %s20 = sphi 0, %s27
    %s21 = sphi 0, %s19
    %s22 = sphi 0, %s20
    %s23 = sphi 0, %s21
    %s24 = sphi 0, %s22
    %s36 = sphi 0, %s38
    %s39 = sphi 0, %s36
    %s40 = sphi 0, %s39
    %s56 = sphi 0, %s40
    %s60 = sphi 0, %s60
    %s62 = sphi 0, %s60
    %s63 = sphi 0, %s62
    %s77 = sphi 0, %s63
    %s81 = sphi 0, %s81
    %s83 = sphi 0, %s81
    %s84 = sphi 0, %s83
    %s98 = sphi 0, %s84
    %s102 = sphi 0, %s102
    %s104 = sphi 0, %s102
    %s105 = sphi 0, %s104
    %s119 = sphi 0, %s105
    %s123 = sphi 0, %s123
    %s125 = sphi 0, %s123
    %s126 = sphi 0, %s125
    %s140 = sphi 0, %s126
    %s144 = sphi 0, %s144
    %s146 = sphi 0, %s144
    %s147 = sphi 0, %s146
    %s161 = sphi 0, %s147
    %s167 = sphi 0, %s169
    %s170 = sphi 0, %s167
    %s171 = sphi 0, %s170
    %s187 = sphi 0, %s171
  $region4: #{decoder_forward.1} parent=0 // loop_header_branch
    %15 = sbr.rel (%p13) target = $region8
  $region5: #{decoder_forward.1} parent=0 // loop_body
    %s17 = ssub.s32 %s12, 1
    %s18 = ssub.s32 %s12, 2
    %s25 = sadd.s32 1, %s20
    %p26 = scmp.ge.s32.totalorder %s25, 1
    %s27 = scalar_select %p26, 0, %s25
    %s28 = sadd.s32 1, %s19
    %s29 = scalar_select %p26, %s28, %s19
    %p30 = scmp.ge.s32.totalorder %s29, 2
    %s31 = scalar_select %p30, 0, %s29
    %s32 = ssub.s32 %s19, %s31
    %s33 = ssub.s32 %s20, %s27
    %s34 = sor.u32 %s32, %s33
    %p35 = scmp.eq.s32.totalorder %s34, 0
    %s37 = sadd.s32 %s36, 1
    %s38 = scalar_select %p35, %s36, %s37
    %p41 = pneg %p35
    %p42 = scmp.eq.s32.totalorder %s12, 1
    %p43 = por %p41, %p42
    %p44 = scmp.ne.s32.totalorder %s36, %s39
    %p45 = scmp.eq.s32.totalorder %s12, 0
    %p46 = por %p44, %p45
    %p47 = scmp.ne.s32.totalorder %s36, %s39
    %p48 = scmp.eq.s32.totalorder %s17, 1
    %p49 = por %p47, %p48
    %p50 = scmp.ne.s32.totalorder %s39, %s40
    %p51 = scmp.eq.s32.totalorder %s17, 0
    %p52 = por %p50, %p51
    %p53 = scmp.ne.s32.totalorder %s39, %s40
    %p54 = scmp.eq.s32.totalorder %s18, 1
    %p55 = por %p53, %p54
    %p57 = scmp.ne.s32.totalorder %s40, %s56
    %p58 = scmp.eq.s32.totalorder %s18, 0
    %p59 = por %p57, %p58
    %s61 = sadd.s32 %s60, 1
    %p64 = scmp.eq.s32.totalorder %s12, 1
    %p65 = scmp.ne.s32.totalorder %s60, %s62
    %p66 = scmp.eq.s32.totalorder %s12, 0
    %p67 = por %p65, %p66
    %p68 = scmp.ne.s32.totalorder %s60, %s62
    %p69 = scmp.eq.s32.totalorder %s17, 1
    %p70 = por %p68, %p69
    %p71 = scmp.ne.s32.totalorder %s62, %s63
    %p72 = scmp.eq.s32.totalorder %s17, 0
    %p73 = por %p71, %p72
    %p74 = scmp.ne.s32.totalorder %s62, %s63
    %p75 = scmp.eq.s32.totalorder %s18, 1
    %p76 = por %p74, %p75
    %p78 = scmp.ne.s32.totalorder %s63, %s77
    %p79 = scmp.eq.s32.totalorder %s18, 0
    %p80 = por %p78, %p79
    %s82 = sadd.s32 %s81, 1
    %p85 = scmp.eq.s32.totalorder %s12, 1
    %p86 = scmp.ne.s32.totalorder %s81, %s83
    %p87 = scmp.eq.s32.totalorder %s12, 0
    %p88 = por %p86, %p87
    %p89 = scmp.ne.s32.totalorder %s81, %s83
    %p90 = scmp.eq.s32.totalorder %s17, 1
    %p91 = por %p89, %p90
    %p92 = scmp.ne.s32.totalorder %s83, %s84
    %p93 = scmp.eq.s32.totalorder %s17, 0
    %p94 = por %p92, %p93
    %p95 = scmp.ne.s32.totalorder %s83, %s84
    %p96 = scmp.eq.s32.totalorder %s18, 1
    %p97 = por %p95, %p96
    %p99 = scmp.ne.s32.totalorder %s84, %s98
    %p100 = scmp.eq.s32.totalorder %s18, 0
    %p101 = por %p99, %p100
    %s103 = sadd.s32 %s102, 1
    %p106 = scmp.eq.s32.totalorder %s12, 1
    %p107 = scmp.ne.s32.totalorder %s102, %s104
    %p108 = scmp.eq.s32.totalorder %s12, 0
    %p109 = por %p107, %p108
    %p110 = scmp.ne.s32.totalorder %s102, %s104
    %p111 = scmp.eq.s32.totalorder %s17, 1
    %p112 = por %p110, %p111
    %p113 = scmp.ne.s32.totalorder %s104, %s105
    %p114 = scmp.eq.s32.totalorder %s17, 0
    %p115 = por %p113, %p114
    %p116 = scmp.ne.s32.totalorder %s104, %s105
    %p117 = scmp.eq.s32.totalorder %s18, 1
    %p118 = por %p116, %p117
    %p120 = scmp.ne.s32.totalorder %s105, %s119
    %p121 = scmp.eq.s32.totalorder %s18, 0
    %p122 = por %p120, %p121
    %s124 = sadd.s32 %s123, 1
    %p127 = scmp.eq.s32.totalorder %s12, 1
    %p128 = scmp.ne.s32.totalorder %s123, %s125
    %p129 = scmp.eq.s32.totalorder %s12, 0
    %p130 = por %p128, %p129
    %p131 = scmp.ne.s32.totalorder %s123, %s125
    %p132 = scmp.eq.s32.totalorder %s17, 1
    %p133 = por %p131, %p132
    %p134 = scmp.ne.s32.totalorder %s125, %s126
    %p135 = scmp.eq.s32.totalorder %s17, 0
    %p136 = por %p134, %p135
    %p137 = scmp.ne.s32.totalorder %s125, %s126
    %p138 = scmp.eq.s32.totalorder %s18, 1
    %p139 = por %p137, %p138
    %p141 = scmp.ne.s32.totalorder %s126, %s140
    %p142 = scmp.eq.s32.totalorder %s18, 0
    %p143 = por %p141, %p142
    %s145 = sadd.s32 %s144, 1
    %p148 = scmp.eq.s32.totalorder %s12, 1
    %p149 = scmp.ne.s32.totalorder %s144, %s146
    %p150 = scmp.eq.s32.totalorder %s12, 0
    %p151 = por %p149, %p150
    %p152 = scmp.ne.s32.totalorder %s144, %s146
    %p153 = scmp.eq.s32.totalorder %s17, 1
    %p154 = por %p152, %p153
    %p155 = scmp.ne.s32.totalorder %s146, %s147
    %p156 = scmp.eq.s32.totalorder %s17, 0
    %p157 = por %p155, %p156
    %p158 = scmp.ne.s32.totalorder %s146, %s147
    %p159 = scmp.eq.s32.totalorder %s18, 1
    %p160 = por %p158, %p159
    %p162 = scmp.ne.s32.totalorder %s147, %s161
    %p163 = scmp.eq.s32.totalorder %s18, 0
    %p164 = por %p162, %p163
    %s165 = ssub.s32 %s19, %s31
    %p166 = scmp.eq.s32.totalorder %s165, 0
    %s168 = sadd.s32 %s167, 1
    %s169 = scalar_select %p166, %s167, %s168
    %p172 = pneg %p166
    %p173 = scmp.eq.s32.totalorder %s12, 1
    %p174 = por %p172, %p173
    %p175 = scmp.ne.s32.totalorder %s167, %s170
    %p176 = scmp.eq.s32.totalorder %s12, 0
    %p177 = por %p175, %p176
    %p178 = scmp.ne.s32.totalorder %s167, %s170
    %p179 = scmp.eq.s32.totalorder %s17, 1
    %p180 = por %p178, %p179
    %p181 = scmp.ne.s32.totalorder %s170, %s171
    %p182 = scmp.eq.s32.totalorder %s17, 0
    %p183 = por %p181, %p182
    %p184 = scmp.ne.s32.totalorder %s170, %s171
    %p185 = scmp.eq.s32.totalorder %s18, 1
    %p186 = por %p184, %p185
    %p188 = scmp.ne.s32.totalorder %s171, %s187
    %p189 = scmp.eq.s32.totalorder %s18, 0
    %p190 = por %p188, %p189
    %p191 = scmp.le.s32.totalorder 1, %s12
    %p192 = scmp.lt.s32.totalorder %s12, 3
    %p193 = pnand %p191, %p192
    %p194 = pneg %p193
    // Predicated region
    $region9: #{decoder_forward.1} parent=5 // pred_check
      _
    $region10: #{decoder_forward.1} parent=5 // pred_check_branch
      %196 = sbr.rel (%p193) target = $region12
    $region11: #{decoder_forward.1} parent=5 // pred_region
      %s197 = ssub.s32 %s12, 1
      // Predicated region
      $region13: #{decoder_forward.1} parent=11 // pred_check
        %p198 = pneg %p73
      $region14: #{decoder_forward.1} parent=11 // pred_check_branch
        %200 = sbr.rel (%p198) target = $region16
      $region15: #{decoder_forward.1} parent=11 // pred_region
        _
      $region16: #{decoder_forward.1} parent=11 // pred_fallthru
        _
      // Predicated region
      $region17: #{decoder_forward.1} parent=11 // pred_check
        %p201 = pneg %p94
      $region18: #{decoder_forward.1} parent=11 // pred_check_branch
        %203 = sbr.rel (%p201) target = $region20
      $region19: #{decoder_forward.1} parent=11 // pred_region
        _
      $region20: #{decoder_forward.1} parent=11 // pred_fallthru
        _
      // Predicated region
      $region21: #{decoder_forward.1} parent=11 // pred_check
        %p204 = pneg %p115
      $region22: #{decoder_forward.1} parent=11 // pred_check_branch
        %206 = sbr.rel (%p204) target = $region24
      $region23: #{decoder_forward.1} parent=11 // pred_region
        _
      $region24: #{decoder_forward.1} parent=11 // pred_fallthru
        _
      // Predicated region
      $region25: #{decoder_forward.1} parent=11 // pred_check
        %p207 = pneg %p136
      $region26: #{decoder_forward.1} parent=11 // pred_check_branch
        %209 = sbr.rel (%p207) target = $region28
      $region27: #{decoder_forward.1} parent=11 // pred_region
        _
      $region28: #{decoder_forward.1} parent=11 // pred_fallthru
        _
      // Predicated region
      $region29: #{decoder_forward.1} parent=11 // pred_check
        %p210 = pneg %p157
      $region30: #{decoder_forward.1} parent=11 // pred_check_branch
        %212 = sbr.rel (%p210) target = $region32
      $region31: #{decoder_forward.1} parent=11 // pred_region
        _
      $region32: #{decoder_forward.1} parent=11 // pred_fallthru
        _
    $region12: #{decoder_forward.1} parent=5 // pred_fallthru
      _
    %p213 = scmp.lt.s32.totalorder %s12, 2
    // Predicated region
    $region33: #{decoder_forward.1} parent=5 // pred_check
      %p214 = pneg %p213
    $region34: #{decoder_forward.1} parent=5 // pred_check_branch
      %216 = sbr.rel (%p214) target = $region36
    $region35: #{decoder_forward.1} parent=5 // pred_region
      // Predicated region
      $region37: #{decoder_forward.1} parent=35 // pred_check
        %p217 = pneg %p46
      $region38: #{decoder_forward.1} parent=35 // pred_check_branch
        %219 = sbr.rel (%p217) target = $region40
      $region39: #{decoder_forward.1} parent=35 // pred_region
        %s220 = smul.u32 2, %s20
        %p221 = scmp.lt.s32.totalorder %s19, 1
        %s222 = scalar_select %p221, %s19, 1
        %p223 = scmp.lt.s32.totalorder %s220, 1
        %s224 = scalar_select %p223, %s220, 1
        %s225 = smul.addr %s222, 128
        %s226 = sadd.s32 %s224, %s225
        %s227 = smul.addr %s226, 8
        %s228 = scalar_lea.vmem %s0, %s227
        %s229 = smul.u32 2, %s20
      $region40: #{decoder_forward.1} parent=35 // pred_fallthru
        _
    $region36: #{decoder_forward.1} parent=5 // pred_fallthru
      _
    %p230 = scmp.le.s32.totalorder 1, %s12
    %p231 = scmp.lt.s32.totalorder %s12, 3
    %p232 = pnand %p230, %p231
    %p233 = pneg %p232
    // Predicated region
    $region41: #{decoder_forward.1} parent=5 // pred_check
      _
    $region42: #{decoder_forward.1} parent=5 // pred_check_branch
      %235 = sbr.rel (%p232) target = $region44
    $region43: #{decoder_forward.1} parent=5 // pred_region
      %s236 = ssub.s32 %s12, 1
      %s237 = smul.u32 2, %s22
      %p238 = scmp.lt.s32.totalorder %s21, 1
      %s239 = scalar_select %p238, %s21, 1
      %p240 = scmp.lt.s32.totalorder %s237, 1
      %s241 = scalar_select %p240, %s237, 1
      %s242 = smul.addr %s239, 128
      %s243 = sadd.s32 %s241, %s242
      %s244 = smul.addr %s243, 8
      %s245 = scalar_lea.vmem %s0, %s244
      %p246 = pneg %p52
      %p247 = pneg %p49
      %p248 = pneg %p73
      %p249 = pneg %p70
      %p250 = pneg %p94
      %p251 = pneg %p91
      %p252 = pneg %p115
      %p253 = pneg %p112
      %p254 = pneg %p136
      %p255 = pneg %p133
      %p256 = pneg %p157
      %p257 = pneg %p154
      %p258 = pneg %p183
      %p259 = pneg %p180
      %p260 = scmp.lt.s32.totalorder %s21, 1
      %s261 = scalar_select %p260, %s21, 1
      %s262 = smul.addr %s261, 64
      %s263 = smul.addr %s262, 8
      %s264 = scalar_lea.vmem %s6, %s263
      %s265 = smul.u32 2, %s22
      %p266 = scmp.lt.s32.totalorder %s21, 1
      %s267 = scalar_select %p266, %s21, 1
      %p268 = scmp.lt.s32.totalorder %s265, 1
      %s269 = scalar_select %p268, %s265, 1
      %s270 = smul.addr %s267, 128
      %s271 = sadd.s32 %s269, %s270
      %s272 = smul.addr %s271, 8
      %s273 = scalar_lea.vmem %s0, %s272
      %s274 = smul.u32 2, %s22
      %p275 = scmp.lt.s32.totalorder %s21, 1
      %s276 = scalar_select %p275, %s21, 1
      %s277 = smul.addr %s276, 64
      %s278 = smul.addr %s277, 8
      %s279 = scalar_lea.vmem %s6, %s278
      %p281 = scmp.eq.s32.totalorder %s22, 0
      // Predicated region
      $region45: #{decoder_forward.1} parent=43 // pred_check
        %p282 = pneg %p281
      $region46: #{decoder_forward.1} parent=43 // pred_check_branch
        %284 = sbr.rel (%p282) target = $region48
      $region47: #{decoder_forward.1} parent=43 // pred_region
        %vm285 = vcmask 7168
        %286 = vst.msk [vmem:[#allocation2] sm:$0xff] %vm285, 0.0
        %287 = vst.msk [vmem:[#allocation2 + $0x8] sm:$0xff] %vm285, 0.0
        %288 = vst.msk [vmem:[#allocation2 + $0x10] sm:$0xff] %vm285, 0.0
        %289 = vst.msk [vmem:[#allocation2 + $0x18] sm:$0xff] %vm285, 0.0
        %290 = vst.msk [vmem:[#allocation2 + $0x20] sm:$0xff] %vm285, 0.0
        %291 = vst.msk [vmem:[#allocation2 + $0x28] sm:$0xff] %vm285, 0.0
        %292 = vst.msk [vmem:[#allocation2 + $0x30] sm:$0xff] %vm285, 0.0
        %293 = vst.msk [vmem:[#allocation2 + $0x38] sm:$0xff] %vm285, 0.0
        %294 = vst.msk [vmem:[#allocation2 + $0x40] sm:$0xff] %vm285, 0.0
        %295 = vst.msk [vmem:[#allocation2 + $0x48] sm:$0xff] %vm285, 0.0
        %296 = vst.msk [vmem:[#allocation2 + $0x50] sm:$0xff] %vm285, 0.0
        %297 = vst.msk [vmem:[#allocation2 + $0x58] sm:$0xff] %vm285, 0.0
        %298 = vst.msk [vmem:[#allocation2 + $0x60] sm:$0xff] %vm285, 0.0
        %299 = vst.msk [vmem:[#allocation2 + $0x68] sm:$0xff] %vm285, 0.0
        %300 = vst.msk [vmem:[#allocation2 + $0x70] sm:$0xff] %vm285, 0.0
        %301 = vst.msk [vmem:[#allocation2 + $0x78] sm:$0xff] %vm285, 0.0
        %302 = vst.msk [vmem:[#allocation2 + $0x80] sm:$0xff] %vm285, 0.0
        %303 = vst.msk [vmem:[#allocation2 + $0x88] sm:$0xff] %vm285, 0.0
        %304 = vst.msk [vmem:[#allocation2 + $0x90] sm:$0xff] %vm285, 0.0
        %305 = vst.msk [vmem:[#allocation2 + $0x98] sm:$0xff] %vm285, 0.0
        %306 = vst.msk [vmem:[#allocation2 + $0xa0] sm:$0xff] %vm285, 0.0
        %307 = vst.msk [vmem:[#allocation2 + $0xa8] sm:$0xff] %vm285, 0.0
        %308 = vst.msk [vmem:[#allocation2 + $0xb0] sm:$0xff] %vm285, 0.0
        %309 = vst.msk [vmem:[#allocation2 + $0xb8] sm:$0xff] %vm285, 0.0
        %310 = vst.msk [vmem:[#allocation2 + $0xc0] sm:$0xff] %vm285, 0.0
        %311 = vst.msk [vmem:[#allocation2 + $0xc8] sm:$0xff] %vm285, 0.0
        %312 = vst.msk [vmem:[#allocation2 + $0xd0] sm:$0xff] %vm285, 0.0
        %313 = vst.msk [vmem:[#allocation2 + $0xd8] sm:$0xff] %vm285, 0.0
        %314 = vst.msk [vmem:[#allocation2 + $0xe0] sm:$0xff] %vm285, 0.0
        %315 = vst.msk [vmem:[#allocation2 + $0xe8] sm:$0xff] %vm285, 0.0
        %316 = vst.msk [vmem:[#allocation2 + $0xf0] sm:$0xff] %vm285, 0.0
        %317 = vst.msk [vmem:[#allocation2 + $0xf8] sm:$0xff] %vm285, 0.0
      $region48: #{decoder_forward.1} parent=43 // pred_fallthru
        _
      %v318 = vld [vmem:[%s1] sm:$0xff]
      %v319 = vld [vmem:[%s1 + $0x8] sm:$0xff]
      %v320 = vld [vmem:[%s1 + $0x10] sm:$0xff]
      %v321 = vld [vmem:[%s1 + $0x18] sm:$0xff]
      %v322 = vld [vmem:[%s1 + $0x20] sm:$0xff]
      %v323 = vld [vmem:[%s1 + $0x28] sm:$0xff]
      %v324 = vld [vmem:[%s1 + $0x30] sm:$0xff]
      %v325 = vld [vmem:[%s1 + $0x38] sm:$0xff]
      %v326 = vld [vmem:[%s1 + $0x40] sm:$0xff]
      %v327 = vld [vmem:[%s1 + $0x48] sm:$0xff]
      %v328 = vld [vmem:[%s1 + $0x50] sm:$0xff]
      %v329 = vld [vmem:[%s1 + $0x58] sm:$0xff]
      %v330 = vld [vmem:[%s1 + $0x60] sm:$0xff]
      %v331 = vld [vmem:[%s1 + $0x68] sm:$0xff]
      %v332 = vld [vmem:[%s1 + $0x70] sm:$0xff]
      %v333 = vld [vmem:[%s1 + $0x78] sm:$0xff]
      %v334 = vld [vmem:[%s1 + $0x80] sm:$0xff]
      %v335 = vld [vmem:[%s1 + $0x88] sm:$0xff]
      %v336 = vld [vmem:[%s1 + $0x90] sm:$0xff]
      %v337 = vld [vmem:[%s1 + $0x98] sm:$0xff]
      %v338 = vld [vmem:[%s1 + $0xa0] sm:$0xff]
      %v339 = vld [vmem:[%s1 + $0xa8] sm:$0xff]
      %v340 = vld [vmem:[%s1 + $0xb0] sm:$0xff]
      %v341 = vld [vmem:[%s1 + $0xb8] sm:$0xff]
      %v342 = vld [vmem:[%s1 + $0xc0] sm:$0xff]
      %v343 = vld [vmem:[%s1 + $0xc8] sm:$0xff]
      %v344 = vld [vmem:[%s1 + $0xd0] sm:$0xff]
      %v345 = vld [vmem:[%s1 + $0xd8] sm:$0xff]
      %v346 = vld [vmem:[%s1 + $0xe0] sm:$0xff]
      %v347 = vld [vmem:[%s1 + $0xe8] sm:$0xff]
      %v348 = vld [vmem:[%s1 + $0xf0] sm:$0xff]
      %v349 = vld [vmem:[%s1 + $0xf8] sm:$0xff]
      %v350 = vld [vmem:[%s1 + $0x100] sm:$0xff]
      %v351 = vld [vmem:[%s1 + $0x108] sm:$0xff]
      %v352 = vld [vmem:[%s1 + $0x110] sm:$0xff]
      %v353 = vld [vmem:[%s1 + $0x118] sm:$0xff]
      %v354 = vld [vmem:[%s1 + $0x120] sm:$0xff]
      %v355 = vld [vmem:[%s1 + $0x128] sm:$0xff]
      %v356 = vld [vmem:[%s1 + $0x130] sm:$0xff]
      %v357 = vld [vmem:[%s1 + $0x138] sm:$0xff]
      %v358 = vld [vmem:[%s1 + $0x140] sm:$0xff]
      %v359 = vld [vmem:[%s1 + $0x148] sm:$0xff]
      %v360 = vld [vmem:[%s1 + $0x150] sm:$0xff]
      %v361 = vld [vmem:[%s1 + $0x158] sm:$0xff]
      %v362 = vld [vmem:[%s1 + $0x160] sm:$0xff]
      %v363 = vld [vmem:[%s1 + $0x168] sm:$0xff]
      %v364 = vld [vmem:[%s1 + $0x170] sm:$0xff]
      %v365 = vld [vmem:[%s1 + $0x178] sm:$0xff]
      %v366 = vld [vmem:[%s1 + $0x180] sm:$0xff]
      %v367 = vld [vmem:[%s1 + $0x188] sm:$0xff]
      %v368 = vld [vmem:[%s1 + $0x190] sm:$0xff]
      %v369 = vld [vmem:[%s1 + $0x198] sm:$0xff]
      %v370 = vld [vmem:[%s1 + $0x1a0] sm:$0xff]
      %v371 = vld [vmem:[%s1 + $0x1a8] sm:$0xff]
      %v372 = vld [vmem:[%s1 + $0x1b0] sm:$0xff]
      %v373 = vld [vmem:[%s1 + $0x1b8] sm:$0xff]
      %v374 = vld [vmem:[%s1 + $0x1c0] sm:$0xff]
      %v375 = vld [vmem:[%s1 + $0x1c8] sm:$0xff]
      %v376 = vld [vmem:[%s1 + $0x1d0] sm:$0xff]
      %v377 = vld [vmem:[%s1 + $0x1d8] sm:$0xff]
      %v378 = vld [vmem:[%s1 + $0x1e0] sm:$0xff]
      %v379 = vld [vmem:[%s1 + $0x1e8] sm:$0xff]
      %v380 = vld [vmem:[%s1 + $0x1f0] sm:$0xff]
      %v381 = vld [vmem:[%s1 + $0x1f8] sm:$0xff]
      %v382 = vld [vmem:[%s273] sm:$0xff]
      %v383 = vld [vmem:[%s273 + $0x8] sm:$0xff]
      %v384 = vld [vmem:[%s273 + $0x10] sm:$0xff]
      %v385 = vld [vmem:[%s273 + $0x18] sm:$0xff]
      %v386 = vld [vmem:[%s273 + $0x20] sm:$0xff]
      %v387 = vld [vmem:[%s273 + $0x28] sm:$0xff]
      %v388 = vld [vmem:[%s273 + $0x30] sm:$0xff]
      %v389 = vld [vmem:[%s273 + $0x38] sm:$0xff]
      %v390 = vld [vmem:[%s273 + $0x40] sm:$0xff]
      %v391 = vld [vmem:[%s273 + $0x48] sm:$0xff]
      %v392 = vld [vmem:[%s273 + $0x50] sm:$0xff]
      %v393 = vld [vmem:[%s273 + $0x58] sm:$0xff]
      %v394 = vld [vmem:[%s273 + $0x60] sm:$0xff]
      %v395 = vld [vmem:[%s273 + $0x68] sm:$0xff]
      %v396 = vld [vmem:[%s273 + $0x70] sm:$0xff]
      %v397 = vld [vmem:[%s273 + $0x78] sm:$0xff]
      %v398 = vld [vmem:[%s273 + $0x80] sm:$0xff]
      %v399 = vld [vmem:[%s273 + $0x88] sm:$0xff]
      %v400 = vld [vmem:[%s273 + $0x90] sm:$0xff]
      %v401 = vld [vmem:[%s273 + $0x98] sm:$0xff]
      %v402 = vld [vmem:[%s273 + $0xa0] sm:$0xff]
      %v403 = vld [vmem:[%s273 + $0xa8] sm:$0xff]
      %v404 = vld [vmem:[%s273 + $0xb0] sm:$0xff]
      %v405 = vld [vmem:[%s273 + $0xb8] sm:$0xff]
      %v406 = vld [vmem:[%s273 + $0xc0] sm:$0xff]
      %v407 = vld [vmem:[%s273 + $0xc8] sm:$0xff]
      %v408 = vld [vmem:[%s273 + $0xd0] sm:$0xff]
      %v409 = vld [vmem:[%s273 + $0xd8] sm:$0xff]
      %v410 = vld [vmem:[%s273 + $0xe0] sm:$0xff]
      %v411 = vld [vmem:[%s273 + $0xe8] sm:$0xff]
      %v412 = vld [vmem:[%s273 + $0xf0] sm:$0xff]
      %v413 = vld [vmem:[%s273 + $0xf8] sm:$0xff]
      %v414 = vld [vmem:[%s273 + $0x100] sm:$0xff]
      %v415 = vld [vmem:[%s273 + $0x108] sm:$0xff]
      %v416 = vld [vmem:[%s273 + $0x110] sm:$0xff]
      %v417 = vld [vmem:[%s273 + $0x118] sm:$0xff]
      %v418 = vld [vmem:[%s273 + $0x120] sm:$0xff]
      %v419 = vld [vmem:[%s273 + $0x128] sm:$0xff]
      %v420 = vld [vmem:[%s273 + $0x130] sm:$0xff]
      %v421 = vld [vmem:[%s273 + $0x138] sm:$0xff]
      %v422 = vld [vmem:[%s273 + $0x140] sm:$0xff]
      %v423 = vld [vmem:[%s273 + $0x148] sm:$0xff]
      %v424 = vld [vmem:[%s273 + $0x150] sm:$0xff]
      %v425 = vld [vmem:[%s273 + $0x158] sm:$0xff]
      %v426 = vld [vmem:[%s273 + $0x160] sm:$0xff]
      %v427 = vld [vmem:[%s273 + $0x168] sm:$0xff]
      %v428 = vld [vmem:[%s273 + $0x170] sm:$0xff]
      %v429 = vld [vmem:[%s273 + $0x178] sm:$0xff]
      %v430 = vld [vmem:[%s273 + $0x180] sm:$0xff]
      %v431 = vld [vmem:[%s273 + $0x188] sm:$0xff]
      %v432 = vld [vmem:[%s273 + $0x190] sm:$0xff]
      %v433 = vld [vmem:[%s273 + $0x198] sm:$0xff]
      %v434 = vld [vmem:[%s273 + $0x1a0] sm:$0xff]
      %v435 = vld [vmem:[%s273 + $0x1a8] sm:$0xff]
      %v436 = vld [vmem:[%s273 + $0x1b0] sm:$0xff]
      %v437 = vld [vmem:[%s273 + $0x1b8] sm:$0xff]
      %v438 = vld [vmem:[%s273 + $0x1c0] sm:$0xff]
      %v439 = vld [vmem:[%s273 + $0x1c8] sm:$0xff]
      %v440 = vld [vmem:[%s273 + $0x1d0] sm:$0xff]
      %v441 = vld [vmem:[%s273 + $0x1d8] sm:$0xff]
      %v442 = vld [vmem:[%s273 + $0x1e0] sm:$0xff]
      %v443 = vld [vmem:[%s273 + $0x1e8] sm:$0xff]
      %v444 = vld [vmem:[%s273 + $0x1f0] sm:$0xff]
      %v445 = vld [vmem:[%s273 + $0x1f8] sm:$0xff]
      %v446 = vld [vmem:[%s273 + $0x200] sm:$0xff]
      %v447 = vld [vmem:[%s273 + $0x208] sm:$0xff]
      %v448 = vld [vmem:[%s273 + $0x210] sm:$0xff]
      %v449 = vld [vmem:[%s273 + $0x218] sm:$0xff]
      %v450 = vld [vmem:[%s273 + $0x220] sm:$0xff]
      %v451 = vld [vmem:[%s273 + $0x228] sm:$0xff]
      %v452 = vld [vmem:[%s273 + $0x230] sm:$0xff]
      %v453 = vld [vmem:[%s273 + $0x238] sm:$0xff]
      %v454 = vld [vmem:[%s273 + $0x240] sm:$0xff]
      %v455 = vld [vmem:[%s273 + $0x248] sm:$0xff]
      %v456 = vld [vmem:[%s273 + $0x250] sm:$0xff]
      %v457 = vld [vmem:[%s273 + $0x258] sm:$0xff]
      %v458 = vld [vmem:[%s273 + $0x260] sm:$0xff]
      %v459 = vld [vmem:[%s273 + $0x268] sm:$0xff]
      %v460 = vld [vmem:[%s273 + $0x270] sm:$0xff]
      %v461 = vld [vmem:[%s273 + $0x278] sm:$0xff]
      %v462 = vld [vmem:[%s273 + $0x280] sm:$0xff]
      %v463 = vld [vmem:[%s273 + $0x288] sm:$0xff]
      %v464 = vld [vmem:[%s273 + $0x290] sm:$0xff]
      %v465 = vld [vmem:[%s273 + $0x298] sm:$0xff]
      %v466 = vld [vmem:[%s273 + $0x2a0] sm:$0xff]
      %v467 = vld [vmem:[%s273 + $0x2a8] sm:$0xff]
      %v468 = vld [vmem:[%s273 + $0x2b0] sm:$0xff]
      %v469 = vld [vmem:[%s273 + $0x2b8] sm:$0xff]
      %v470 = vld [vmem:[%s273 + $0x2c0] sm:$0xff]
      %v471 = vld [vmem:[%s273 + $0x2c8] sm:$0xff]
      %v472 = vld [vmem:[%s273 + $0x2d0] sm:$0xff]
      %v473 = vld [vmem:[%s273 + $0x2d8] sm:$0xff]
      %v474 = vld [vmem:[%s273 + $0x2e0] sm:$0xff]
      %v475 = vld [vmem:[%s273 + $0x2e8] sm:$0xff]
      %v476 = vld [vmem:[%s273 + $0x2f0] sm:$0xff]
      %v477 = vld [vmem:[%s273 + $0x2f8] sm:$0xff]
      %v478 = vld [vmem:[%s273 + $0x300] sm:$0xff]
      %v479 = vld [vmem:[%s273 + $0x308] sm:$0xff]
      %v480 = vld [vmem:[%s273 + $0x310] sm:$0xff]
      %v481 = vld [vmem:[%s273 + $0x318] sm:$0xff]
      %v482 = vld [vmem:[%s273 + $0x320] sm:$0xff]
      %v483 = vld [vmem:[%s273 + $0x328] sm:$0xff]
      %v484 = vld [vmem:[%s273 + $0x330] sm:$0xff]
      %v485 = vld [vmem:[%s273 + $0x338] sm:$0xff]
      %v486 = vld [vmem:[%s273 + $0x340] sm:$0xff]
      %v487 = vld [vmem:[%s273 + $0x348] sm:$0xff]
      %v488 = vld [vmem:[%s273 + $0x350] sm:$0xff]
      %v489 = vld [vmem:[%s273 + $0x358] sm:$0xff]
      %v490 = vld [vmem:[%s273 + $0x360] sm:$0xff]
      %v491 = vld [vmem:[%s273 + $0x368] sm:$0xff]
      %v492 = vld [vmem:[%s273 + $0x370] sm:$0xff]
      %v493 = vld [vmem:[%s273 + $0x378] sm:$0xff]
      %v494 = vld [vmem:[%s273 + $0x380] sm:$0xff]
      %v495 = vld [vmem:[%s273 + $0x388] sm:$0xff]
      %v496 = vld [vmem:[%s273 + $0x390] sm:$0xff]
      %v497 = vld [vmem:[%s273 + $0x398] sm:$0xff]
      %v498 = vld [vmem:[%s273 + $0x3a0] sm:$0xff]
      %v499 = vld [vmem:[%s273 + $0x3a8] sm:$0xff]
      %v500 = vld [vmem:[%s273 + $0x3b0] sm:$0xff]
      %v501 = vld [vmem:[%s273 + $0x3b8] sm:$0xff]
      %v502 = vld [vmem:[%s273 + $0x3c0] sm:$0xff]
      %v503 = vld [vmem:[%s273 + $0x3c8] sm:$0xff]
      %v504 = vld [vmem:[%s273 + $0x3d0] sm:$0xff]
      %v505 = vld [vmem:[%s273 + $0x3d8] sm:$0xff]
      %v506 = vld [vmem:[%s273 + $0x3e0] sm:$0xff]
      %v507 = vld [vmem:[%s273 + $0x3e8] sm:$0xff]
      %v508 = vld [vmem:[%s273 + $0x3f0] sm:$0xff]
      %v509 = vld [vmem:[%s273 + $0x3f8] sm:$0xff]
      %v510 = vpack.c.bf16 %v384, %v382
      %v511 = vpack.c.bf16 %v385, %v383
      %v512 = vpack.c.bf16 %v388, %v386
      %v513 = vpack.c.bf16 %v389, %v387
      %v514 = vpack.c.bf16 %v392, %v390
      %v515 = vpack.c.bf16 %v393, %v391
      %v516 = vpack.c.bf16 %v396, %v394
      %v517 = vpack.c.bf16 %v397, %v395
      %v518 = vpack.c.bf16 %v400, %v398
      %v519 = vpack.c.bf16 %v401, %v399
      %v520 = vpack.c.bf16 %v404, %v402
      %v521 = vpack.c.bf16 %v405, %v403
      %v522 = vpack.c.bf16 %v408, %v406
      %v523 = vpack.c.bf16 %v409, %v407
      %v524 = vpack.c.bf16 %v412, %v410
      %v525 = vpack.c.bf16 %v413, %v411
      %v526 = vpack.c.bf16 %v416, %v414
      %v527 = vpack.c.bf16 %v417, %v415
      %v528 = vpack.c.bf16 %v420, %v418
      %v529 = vpack.c.bf16 %v421, %v419
      %v530 = vpack.c.bf16 %v424, %v422
      %v531 = vpack.c.bf16 %v425, %v423
      %v532 = vpack.c.bf16 %v428, %v426
      %v533 = vpack.c.bf16 %v429, %v427
      %v534 = vpack.c.bf16 %v432, %v430
      %v535 = vpack.c.bf16 %v433, %v431
      %v536 = vpack.c.bf16 %v436, %v434
      %v537 = vpack.c.bf16 %v437, %v435
      %v538 = vpack.c.bf16 %v440, %v438
      %v539 = vpack.c.bf16 %v441, %v439
      %v540 = vpack.c.bf16 %v444, %v442
      %v541 = vpack.c.bf16 %v445, %v443
      %v542 = vpack.c.bf16 %v448, %v446
      %v543 = vpack.c.bf16 %v449, %v447
      %v544 = vpack.c.bf16 %v452, %v450
      %v545 = vpack.c.bf16 %v453, %v451
      %v546 = vpack.c.bf16 %v456, %v454
      %v547 = vpack.c.bf16 %v457, %v455
      %v548 = vpack.c.bf16 %v460, %v458
      %v549 = vpack.c.bf16 %v461, %v459
      %v550 = vpack.c.bf16 %v464, %v462
      %v551 = vpack.c.bf16 %v465, %v463
      %v552 = vpack.c.bf16 %v468, %v466
      %v553 = vpack.c.bf16 %v469, %v467
      %v554 = vpack.c.bf16 %v472, %v470
      %v555 = vpack.c.bf16 %v473, %v471
      %v556 = vpack.c.bf16 %v476, %v474
      %v557 = vpack.c.bf16 %v477, %v475
      %v558 = vpack.c.bf16 %v480, %v478
      %v559 = vpack.c.bf16 %v481, %v479
      %v560 = vpack.c.bf16 %v484, %v482
      %v561 = vpack.c.bf16 %v485, %v483
      %v562 = vpack.c.bf16 %v488, %v486
      %v563 = vpack.c.bf16 %v489, %v487
      %v564 = vpack.c.bf16 %v492, %v490
      %v565 = vpack.c.bf16 %v493, %v491
      %v566 = vpack.c.bf16 %v496, %v494
      %v567 = vpack.c.bf16 %v497, %v495
      %v568 = vpack.c.bf16 %v500, %v498
      %v569 = vpack.c.bf16 %v501, %v499
      %v570 = vpack.c.bf16 %v504, %v502
      %v571 = vpack.c.bf16 %v505, %v503
      %v572 = vpack.c.bf16 %v508, %v506
      %v573 = vpack.c.bf16 %v509, %v507
      %v574 = vld [vmem:[%s2] sm:$0xff]
      %v575 = vld [vmem:[%s2 + $0x8] sm:$0xff]
      %v576 = vld [vmem:[%s2 + $0x10] sm:$0xff]
      %v577 = vld [vmem:[%s2 + $0x18] sm:$0xff]
      %v578 = vld [vmem:[%s2 + $0x20] sm:$0xff]
      %v579 = vld [vmem:[%s2 + $0x28] sm:$0xff]
      %v580 = vld [vmem:[%s2 + $0x30] sm:$0xff]
      %v581 = vld [vmem:[%s2 + $0x38] sm:$0xff]
      %v582 = vld [vmem:[%s2 + $0x40] sm:$0xff]
      %v583 = vld [vmem:[%s2 + $0x48] sm:$0xff]
      %v584 = vld [vmem:[%s2 + $0x50] sm:$0xff]
      %v585 = vld [vmem:[%s2 + $0x58] sm:$0xff]
      %v586 = vld [vmem:[%s2 + $0x60] sm:$0xff]
      %v587 = vld [vmem:[%s2 + $0x68] sm:$0xff]
      %v588 = vld [vmem:[%s2 + $0x70] sm:$0xff]
      %v589 = vld [vmem:[%s2 + $0x78] sm:$0xff]
      %v590 = vld [vmem:[%s2 + $0x80] sm:$0xff]
      %v591 = vld [vmem:[%s2 + $0x88] sm:$0xff]
      %v592 = vld [vmem:[%s2 + $0x90] sm:$0xff]
      %v593 = vld [vmem:[%s2 + $0x98] sm:$0xff]
      %v594 = vld [vmem:[%s2 + $0xa0] sm:$0xff]
      %v595 = vld [vmem:[%s2 + $0xa8] sm:$0xff]
      %v596 = vld [vmem:[%s2 + $0xb0] sm:$0xff]
      %v597 = vld [vmem:[%s2 + $0xb8] sm:$0xff]
      %v598 = vld [vmem:[%s2 + $0xc0] sm:$0xff]
      %v599 = vld [vmem:[%s2 + $0xc8] sm:$0xff]
      %v600 = vld [vmem:[%s2 + $0xd0] sm:$0xff]
      %v601 = vld [vmem:[%s2 + $0xd8] sm:$0xff]
      %v602 = vld [vmem:[%s2 + $0xe0] sm:$0xff]
      %v603 = vld [vmem:[%s2 + $0xe8] sm:$0xff]
      %v604 = vld [vmem:[%s2 + $0xf0] sm:$0xff]
      %v605 = vld [vmem:[%s2 + $0xf8] sm:$0xff]
      %607 = vset.pattern.permute.xlu0 0
      %608 = vperm.xlu0 %607, %v574
      %v609 = vpop.permute.xlu0 %608
      %612 = vset.pattern.permute.xlu0 0
      %613 = vperm.xlu0 %612, %v575
      %v614 = vpop.permute.xlu0 %613
      %617 = vset.pattern.permute.xlu0 0
      %618 = vperm.xlu0 %617, %v576
      %v619 = vpop.permute.xlu0 %618
      %622 = vset.pattern.permute.xlu0 0
      %623 = vperm.xlu0 %622, %v577
      %v624 = vpop.permute.xlu0 %623
      %627 = vset.pattern.permute.xlu0 0
      %628 = vperm.xlu0 %627, %v578
      %v629 = vpop.permute.xlu0 %628
      %632 = vset.pattern.permute.xlu0 0
      %633 = vperm.xlu0 %632, %v579
      %v634 = vpop.permute.xlu0 %633
      %637 = vset.pattern.permute.xlu0 0
      %638 = vperm.xlu0 %637, %v580
      %v639 = vpop.permute.xlu0 %638
      %642 = vset.pattern.permute.xlu0 0
      %643 = vperm.xlu0 %642, %v581
      %v644 = vpop.permute.xlu0 %643
      %647 = vset.pattern.permute.xlu0 0
      %648 = vperm.xlu0 %647, %v582
      %v649 = vpop.permute.xlu0 %648
      %652 = vset.pattern.permute.xlu0 0
      %653 = vperm.xlu0 %652, %v583
      %v654 = vpop.permute.xlu0 %653
      %657 = vset.pattern.permute.xlu0 0
      %658 = vperm.xlu0 %657, %v584
      %v659 = vpop.permute.xlu0 %658
      %662 = vset.pattern.permute.xlu0 0
      %663 = vperm.xlu0 %662, %v585
      %v664 = vpop.permute.xlu0 %663
      %667 = vset.pattern.permute.xlu0 0
      %668 = vperm.xlu0 %667, %v586
      %v669 = vpop.permute.xlu0 %668
      %672 = vset.pattern.permute.xlu0 0
      %673 = vperm.xlu0 %672, %v587
      %v674 = vpop.permute.xlu0 %673
      %677 = vset.pattern.permute.xlu0 0
      %678 = vperm.xlu0 %677, %v588
      %v679 = vpop.permute.xlu0 %678
      %682 = vset.pattern.permute.xlu0 0
      %683 = vperm.xlu0 %682, %v589
      %v684 = vpop.permute.xlu0 %683
      %687 = vset.pattern.permute.xlu0 0
      %688 = vperm.xlu0 %687, %v590
      %v689 = vpop.permute.xlu0 %688
      %692 = vset.pattern.permute.xlu0 0
      %693 = vperm.xlu0 %692, %v591
      %v694 = vpop.permute.xlu0 %693
      %697 = vset.pattern.permute.xlu0 0
      %698 = vperm.xlu0 %697, %v592
      %v699 = vpop.permute.xlu0 %698
      %702 = vset.pattern.permute.xlu0 0
      %703 = vperm.xlu0 %702, %v593
      %v704 = vpop.permute.xlu0 %703
      %707 = vset.pattern.permute.xlu0 0
      %708 = vperm.xlu0 %707, %v594
      %v709 = vpop.permute.xlu0 %708
      %712 = vset.pattern.permute.xlu0 0
      %713 = vperm.xlu0 %712, %v595
      %v714 = vpop.permute.xlu0 %713
      %717 = vset.pattern.permute.xlu0 0
      %718 = vperm.xlu0 %717, %v596
      %v719 = vpop.permute.xlu0 %718
      %722 = vset.pattern.permute.xlu0 0
      %723 = vperm.xlu0 %722, %v597
      %v724 = vpop.permute.xlu0 %723
      %727 = vset.pattern.permute.xlu0 0
      %728 = vperm.xlu0 %727, %v598
      %v729 = vpop.permute.xlu0 %728
      %732 = vset.pattern.permute.xlu0 0
      %733 = vperm.xlu0 %732, %v599
      %v734 = vpop.permute.xlu0 %733
      %737 = vset.pattern.permute.xlu0 0
      %738 = vperm.xlu0 %737, %v600
      %v739 = vpop.permute.xlu0 %738
      %742 = vset.pattern.permute.xlu0 0
      %743 = vperm.xlu0 %742, %v601
      %v744 = vpop.permute.xlu0 %743
      %747 = vset.pattern.permute.xlu0 0
      %748 = vperm.xlu0 %747, %v602
      %v749 = vpop.permute.xlu0 %748
      %752 = vset.pattern.permute.xlu0 0
      %753 = vperm.xlu0 %752, %v603
      %v754 = vpop.permute.xlu0 %753
      %757 = vset.pattern.permute.xlu0 0
      %758 = vperm.xlu0 %757, %v604
      %v759 = vpop.permute.xlu0 %758
      %762 = vset.pattern.permute.xlu0 0
      %763 = vperm.xlu0 %762, %v605
      %v764 = vpop.permute.xlu0 %763
      %v830 = vunpack.c.l.b16 %v318
      %v831 = vunpack.c.h.b16 %v318
      %v832 = vunpack.c.l.b16 %v319
      %v833 = vunpack.c.h.b16 %v319
      %v834 = vunpack.c.l.b16 %v320
      %v835 = vunpack.c.h.b16 %v320
      %v836 = vunpack.c.l.b16 %v321
      %v837 = vunpack.c.h.b16 %v321
      %v838 = vunpack.c.l.b16 %v322
      %v839 = vunpack.c.h.b16 %v322
      %v840 = vunpack.c.l.b16 %v323
      %v841 = vunpack.c.h.b16 %v323
      %v842 = vunpack.c.l.b16 %v324
      %v843 = vunpack.c.h.b16 %v324
      %v844 = vunpack.c.l.b16 %v325
      %v845 = vunpack.c.h.b16 %v325
      %v846 = vunpack.c.l.b16 %v326
      %v847 = vunpack.c.h.b16 %v326
      %v848 = vunpack.c.l.b16 %v327
      %v849 = vunpack.c.h.b16 %v327
      %v850 = vunpack.c.l.b16 %v328
      %v851 = vunpack.c.h.b16 %v328
      %v852 = vunpack.c.l.b16 %v329
      %v853 = vunpack.c.h.b16 %v329
      %v854 = vunpack.c.l.b16 %v330
      %v855 = vunpack.c.h.b16 %v330
      %v856 = vunpack.c.l.b16 %v331
      %v857 = vunpack.c.h.b16 %v331
      %v858 = vunpack.c.l.b16 %v332
      %v859 = vunpack.c.h.b16 %v332
      %v860 = vunpack.c.l.b16 %v333
      %v861 = vunpack.c.h.b16 %v333
      %v862 = vunpack.c.l.b16 %v334
      %v863 = vunpack.c.h.b16 %v334
      %v864 = vunpack.c.l.b16 %v335
      %v865 = vunpack.c.h.b16 %v335
      %v866 = vunpack.c.l.b16 %v336
      %v867 = vunpack.c.h.b16 %v336
      %v868 = vunpack.c.l.b16 %v337
      %v869 = vunpack.c.h.b16 %v337
      %v870 = vunpack.c.l.b16 %v338
      %v871 = vunpack.c.h.b16 %v338
      %v872 = vunpack.c.l.b16 %v339
      %v873 = vunpack.c.h.b16 %v339
      %v874 = vunpack.c.l.b16 %v340
      %v875 = vunpack.c.h.b16 %v340
      %v876 = vunpack.c.l.b16 %v341
      %v877 = vunpack.c.h.b16 %v341
      %v878 = vunpack.c.l.b16 %v342
      %v879 = vunpack.c.h.b16 %v342
      %v880 = vunpack.c.l.b16 %v343
      %v881 = vunpack.c.h.b16 %v343
      %v882 = vunpack.c.l.b16 %v344
      %v883 = vunpack.c.h.b16 %v344
      %v884 = vunpack.c.l.b16 %v345
      %v885 = vunpack.c.h.b16 %v345
      %v886 = vunpack.c.l.b16 %v346
      %v887 = vunpack.c.h.b16 %v346
      %v888 = vunpack.c.l.b16 %v347
      %v889 = vunpack.c.h.b16 %v347
      %v890 = vunpack.c.l.b16 %v348
      %v891 = vunpack.c.h.b16 %v348
      %v892 = vunpack.c.l.b16 %v349
      %v893 = vunpack.c.h.b16 %v349
      %v894 = vunpack.c.l.b16 %v350
      %v895 = vunpack.c.h.b16 %v350
      %v896 = vunpack.c.l.b16 %v351
      %v897 = vunpack.c.h.b16 %v351
      %v898 = vunpack.c.l.b16 %v352
      %v899 = vunpack.c.h.b16 %v352
      %v900 = vunpack.c.l.b16 %v353
      %v901 = vunpack.c.h.b16 %v353
      %v902 = vunpack.c.l.b16 %v354
      %v903 = vunpack.c.h.b16 %v354
      %v904 = vunpack.c.l.b16 %v355
      %v905 = vunpack.c.h.b16 %v355
      %v906 = vunpack.c.l.b16 %v356
      %v907 = vunpack.c.h.b16 %v356
      %v908 = vunpack.c.l.b16 %v357
      %v909 = vunpack.c.h.b16 %v357
      %v910 = vunpack.c.l.b16 %v358
      %v911 = vunpack.c.h.b16 %v358
      %v912 = vunpack.c.l.b16 %v359
      %v913 = vunpack.c.h.b16 %v359
      %v914 = vunpack.c.l.b16 %v360
      %v915 = vunpack.c.h.b16 %v360
      %v916 = vunpack.c.l.b16 %v361
      %v917 = vunpack.c.h.b16 %v361
      %v918 = vunpack.c.l.b16 %v362
      %v919 = vunpack.c.h.b16 %v362
      %v920 = vunpack.c.l.b16 %v363
      %v921 = vunpack.c.h.b16 %v363
      %v922 = vunpack.c.l.b16 %v364
      %v923 = vunpack.c.h.b16 %v364
      %v924 = vunpack.c.l.b16 %v365
      %v925 = vunpack.c.h.b16 %v365
      %v926 = vunpack.c.l.b16 %v366
      %v927 = vunpack.c.h.b16 %v366
      %v928 = vunpack.c.l.b16 %v367
      %v929 = vunpack.c.h.b16 %v367
      %v930 = vunpack.c.l.b16 %v368
      %v931 = vunpack.c.h.b16 %v368
      %v932 = vunpack.c.l.b16 %v369
      %v933 = vunpack.c.h.b16 %v369
      %v934 = vunpack.c.l.b16 %v370
      %v935 = vunpack.c.h.b16 %v370
      %v936 = vunpack.c.l.b16 %v371
      %v937 = vunpack.c.h.b16 %v371
      %v938 = vunpack.c.l.b16 %v372
      %v939 = vunpack.c.h.b16 %v372
      %v940 = vunpack.c.l.b16 %v373
      %v941 = vunpack.c.h.b16 %v373
      %v942 = vunpack.c.l.b16 %v374
      %v943 = vunpack.c.h.b16 %v374
      %v944 = vunpack.c.l.b16 %v375
      %v945 = vunpack.c.h.b16 %v375
      %v946 = vunpack.c.l.b16 %v376
      %v947 = vunpack.c.h.b16 %v376
      %v948 = vunpack.c.l.b16 %v377
      %v949 = vunpack.c.h.b16 %v377
      %v950 = vunpack.c.l.b16 %v378
      %v951 = vunpack.c.h.b16 %v378
      %v952 = vunpack.c.l.b16 %v379
      %v953 = vunpack.c.h.b16 %v379
      %v954 = vunpack.c.l.b16 %v380
      %v955 = vunpack.c.h.b16 %v380
      %v956 = vunpack.c.l.b16 %v381
      %v957 = vunpack.c.h.b16 %v381
      %v958 = vpack.c.b16 %v834, %v830
      %v959 = vpack.c.b16 %v835, %v831
      %v960 = vpack.c.b16 %v836, %v832
      %v961 = vpack.c.b16 %v837, %v833
      %v962 = vpack.c.b16 %v842, %v838
      %v963 = vpack.c.b16 %v843, %v839
      %v964 = vpack.c.b16 %v844, %v840
      %v965 = vpack.c.b16 %v845, %v841
      %v966 = vpack.c.b16 %v850, %v846
      %v967 = vpack.c.b16 %v851, %v847
      %v968 = vpack.c.b16 %v852, %v848
      %v969 = vpack.c.b16 %v853, %v849
      %v970 = vpack.c.b16 %v858, %v854
      %v971 = vpack.c.b16 %v859, %v855
      %v972 = vpack.c.b16 %v860, %v856
      %v973 = vpack.c.b16 %v861, %v857
      %v974 = vpack.c.b16 %v866, %v862
      %v975 = vpack.c.b16 %v867, %v863
      %v976 = vpack.c.b16 %v868, %v864
      %v977 = vpack.c.b16 %v869, %v865
      %v978 = vpack.c.b16 %v874, %v870
      %v979 = vpack.c.b16 %v875, %v871
      %v980 = vpack.c.b16 %v876, %v872
      %v981 = vpack.c.b16 %v877, %v873
      %v982 = vpack.c.b16 %v882, %v878
      %v983 = vpack.c.b16 %v883, %v879
      %v984 = vpack.c.b16 %v884, %v880
      %v985 = vpack.c.b16 %v885, %v881
      %v986 = vpack.c.b16 %v890, %v886
      %v987 = vpack.c.b16 %v891, %v887
      %v988 = vpack.c.b16 %v892, %v888
      %v989 = vpack.c.b16 %v893, %v889
      %v990 = vpack.c.b16 %v898, %v894
      %v991 = vpack.c.b16 %v899, %v895
      %v992 = vpack.c.b16 %v900, %v896
      %v993 = vpack.c.b16 %v901, %v897
      %v994 = vpack.c.b16 %v906, %v902
      %v995 = vpack.c.b16 %v907, %v903
      %v996 = vpack.c.b16 %v908, %v904
      %v997 = vpack.c.b16 %v909, %v905
      %v998 = vpack.c.b16 %v914, %v910
      %v999 = vpack.c.b16 %v915, %v911
      %v1000 = vpack.c.b16 %v916, %v912
      %v1001 = vpack.c.b16 %v917, %v913
      %v1002 = vpack.c.b16 %v922, %v918
      %v1003 = vpack.c.b16 %v923, %v919
      %v1004 = vpack.c.b16 %v924, %v920
      %v1005 = vpack.c.b16 %v925, %v921
      %v1006 = vpack.c.b16 %v930, %v926
      %v1007 = vpack.c.b16 %v931, %v927
      %v1008 = vpack.c.b16 %v932, %v928
      %v1009 = vpack.c.b16 %v933, %v929
      %v1010 = vpack.c.b16 %v938, %v934
      %v1011 = vpack.c.b16 %v939, %v935
      %v1012 = vpack.c.b16 %v940, %v936
      %v1013 = vpack.c.b16 %v941, %v937
      %v1014 = vpack.c.b16 %v946, %v942
      %v1015 = vpack.c.b16 %v947, %v943
      %v1016 = vpack.c.b16 %v948, %v944
      %v1017 = vpack.c.b16 %v949, %v945
      %v1018 = vpack.c.b16 %v954, %v950
      %v1019 = vpack.c.b16 %v955, %v951
      %v1020 = vpack.c.b16 %v956, %v952
      %v1021 = vpack.c.b16 %v957, %v953
      %1086 = vmatprep.subr.bf16.mxu0 %v511
      %1087 = vmatpush1.bf16.msra.mxu0 %v510
      %1088 = vmatprep.subr.bf16.mxu0 %v513
      %1089 = vmatpush1.bf16.msra.mxu0 %v512
      %1090 = vmatprep.subr.bf16.mxu0 %v515
      %1091 = vmatpush1.bf16.msra.mxu0 %v514
      %1092 = vmatprep.subr.bf16.mxu0 %v517
      %1093 = vmatpush1.bf16.msra.mxu0 %v516
      %1094 = vmatprep.subr.bf16.mxu0 %v519
      %1095 = vmatpush1.bf16.msra.mxu0 %v518
      %1096 = vmatprep.subr.bf16.mxu0 %v521
      %1097 = vmatpush1.bf16.msra.mxu0 %v520
      %1098 = vmatprep.subr.bf16.mxu0 %v523
      %1099 = vmatpush1.bf16.msra.mxu0 %v522
      %1100 = vmatprep.subr.bf16.mxu0 %v525
      %1101 = vmatpush1.bf16.msra.mxu0 %v524
      %1102 = vmatprep.subr.bf16.mxu0 %v527
      %1103 = vmatpush1.bf16.msra.mxu0 %v526
      %1104 = vmatprep.subr.bf16.mxu0 %v529
      %1105 = vmatpush1.bf16.msra.mxu0 %v528
      %1106 = vmatprep.subr.bf16.mxu0 %v531
      %1107 = vmatpush1.bf16.msra.mxu0 %v530
      %1108 = vmatprep.subr.bf16.mxu0 %v533
      %1109 = vmatpush1.bf16.msra.mxu0 %v532
      %1110 = vmatprep.subr.bf16.mxu0 %v535
      %1111 = vmatpush1.bf16.msra.mxu0 %v534
      %1112 = vmatprep.subr.bf16.mxu0 %v537
      %1113 = vmatpush1.bf16.msra.mxu0 %v536
      %1114 = vmatprep.subr.bf16.mxu0 %v539
      %1115 = vmatpush1.bf16.msra.mxu0 %v538
      %1116 = vmatprep.subr.bf16.mxu0 %v541
      %1117 = vmatpush1.bf16.msra.mxu0 %v540
      %1118 = vmatprep.mubr.bf16.mxu0 %v959
      %1119 = vmatmul.mubr.bf16.gmra.mrb[0].mxu0 %v958
      %v1120 = vpop.f32.mrb[0].mxu0
      %v1121 = vadd.f32 %v609, %v1120
      %v1122 = vpop.f32.mrb[0].mxu0
      %v1123 = vadd.f32 %v609, %v1122
      %v1124 = vpop.f32.mrb[0].mxu0
      %v1125 = vadd.f32 %v614, %v1124
      %v1126 = vpop.f32.mrb[0].mxu0
      %v1127 = vadd.f32 %v614, %v1126
      %1128 = vmatprep.mubr.bf16.mxu0 %v963
      %1129 = vmatmul.mubr.bf16.gmra.mrb[0].mxu0 %v962
      %v1130 = vpop.f32.mrb[0].mxu0
      %v1131 = vadd.f32 %v619, %v1130
      %v1132 = vpop.f32.mrb[0].mxu0
      %v1133 = vadd.f32 %v619, %v1132
      %v1134 = vpop.f32.mrb[0].mxu0
      %v1135 = vadd.f32 %v624, %v1134
      %v1136 = vpop.f32.mrb[0].mxu0
      %v1137 = vadd.f32 %v624, %v1136
      %1138 = vmatprep.mubr.bf16.mxu0 %v967
      %1139 = vmatmul.mubr.bf16.gmra.mrb[0].mxu0 %v966
      %v1140 = vpop.f32.mrb[0].mxu0
      %v1141 = vadd.f32 %v629, %v1140
      %v1142 = vpop.f32.mrb[0].mxu0
      %v1143 = vadd.f32 %v629, %v1142
      %v1144 = vpop.f32.mrb[0].mxu0
      %v1145 = vadd.f32 %v634, %v1144
      %v1146 = vpop.f32.mrb[0].mxu0
      %v1147 = vadd.f32 %v634, %v1146
      %1148 = vmatprep.mubr.bf16.mxu0 %v971
      %1149 = vmatmul.mubr.bf16.gmra.mrb[0].mxu0 %v970
      %v1150 = vpop.f32.mrb[0].mxu0
      %v1151 = vadd.f32 %v639, %v1150
      %v1152 = vpop.f32.mrb[0].mxu0
      %v1153 = vadd.f32 %v639, %v1152
      %v1154 = vpop.f32.mrb[0].mxu0
      %v1155 = vadd.f32 %v644, %v1154
      %v1156 = vpop.f32.mrb[0].mxu0
      %v1157 = vadd.f32 %v644, %v1156
      %1158 = vmatprep.mubr.bf16.mxu0 %v975
      %1159 = vmatmul.mubr.bf16.gmra.mrb[0].mxu0 %v974
      %v1160 = vpop.f32.mrb[0].mxu0
      %v1161 = vadd.f32 %v649, %v1160
      %v1162 = vpop.f32.mrb[0].mxu0
      %v1163 = vadd.f32 %v649, %v1162
      %v1164 = vpop.f32.mrb[0].mxu0
      %v1165 = vadd.f32 %v654, %v1164
      %v1166 = vpop.f32.mrb[0].mxu0
      %v1167 = vadd.f32 %v654, %v1166
      %1168 = vmatprep.mubr.bf16.mxu0 %v979
      %1169 = vmatmul.mubr.bf16.gmra.mrb[0].mxu0 %v978
      %v1170 = vpop.f32.mrb[0].mxu0
      %v1171 = vadd.f32 %v659, %v1170
      %v1172 = vpop.f32.mrb[0].mxu0
      %v1173 = vadd.f32 %v659, %v1172
      %v1174 = vpop.f32.mrb[0].mxu0
      %v1175 = vadd.f32 %v664, %v1174
      %v1176 = vpop.f32.mrb[0].mxu0
      %v1177 = vadd.f32 %v664, %v1176
      %1178 = vmatprep.mubr.bf16.mxu0 %v983
      %1179 = vmatmul.mubr.bf16.gmra.mrb[0].mxu0 %v982
      %v1180 = vpop.f32.mrb[0].mxu0
      %v1181 = vadd.f32 %v669, %v1180
      %v1182 = vpop.f32.mrb[0].mxu0
      %v1183 = vadd.f32 %v669, %v1182
      %v1184 = vpop.f32.mrb[0].mxu0
      %v1185 = vadd.f32 %v674, %v1184
      %v1186 = vpop.f32.mrb[0].mxu0
      %v1187 = vadd.f32 %v674, %v1186
      %1188 = vmatprep.mubr.bf16.mxu0 %v987
      %1189 = vmatmul.mubr.bf16.gmra.mrb[0].mxu0 %v986
      %v1190 = vpop.f32.mrb[0].mxu0
      %v1191 = vadd.f32 %v679, %v1190
      %v1192 = vpop.f32.mrb[0].mxu0
      %v1193 = vadd.f32 %v679, %v1192
      %v1194 = vpop.f32.mrb[0].mxu0
      %v1195 = vadd.f32 %v684, %v1194
      %v1196 = vpop.f32.mrb[0].mxu0
      %v1197 = vadd.f32 %v684, %v1196
      %1198 = vmatprep.mubr.bf16.mxu0 %v991
      %1199 = vmatmul.mubr.bf16.gmra.mrb[0].mxu0 %v990
      %v1200 = vpop.f32.mrb[0].mxu0
      %v1201 = vadd.f32 %v689, %v1200
      %v1202 = vpop.f32.mrb[0].mxu0
      %v1203 = vadd.f32 %v689, %v1202
      %v1204 = vpop.f32.mrb[0].mxu0
      %v1205 = vadd.f32 %v694, %v1204
      %v1206 = vpop.f32.mrb[0].mxu0
      %v1207 = vadd.f32 %v694, %v1206
      %1208 = vmatprep.mubr.bf16.mxu0 %v995
      %1209 = vmatmul.mubr.bf16.gmra.mrb[0].mxu0 %v994
      %v1210 = vpop.f32.mrb[0].mxu0
      %v1211 = vadd.f32 %v699, %v1210
      %v1212 = vpop.f32.mrb[0].mxu0
      %v1213 = vadd.f32 %v699, %v1212
      %v1214 = vpop.f32.mrb[0].mxu0
      %v1215 = vadd.f32 %v704, %v1214
      %v1216 = vpop.f32.mrb[0].mxu0
      %v1217 = vadd.f32 %v704, %v1216
      %1218 = vmatprep.mubr.bf16.mxu0 %v999
      %1219 = vmatmul.mubr.bf16.gmra.mrb[0].mxu0 %v998
      %v1220 = vpop.f32.mrb[0].mxu0
      %v1221 = vadd.f32 %v709, %v1220
      %v1222 = vpop.f32.mrb[0].mxu0
      %v1223 = vadd.f32 %v709, %v1222
      %v1224 = vpop.f32.mrb[0].mxu0
      %v1225 = vadd.f32 %v714, %v1224
      %v1226 = vpop.f32.mrb[0].mxu0
      %v1227 = vadd.f32 %v714, %v1226
      %1228 = vmatprep.mubr.bf16.mxu0 %v1003
      %1229 = vmatmul.mubr.bf16.gmra.mrb[0].mxu0 %v1002
      %v1230 = vpop.f32.mrb[0].mxu0
      %v1231 = vadd.f32 %v719, %v1230
      %v1232 = vpop.f32.mrb[0].mxu0
      %v1233 = vadd.f32 %v719, %v1232
      %v1234 = vpop.f32.mrb[0].mxu0
      %v1235 = vadd.f32 %v724, %v1234
      %v1236 = vpop.f32.mrb[0].mxu0
      %v1237 = vadd.f32 %v724, %v1236
      %1238 = vmatprep.mubr.bf16.mxu0 %v1007
      %1239 = vmatmul.mubr.bf16.gmra.mrb[0].mxu0 %v1006
      %v1240 = vpop.f32.mrb[0].mxu0
      %v1241 = vadd.f32 %v729, %v1240
      %v1242 = vpop.f32.mrb[0].mxu0
      %v1243 = vadd.f32 %v729, %v1242
      %v1244 = vpop.f32.mrb[0].mxu0
      %v1245 = vadd.f32 %v734, %v1244
      %v1246 = vpop.f32.mrb[0].mxu0
      %v1247 = vadd.f32 %v734, %v1246
      %1248 = vmatprep.mubr.bf16.mxu0 %v1011
      %1249 = vmatmul.mubr.bf16.gmra.mrb[0].mxu0 %v1010
      %v1250 = vpop.f32.mrb[0].mxu0
      %v1251 = vadd.f32 %v739, %v1250
      %v1252 = vpop.f32.mrb[0].mxu0
      %v1253 = vadd.f32 %v739, %v1252
      %v1254 = vpop.f32.mrb[0].mxu0
      %v1255 = vadd.f32 %v744, %v1254
      %v1256 = vpop.f32.mrb[0].mxu0
      %v1257 = vadd.f32 %v744, %v1256
      %1258 = vmatprep.mubr.bf16.mxu0 %v1015
      %1259 = vmatmul.mubr.bf16.gmra.mrb[0].mxu0 %v1014
      %v1260 = vpop.f32.mrb[0].mxu0
      %v1261 = vadd.f32 %v749, %v1260
      %v1262 = vpop.f32.mrb[0].mxu0
      %v1263 = vadd.f32 %v749, %v1262
      %v1264 = vpop.f32.mrb[0].mxu0
      %v1265 = vadd.f32 %v754, %v1264
      %v1266 = vpop.f32.mrb[0].mxu0
      %v1267 = vadd.f32 %v754, %v1266
      %1268 = vmatprep.mubr.bf16.mxu0 %v1019
      %1269 = vmatmul.mubr.bf16.gmra.mrb[0].mxu0 %v1018
      %v1270 = vpop.f32.mrb[0].mxu0
      %v1271 = vadd.f32 %v759, %v1270
      %v1272 = vpop.f32.mrb[0].mxu0
      %v1273 = vadd.f32 %v759, %v1272
      %v1274 = vpop.f32.mrb[0].mxu0
      %v1275 = vadd.f32 %v764, %v1274
      %v1276 = vpop.f32.mrb[0].mxu0
      %v1277 = vadd.f32 %v764, %v1276
      %1278 = vdwg.mxu0
      %1279 = vmatprep.subr.bf16.mxu0 %v543
      %1280 = vmatpush1.bf16.msra.mxu0 %v542
      %1281 = vmatprep.subr.bf16.mxu0 %v545
      %1282 = vmatpush1.bf16.msra.mxu0 %v544
      %1283 = vmatprep.subr.bf16.mxu0 %v547
      %1284 = vmatpush1.bf16.msra.mxu0 %v546
      %1285 = vmatprep.subr.bf16.mxu0 %v549
      %1286 = vmatpush1.bf16.msra.mxu0 %v548
      %1287 = vmatprep.subr.bf16.mxu0 %v551
      %1288 = vmatpush1.bf16.msra.mxu0 %v550
      %1289 = vmatprep.subr.bf16.mxu0 %v553
      %1290 = vmatpush1.bf16.msra.mxu0 %v552
      %1291 = vmatprep.subr.bf16.mxu0 %v555
      %1292 = vmatpush1.bf16.msra.mxu0 %v554
      %1293 = vmatprep.subr.bf16.mxu0 %v557
      %1294 = vmatpush1.bf16.msra.mxu0 %v556
      %1295 = vmatprep.subr.bf16.mxu0 %v559
      %1296 = vmatpush1.bf16.msra.mxu0 %v558
      %1297 = vmatprep.subr.bf16.mxu0 %v561
      %1298 = vmatpush1.bf16.msra.mxu0 %v560
      %1299 = vmatprep.subr.bf16.mxu0 %v563
      %1300 = vmatpush1.bf16.msra.mxu0 %v562
      %1301 = vmatprep.subr.bf16.mxu0 %v565
      %1302 = vmatpush1.bf16.msra.mxu0 %v564
      %1303 = vmatprep.subr.bf16.mxu0 %v567
      %1304 = vmatpush1.bf16.msra.mxu0 %v566
      %1305 = vmatprep.subr.bf16.mxu0 %v569
      %1306 = vmatpush1.bf16.msra.mxu0 %v568
      %1307 = vmatprep.subr.bf16.mxu0 %v571
      %1308 = vmatpush1.bf16.msra.mxu0 %v570
      %1309 = vmatprep.subr.bf16.mxu0 %v573
      %1310 = vmatpush1.bf16.msra.mxu0 %v572
      %1311 = vmatprep.mubr.bf16.mxu0 %v961
      %1312 = vmatmul.mubr.bf16.gmra.mrb[0].mxu0 %v960
      %v1313 = vpop.f32.mrb[0].mxu0
      %v1314 = vadd.f32 %v1121, %v1313
      %v1315 = vpop.f32.mrb[0].mxu0
      %v1316 = vadd.f32 %v1123, %v1315
      %v1317 = vpop.f32.mrb[0].mxu0
      %v1318 = vadd.f32 %v1125, %v1317
      %v1319 = vpop.f32.mrb[0].mxu0
      %v1320 = vadd.f32 %v1127, %v1319
      %1321 = vmatprep.mubr.bf16.mxu0 %v965
      %1322 = vmatmul.mubr.bf16.gmra.mrb[0].mxu0 %v964
      %v1323 = vpop.f32.mrb[0].mxu0
      %v1324 = vadd.f32 %v1131, %v1323
      %v1325 = vpop.f32.mrb[0].mxu0
      %v1326 = vadd.f32 %v1133, %v1325
      %v1327 = vpop.f32.mrb[0].mxu0
      %v1328 = vadd.f32 %v1135, %v1327
      %v1329 = vpop.f32.mrb[0].mxu0
      %v1330 = vadd.f32 %v1137, %v1329
      %1331 = vmatprep.mubr.bf16.mxu0 %v969
      %1332 = vmatmul.mubr.bf16.gmra.mrb[0].mxu0 %v968
      %v1333 = vpop.f32.mrb[0].mxu0
      %v1334 = vadd.f32 %v1141, %v1333
      %v1335 = vpop.f32.mrb[0].mxu0
      %v1336 = vadd.f32 %v1143, %v1335
      %v1337 = vpop.f32.mrb[0].mxu0
      %v1338 = vadd.f32 %v1145, %v1337
      %v1339 = vpop.f32.mrb[0].mxu0
      %v1340 = vadd.f32 %v1147, %v1339
      %1341 = vmatprep.mubr.bf16.mxu0 %v973
      %1342 = vmatmul.mubr.bf16.gmra.mrb[0].mxu0 %v972
      %v1343 = vpop.f32.mrb[0].mxu0
      %v1344 = vadd.f32 %v1151, %v1343
      %v1345 = vpop.f32.mrb[0].mxu0
      %v1346 = vadd.f32 %v1153, %v1345
      %v1347 = vpop.f32.mrb[0].mxu0
      %v1348 = vadd.f32 %v1155, %v1347
      %v1349 = vpop.f32.mrb[0].mxu0
      %v1350 = vadd.f32 %v1157, %v1349
      %1351 = vmatprep.mubr.bf16.mxu0 %v977
      %1352 = vmatmul.mubr.bf16.gmra.mrb[0].mxu0 %v976
      %v1353 = vpop.f32.mrb[0].mxu0
      %v1354 = vadd.f32 %v1161, %v1353
      %v1355 = vpop.f32.mrb[0].mxu0
      %v1356 = vadd.f32 %v1163, %v1355
      %v1357 = vpop.f32.mrb[0].mxu0
      %v1358 = vadd.f32 %v1165, %v1357
      %v1359 = vpop.f32.mrb[0].mxu0
      %v1360 = vadd.f32 %v1167, %v1359
      %1361 = vmatprep.mubr.bf16.mxu0 %v981
      %1362 = vmatmul.mubr.bf16.gmra.mrb[0].mxu0 %v980
      %v1363 = vpop.f32.mrb[0].mxu0
      %v1364 = vadd.f32 %v1171, %v1363
      %v1365 = vpop.f32.mrb[0].mxu0
      %v1366 = vadd.f32 %v1173, %v1365
      %v1367 = vpop.f32.mrb[0].mxu0
      %v1368 = vadd.f32 %v1175, %v1367
      %v1369 = vpop.f32.mrb[0].mxu0
      %v1370 = vadd.f32 %v1177, %v1369
      %1371 = vmatprep.mubr.bf16.mxu0 %v985
      %1372 = vmatmul.mubr.bf16.gmra.mrb[0].mxu0 %v984
      %v1373 = vpop.f32.mrb[0].mxu0
      %v1374 = vadd.f32 %v1181, %v1373
      %v1375 = vpop.f32.mrb[0].mxu0
      %v1376 = vadd.f32 %v1183, %v1375
      %v1377 = vpop.f32.mrb[0].mxu0
      %v1378 = vadd.f32 %v1185, %v1377
      %v1379 = vpop.f32.mrb[0].mxu0
      %v1380 = vadd.f32 %v1187, %v1379
      %1381 = vmatprep.mubr.bf16.mxu0 %v989
      %1382 = vmatmul.mubr.bf16.gmra.mrb[0].mxu0 %v988
      %v1383 = vpop.f32.mrb[0].mxu0
      %v1384 = vadd.f32 %v1191, %v1383
      %v1385 = vpop.f32.mrb[0].mxu0
      %v1386 = vadd.f32 %v1193, %v1385
      %v1387 = vpop.f32.mrb[0].mxu0
      %v1388 = vadd.f32 %v1195, %v1387
      %v1389 = vpop.f32.mrb[0].mxu0
      %v1390 = vadd.f32 %v1197, %v1389
      %1391 = vmatprep.mubr.bf16.mxu0 %v993
      %1392 = vmatmul.mubr.bf16.gmra.mrb[0].mxu0 %v992
      %v1393 = vpop.f32.mrb[0].mxu0
      %v1394 = vadd.f32 %v1201, %v1393
      %v1395 = vpop.f32.mrb[0].mxu0
      %v1396 = vadd.f32 %v1203, %v1395
      %v1397 = vpop.f32.mrb[0].mxu0
      %v1398 = vadd.f32 %v1205, %v1397
      %v1399 = vpop.f32.mrb[0].mxu0
      %v1400 = vadd.f32 %v1207, %v1399
      %1401 = vmatprep.mubr.bf16.mxu0 %v997
      %1402 = vmatmul.mubr.bf16.gmra.mrb[0].mxu0 %v996
      %v1403 = vpop.f32.mrb[0].mxu0
      %v1404 = vadd.f32 %v1211, %v1403
      %v1405 = vpop.f32.mrb[0].mxu0
      %v1406 = vadd.f32 %v1213, %v1405
      %v1407 = vpop.f32.mrb[0].mxu0
      %v1408 = vadd.f32 %v1215, %v1407
      %v1409 = vpop.f32.mrb[0].mxu0
      %v1410 = vadd.f32 %v1217, %v1409
      %1411 = vmatprep.mubr.bf16.mxu0 %v1001
      %1412 = vmatmul.mubr.bf16.gmra.mrb[0].mxu0 %v1000
      %v1413 = vpop.f32.mrb[0].mxu0
      %v1414 = vadd.f32 %v1221, %v1413
      %v1415 = vpop.f32.mrb[0].mxu0
      %v1416 = vadd.f32 %v1223, %v1415
      %v1417 = vpop.f32.mrb[0].mxu0
      %v1418 = vadd.f32 %v1225, %v1417
      %v1419 = vpop.f32.mrb[0].mxu0
      %v1420 = vadd.f32 %v1227, %v1419
      %1421 = vmatprep.mubr.bf16.mxu0 %v1005
      %1422 = vmatmul.mubr.bf16.gmra.mrb[0].mxu0 %v1004
      %v1423 = vpop.f32.mrb[0].mxu0
      %v1424 = vadd.f32 %v1231, %v1423
      %v1425 = vpop.f32.mrb[0].mxu0
      %v1426 = vadd.f32 %v1233, %v1425
      %v1427 = vpop.f32.mrb[0].mxu0
      %v1428 = vadd.f32 %v1235, %v1427
      %v1429 = vpop.f32.mrb[0].mxu0
      %v1430 = vadd.f32 %v1237, %v1429
      %1431 = vmatprep.mubr.bf16.mxu0 %v1009
      %1432 = vmatmul.mubr.bf16.gmra.mrb[0].mxu0 %v1008
      %v1433 = vpop.f32.mrb[0].mxu0
      %v1434 = vadd.f32 %v1241, %v1433
      %v1435 = vpop.f32.mrb[0].mxu0
      %v1436 = vadd.f32 %v1243, %v1435
      %v1437 = vpop.f32.mrb[0].mxu0
      %v1438 = vadd.f32 %v1245, %v1437
      %v1439 = vpop.f32.mrb[0].mxu0
      %v1440 = vadd.f32 %v1247, %v1439
      %1441 = vmatprep.mubr.bf16.mxu0 %v1013
      %1442 = vmatmul.mubr.bf16.gmra.mrb[0].mxu0 %v1012
      %v1443 = vpop.f32.mrb[0].mxu0
      %v1444 = vadd.f32 %v1251, %v1443
      %v1445 = vpop.f32.mrb[0].mxu0
      %v1446 = vadd.f32 %v1253, %v1445
      %v1447 = vpop.f32.mrb[0].mxu0
      %v1448 = vadd.f32 %v1255, %v1447
      %v1449 = vpop.f32.mrb[0].mxu0
      %v1450 = vadd.f32 %v1257, %v1449
      %1451 = vmatprep.mubr.bf16.mxu0 %v1017
      %1452 = vmatmul.mubr.bf16.gmra.mrb[0].mxu0 %v1016
      %v1453 = vpop.f32.mrb[0].mxu0
      %v1454 = vadd.f32 %v1261, %v1453
      %v1455 = vpop.f32.mrb[0].mxu0
      %v1456 = vadd.f32 %v1263, %v1455
      %v1457 = vpop.f32.mrb[0].mxu0
      %v1458 = vadd.f32 %v1265, %v1457
      %v1459 = vpop.f32.mrb[0].mxu0
      %v1460 = vadd.f32 %v1267, %v1459
      %1461 = vmatprep.mubr.bf16.mxu0 %v1021
      %1462 = vmatmul.mubr.bf16.gmra.mrb[0].mxu0 %v1020
      %v1463 = vpop.f32.mrb[0].mxu0
      %v1464 = vadd.f32 %v1271, %v1463
      %v1465 = vpop.f32.mrb[0].mxu0
      %v1466 = vadd.f32 %v1273, %v1465
      %v1467 = vpop.f32.mrb[0].mxu0
      %v1468 = vadd.f32 %v1275, %v1467
      %v1469 = vpop.f32.mrb[0].mxu0
      %v1470 = vadd.f32 %v1277, %v1469
      %1471 = vdwg.mxu0
      %v1472 = vmax.f32 %v1314, 0.0
      %v1473 = vmax.f32 %v1316, 0.0
      %v1474 = vmax.f32 %v1318, 0.0
      %v1475 = vmax.f32 %v1320, 0.0
      %v1476 = vmax.f32 %v1324, 0.0
      %v1477 = vmax.f32 %v1326, 0.0
      %v1478 = vmax.f32 %v1328, 0.0
      %v1479 = vmax.f32 %v1330, 0.0
      %v1480 = vmax.f32 %v1334, 0.0
      %v1481 = vmax.f32 %v1336, 0.0
      %v1482 = vmax.f32 %v1338, 0.0
      %v1483 = vmax.f32 %v1340, 0.0
      %v1484 = vmax.f32 %v1344, 0.0
      %v1485 = vmax.f32 %v1346, 0.0
      %v1486 = vmax.f32 %v1348, 0.0
      %v1487 = vmax.f32 %v1350, 0.0
      %v1488 = vmax.f32 %v1354, 0.0
      %v1489 = vmax.f32 %v1356, 0.0
      %v1490 = vmax.f32 %v1358, 0.0
      %v1491 = vmax.f32 %v1360, 0.0
      %v1492 = vmax.f32 %v1364, 0.0
      %v1493 = vmax.f32 %v1366, 0.0
      %v1494 = vmax.f32 %v1368, 0.0
      %v1495 = vmax.f32 %v1370, 0.0
      %v1496 = vmax.f32 %v1374, 0.0
      %v1497 = vmax.f32 %v1376, 0.0
      %v1498 = vmax.f32 %v1378, 0.0
      %v1499 = vmax.f32 %v1380, 0.0
      %v1500 = vmax.f32 %v1384, 0.0
      %v1501 = vmax.f32 %v1386, 0.0
      %v1502 = vmax.f32 %v1388, 0.0
      %v1503 = vmax.f32 %v1390, 0.0
      %v1504 = vmax.f32 %v1394, 0.0
      %v1505 = vmax.f32 %v1396, 0.0
      %v1506 = vmax.f32 %v1398, 0.0
      %v1507 = vmax.f32 %v1400, 0.0
      %v1508 = vmax.f32 %v1404, 0.0
      %v1509 = vmax.f32 %v1406, 0.0
      %v1510 = vmax.f32 %v1408, 0.0
      %v1511 = vmax.f32 %v1410, 0.0
      %v1512 = vmax.f32 %v1414, 0.0
      %v1513 = vmax.f32 %v1416, 0.0
      %v1514 = vmax.f32 %v1418, 0.0
      %v1515 = vmax.f32 %v1420, 0.0
      %v1516 = vmax.f32 %v1424, 0.0
      %v1517 = vmax.f32 %v1426, 0.0
      %v1518 = vmax.f32 %v1428, 0.0
      %v1519 = vmax.f32 %v1430, 0.0
      %v1520 = vmax.f32 %v1434, 0.0
      %v1521 = vmax.f32 %v1436, 0.0
      %v1522 = vmax.f32 %v1438, 0.0
      %v1523 = vmax.f32 %v1440, 0.0
      %v1524 = vmax.f32 %v1444, 0.0
      %v1525 = vmax.f32 %v1446, 0.0
      %v1526 = vmax.f32 %v1448, 0.0
      %v1527 = vmax.f32 %v1450, 0.0
      %v1528 = vmax.f32 %v1454, 0.0
      %v1529 = vmax.f32 %v1456, 0.0
      %v1530 = vmax.f32 %v1458, 0.0
      %v1531 = vmax.f32 %v1460, 0.0
      %v1532 = vmax.f32 %v1464, 0.0
      %v1533 = vmax.f32 %v1466, 0.0
      %v1534 = vmax.f32 %v1468, 0.0
      %v1535 = vmax.f32 %v1470, 0.0
      %s1536 = smul.u32 %s22, 256
      %s1537 = sshra.s32 %s1536, 7
      %s1538 = sand.u32 %s1536, 127
      %s1539 = smul.addr %s1537, 8
      %s1540 = scalar_lea.vmem %s279, %s1539
      %1541 = vst [vmem:[%s1540] sm:$0xff] %v1472
      %1542 = vst [vmem:[%s1540 + $0x8] sm:$0xff] %v1473
      %1543 = vst [vmem:[%s1540 + $0x10] sm:$0xff] %v1474
      %1544 = vst [vmem:[%s1540 + $0x18] sm:$0xff] %v1475
      %1545 = vst [vmem:[%s1540 + $0x20] sm:$0xff] %v1476
      %1546 = vst [vmem:[%s1540 + $0x28] sm:$0xff] %v1477
      %1547 = vst [vmem:[%s1540 + $0x30] sm:$0xff] %v1478
      %1548 = vst [vmem:[%s1540 + $0x38] sm:$0xff] %v1479
      %1549 = vst [vmem:[%s1540 + $0x40] sm:$0xff] %v1480
      %1550 = vst [vmem:[%s1540 + $0x48] sm:$0xff] %v1481
      %1551 = vst [vmem:[%s1540 + $0x50] sm:$0xff] %v1482
      %1552 = vst [vmem:[%s1540 + $0x58] sm:$0xff] %v1483
      %1553 = vst [vmem:[%s1540 + $0x60] sm:$0xff] %v1484
      %1554 = vst [vmem:[%s1540 + $0x68] sm:$0xff] %v1485
      %1555 = vst [vmem:[%s1540 + $0x70] sm:$0xff] %v1486
      %1556 = vst [vmem:[%s1540 + $0x78] sm:$0xff] %v1487
      %1557 = vst [vmem:[%s1540 + $0x80] sm:$0xff] %v1488
      %1558 = vst [vmem:[%s1540 + $0x88] sm:$0xff] %v1489
      %1559 = vst [vmem:[%s1540 + $0x90] sm:$0xff] %v1490
      %1560 = vst [vmem:[%s1540 + $0x98] sm:$0xff] %v1491
      %1561 = vst [vmem:[%s1540 + $0xa0] sm:$0xff] %v1492
      %1562 = vst [vmem:[%s1540 + $0xa8] sm:$0xff] %v1493
      %1563 = vst [vmem:[%s1540 + $0xb0] sm:$0xff] %v1494
      %1564 = vst [vmem:[%s1540 + $0xb8] sm:$0xff] %v1495
      %1565 = vst [vmem:[%s1540 + $0xc0] sm:$0xff] %v1496
      %1566 = vst [vmem:[%s1540 + $0xc8] sm:$0xff] %v1497
      %1567 = vst [vmem:[%s1540 + $0xd0] sm:$0xff] %v1498
      %1568 = vst [vmem:[%s1540 + $0xd8] sm:$0xff] %v1499
      %1569 = vst [vmem:[%s1540 + $0xe0] sm:$0xff] %v1500
      %1570 = vst [vmem:[%s1540 + $0xe8] sm:$0xff] %v1501
      %1571 = vst [vmem:[%s1540 + $0xf0] sm:$0xff] %v1502
      %1572 = vst [vmem:[%s1540 + $0xf8] sm:$0xff] %v1503
      %1573 = vst [vmem:[%s1540 + $0x100] sm:$0xff] %v1504
      %1574 = vst [vmem:[%s1540 + $0x108] sm:$0xff] %v1505
      %1575 = vst [vmem:[%s1540 + $0x110] sm:$0xff] %v1506
      %1576 = vst [vmem:[%s1540 + $0x118] sm:$0xff] %v1507
      %1577 = vst [vmem:[%s1540 + $0x120] sm:$0xff] %v1508
      %1578 = vst [vmem:[%s1540 + $0x128] sm:$0xff] %v1509
      %1579 = vst [vmem:[%s1540 + $0x130] sm:$0xff] %v1510
      %1580 = vst [vmem:[%s1540 + $0x138] sm:$0xff] %v1511
      %1581 = vst [vmem:[%s1540 + $0x140] sm:$0xff] %v1512
      %1582 = vst [vmem:[%s1540 + $0x148] sm:$0xff] %v1513
      %1583 = vst [vmem:[%s1540 + $0x150] sm:$0xff] %v1514
      %1584 = vst [vmem:[%s1540 + $0x158] sm:$0xff] %v1515
      %1585 = vst [vmem:[%s1540 + $0x160] sm:$0xff] %v1516
      %1586 = vst [vmem:[%s1540 + $0x168] sm:$0xff] %v1517
      %1587 = vst [vmem:[%s1540 + $0x170] sm:$0xff] %v1518
      %1588 = vst [vmem:[%s1540 + $0x178] sm:$0xff] %v1519
      %1589 = vst [vmem:[%s1540 + $0x180] sm:$0xff] %v1520
      %1590 = vst [vmem:[%s1540 + $0x188] sm:$0xff] %v1521
      %1591 = vst [vmem:[%s1540 + $0x190] sm:$0xff] %v1522
      %1592 = vst [vmem:[%s1540 + $0x198] sm:$0xff] %v1523
      %1593 = vst [vmem:[%s1540 + $0x1a0] sm:$0xff] %v1524
      %1594 = vst [vmem:[%s1540 + $0x1a8] sm:$0xff] %v1525
      %1595 = vst [vmem:[%s1540 + $0x1b0] sm:$0xff] %v1526
      %1596 = vst [vmem:[%s1540 + $0x1b8] sm:$0xff] %v1527
      %1597 = vst [vmem:[%s1540 + $0x1c0] sm:$0xff] %v1528
      %1598 = vst [vmem:[%s1540 + $0x1c8] sm:$0xff] %v1529
      %1599 = vst [vmem:[%s1540 + $0x1d0] sm:$0xff] %v1530
      %1600 = vst [vmem:[%s1540 + $0x1d8] sm:$0xff] %v1531
      %1601 = vst [vmem:[%s1540 + $0x1e0] sm:$0xff] %v1532
      %1602 = vst [vmem:[%s1540 + $0x1e8] sm:$0xff] %v1533
      %1603 = vst [vmem:[%s1540 + $0x1f0] sm:$0xff] %v1534
      %1604 = vst [vmem:[%s1540 + $0x1f8] sm:$0xff] %v1535
      %v1605 = vld [vmem:[#allocation2] sm:$0xff]
      %v1606 = vld [vmem:[#allocation2 + $0x8] sm:$0xff]
      %v1607 = vld [vmem:[#allocation2 + $0x10] sm:$0xff]
      %v1608 = vld [vmem:[#allocation2 + $0x18] sm:$0xff]
      %v1609 = vld [vmem:[#allocation2 + $0x20] sm:$0xff]
      %v1610 = vld [vmem:[#allocation2 + $0x28] sm:$0xff]
      %v1611 = vld [vmem:[#allocation2 + $0x30] sm:$0xff]
      %v1612 = vld [vmem:[#allocation2 + $0x38] sm:$0xff]
      %v1613 = vld [vmem:[#allocation2 + $0x40] sm:$0xff]
      %v1614 = vld [vmem:[#allocation2 + $0x48] sm:$0xff]
      %v1615 = vld [vmem:[#allocation2 + $0x50] sm:$0xff]
      %v1616 = vld [vmem:[#allocation2 + $0x58] sm:$0xff]
      %v1617 = vld [vmem:[#allocation2 + $0x60] sm:$0xff]
      %v1618 = vld [vmem:[#allocation2 + $0x68] sm:$0xff]
      %v1619 = vld [vmem:[#allocation2 + $0x70] sm:$0xff]
      %v1620 = vld [vmem:[#allocation2 + $0x78] sm:$0xff]
      %v1621 = vld [vmem:[#allocation2 + $0x80] sm:$0xff]
      %v1622 = vld [vmem:[#allocation2 + $0x88] sm:$0xff]
      %v1623 = vld [vmem:[#allocation2 + $0x90] sm:$0xff]
      %v1624 = vld [vmem:[#allocation2 + $0x98] sm:$0xff]
      %v1625 = vld [vmem:[#allocation2 + $0xa0] sm:$0xff]
      %v1626 = vld [vmem:[#allocation2 + $0xa8] sm:$0xff]
      %v1627 = vld [vmem:[#allocation2 + $0xb0] sm:$0xff]
      %v1628 = vld [vmem:[#allocation2 + $0xb8] sm:$0xff]
      %v1629 = vld [vmem:[#allocation2 + $0xc0] sm:$0xff]
      %v1630 = vld [vmem:[#allocation2 + $0xc8] sm:$0xff]
      %v1631 = vld [vmem:[#allocation2 + $0xd0] sm:$0xff]
      %v1632 = vld [vmem:[#allocation2 + $0xd8] sm:$0xff]
      %v1633 = vld [vmem:[#allocation2 + $0xe0] sm:$0xff]
      %v1634 = vld [vmem:[#allocation2 + $0xe8] sm:$0xff]
      %v1635 = vld [vmem:[#allocation2 + $0xf0] sm:$0xff]
      %v1636 = vld [vmem:[#allocation2 + $0xf8] sm:$0xff]
      %v1637 = vadd.f32 %v1472, %v1473
      %1638 = vadd.xlane.f32.xlu0 %v1637
      %v1639 = vpop.xlane.xlu0 %1638
      %v1640 = vadd.f32 %v1474, %v1475
      %1641 = vadd.xlane.f32.xlu0 %v1640
      %v1642 = vpop.xlane.xlu0 %1641
      %v1643 = vadd.f32 %v1476, %v1477
      %1644 = vadd.xlane.f32.xlu0 %v1643
      %v1645 = vpop.xlane.xlu0 %1644
      %v1646 = vadd.f32 %v1478, %v1479
      %1647 = vadd.xlane.f32.xlu0 %v1646
      %v1648 = vpop.xlane.xlu0 %1647
      %v1649 = vadd.f32 %v1480, %v1481
      %1650 = vadd.xlane.f32.xlu0 %v1649
      %v1651 = vpop.xlane.xlu0 %1650
      %v1652 = vadd.f32 %v1482, %v1483
      %1653 = vadd.xlane.f32.xlu0 %v1652
      %v1654 = vpop.xlane.xlu0 %1653
      %v1655 = vadd.f32 %v1484, %v1485
      %1656 = vadd.xlane.f32.xlu0 %v1655
      %v1657 = vpop.xlane.xlu0 %1656
      %v1658 = vadd.f32 %v1486, %v1487
      %1659 = vadd.xlane.f32.xlu0 %v1658
      %v1660 = vpop.xlane.xlu0 %1659
      %v1661 = vadd.f32 %v1488, %v1489
      %1662 = vadd.xlane.f32.xlu0 %v1661
      %v1663 = vpop.xlane.xlu0 %1662
      %v1664 = vadd.f32 %v1490, %v1491
      %1665 = vadd.xlane.f32.xlu0 %v1664
      %v1666 = vpop.xlane.xlu0 %1665
      %v1667 = vadd.f32 %v1492, %v1493
      %1668 = vadd.xlane.f32.xlu0 %v1667
      %v1669 = vpop.xlane.xlu0 %1668
      %v1670 = vadd.f32 %v1494, %v1495
      %1671 = vadd.xlane.f32.xlu0 %v1670
      %v1672 = vpop.xlane.xlu0 %1671
      %v1673 = vadd.f32 %v1496, %v1497
      %1674 = vadd.xlane.f32.xlu0 %v1673
      %v1675 = vpop.xlane.xlu0 %1674
      %v1676 = vadd.f32 %v1498, %v1499
      %1677 = vadd.xlane.f32.xlu0 %v1676
      %v1678 = vpop.xlane.xlu0 %1677
      %v1679 = vadd.f32 %v1500, %v1501
      %1680 = vadd.xlane.f32.xlu0 %v1679
      %v1681 = vpop.xlane.xlu0 %1680
      %v1682 = vadd.f32 %v1502, %v1503
      %1683 = vadd.xlane.f32.xlu0 %v1682
      %v1684 = vpop.xlane.xlu0 %1683
      %v1685 = vadd.f32 %v1504, %v1505
      %1686 = vadd.xlane.f32.xlu0 %v1685
      %v1687 = vpop.xlane.xlu0 %1686
      %v1688 = vadd.f32 %v1506, %v1507
      %1689 = vadd.xlane.f32.xlu0 %v1688
      %v1690 = vpop.xlane.xlu0 %1689
      %v1691 = vadd.f32 %v1508, %v1509
      %1692 = vadd.xlane.f32.xlu0 %v1691
      %v1693 = vpop.xlane.xlu0 %1692
      %v1694 = vadd.f32 %v1510, %v1511
      %1695 = vadd.xlane.f32.xlu0 %v1694
      %v1696 = vpop.xlane.xlu0 %1695
      %v1697 = vadd.f32 %v1512, %v1513
      %1698 = vadd.xlane.f32.xlu0 %v1697
      %v1699 = vpop.xlane.xlu0 %1698
      %v1700 = vadd.f32 %v1514, %v1515
      %1701 = vadd.xlane.f32.xlu0 %v1700
      %v1702 = vpop.xlane.xlu0 %1701
      %v1703 = vadd.f32 %v1516, %v1517
      %1704 = vadd.xlane.f32.xlu0 %v1703
      %v1705 = vpop.xlane.xlu0 %1704
      %v1706 = vadd.f32 %v1518, %v1519
      %1707 = vadd.xlane.f32.xlu0 %v1706
      %v1708 = vpop.xlane.xlu0 %1707
      %v1709 = vadd.f32 %v1520, %v1521
      %1710 = vadd.xlane.f32.xlu0 %v1709
      %v1711 = vpop.xlane.xlu0 %1710
      %v1712 = vadd.f32 %v1522, %v1523
      %1713 = vadd.xlane.f32.xlu0 %v1712
      %v1714 = vpop.xlane.xlu0 %1713
      %v1715 = vadd.f32 %v1524, %v1525
      %1716 = vadd.xlane.f32.xlu0 %v1715
      %v1717 = vpop.xlane.xlu0 %1716
      %v1718 = vadd.f32 %v1526, %v1527
      %1719 = vadd.xlane.f32.xlu0 %v1718
      %v1720 = vpop.xlane.xlu0 %1719
      %v1721 = vadd.f32 %v1528, %v1529
      %1722 = vadd.xlane.f32.xlu0 %v1721
      %v1723 = vpop.xlane.xlu0 %1722
      %v1724 = vadd.f32 %v1530, %v1531
      %1725 = vadd.xlane.f32.xlu0 %v1724
      %v1726 = vpop.xlane.xlu0 %1725
      %v1727 = vadd.f32 %v1532, %v1533
      %1728 = vadd.xlane.f32.xlu0 %v1727
      %v1729 = vpop.xlane.xlu0 %1728
      %v1730 = vadd.f32 %v1534, %v1535
      %1731 = vadd.xlane.f32.xlu0 %v1730
      %v1732 = vpop.xlane.xlu0 %1731
      %v1733 = vadd.f32 %v1605, %v1639
      %v1734 = vadd.f32 %v1606, %v1642
      %v1735 = vadd.f32 %v1607, %v1645
      %v1736 = vadd.f32 %v1608, %v1648
      %v1737 = vadd.f32 %v1609, %v1651
      %v1738 = vadd.f32 %v1610, %v1654
      %v1739 = vadd.f32 %v1611, %v1657
      %v1740 = vadd.f32 %v1612, %v1660
      %v1741 = vadd.f32 %v1613, %v1663
      %v1742 = vadd.f32 %v1614, %v1666
      %v1743 = vadd.f32 %v1615, %v1669
      %v1744 = vadd.f32 %v1616, %v1672
      %v1745 = vadd.f32 %v1617, %v1675
      %v1746 = vadd.f32 %v1618, %v1678
      %v1747 = vadd.f32 %v1619, %v1681
      %v1748 = vadd.f32 %v1620, %v1684
      %v1749 = vadd.f32 %v1621, %v1687
      %v1750 = vadd.f32 %v1622, %v1690
      %v1751 = vadd.f32 %v1623, %v1693
      %v1752 = vadd.f32 %v1624, %v1696
      %v1753 = vadd.f32 %v1625, %v1699
      %v1754 = vadd.f32 %v1626, %v1702
      %v1755 = vadd.f32 %v1627, %v1705
      %v1756 = vadd.f32 %v1628, %v1708
      %v1757 = vadd.f32 %v1629, %v1711
      %v1758 = vadd.f32 %v1630, %v1714
      %v1759 = vadd.f32 %v1631, %v1717
      %v1760 = vadd.f32 %v1632, %v1720
      %v1761 = vadd.f32 %v1633, %v1723
      %v1762 = vadd.f32 %v1634, %v1726
      %v1763 = vadd.f32 %v1635, %v1729
      %v1764 = vadd.f32 %v1636, %v1732
      %vm1765 = vcmask 7168
      %1766 = vst.msk [vmem:[#allocation2] sm:$0xff] %vm1765, %v1733
      %1767 = vst.msk [vmem:[#allocation2 + $0x8] sm:$0xff] %vm1765, %v1734
      %1768 = vst.msk [vmem:[#allocation2 + $0x10] sm:$0xff] %vm1765, %v1735
      %1769 = vst.msk [vmem:[#allocation2 + $0x18] sm:$0xff] %vm1765, %v1736
      %1770 = vst.msk [vmem:[#allocation2 + $0x20] sm:$0xff] %vm1765, %v1737
      %1771 = vst.msk [vmem:[#allocation2 + $0x28] sm:$0xff] %vm1765, %v1738
      %1772 = vst.msk [vmem:[#allocation2 + $0x30] sm:$0xff] %vm1765, %v1739
      %1773 = vst.msk [vmem:[#allocation2 + $0x38] sm:$0xff] %vm1765, %v1740
      %1774 = vst.msk [vmem:[#allocation2 + $0x40] sm:$0xff] %vm1765, %v1741
      %1775 = vst.msk [vmem:[#allocation2 + $0x48] sm:$0xff] %vm1765, %v1742
      %1776 = vst.msk [vmem:[#allocation2 + $0x50] sm:$0xff] %vm1765, %v1743
      %1777 = vst.msk [vmem:[#allocation2 + $0x58] sm:$0xff] %vm1765, %v1744
      %1778 = vst.msk [vmem:[#allocation2 + $0x60] sm:$0xff] %vm1765, %v1745
      %1779 = vst.msk [vmem:[#allocation2 + $0x68] sm:$0xff] %vm1765, %v1746
      %1780 = vst.msk [vmem:[#allocation2 + $0x70] sm:$0xff] %vm1765, %v1747
      %1781 = vst.msk [vmem:[#allocation2 + $0x78] sm:$0xff] %vm1765, %v1748
      %1782 = vst.msk [vmem:[#allocation2 + $0x80] sm:$0xff] %vm1765, %v1749
      %1783 = vst.msk [vmem:[#allocation2 + $0x88] sm:$0xff] %vm1765, %v1750
      %1784 = vst.msk [vmem:[#allocation2 + $0x90] sm:$0xff] %vm1765, %v1751
      %1785 = vst.msk [vmem:[#allocation2 + $0x98] sm:$0xff] %vm1765, %v1752
      %1786 = vst.msk [vmem:[#allocation2 + $0xa0] sm:$0xff] %vm1765, %v1753
      %1787 = vst.msk [vmem:[#allocation2 + $0xa8] sm:$0xff] %vm1765, %v1754
      %1788 = vst.msk [vmem:[#allocation2 + $0xb0] sm:$0xff] %vm1765, %v1755
      %1789 = vst.msk [vmem:[#allocation2 + $0xb8] sm:$0xff] %vm1765, %v1756
      %1790 = vst.msk [vmem:[#allocation2 + $0xc0] sm:$0xff] %vm1765, %v1757
      %1791 = vst.msk [vmem:[#allocation2 + $0xc8] sm:$0xff] %vm1765, %v1758
      %1792 = vst.msk [vmem:[#allocation2 + $0xd0] sm:$0xff] %vm1765, %v1759
      %1793 = vst.msk [vmem:[#allocation2 + $0xd8] sm:$0xff] %vm1765, %v1760
      %1794 = vst.msk [vmem:[#allocation2 + $0xe0] sm:$0xff] %vm1765, %v1761
      %1795 = vst.msk [vmem:[#allocation2 + $0xe8] sm:$0xff] %vm1765, %v1762
      %1796 = vst.msk [vmem:[#allocation2 + $0xf0] sm:$0xff] %vm1765, %v1763
      %1797 = vst.msk [vmem:[#allocation2 + $0xf8] sm:$0xff] %vm1765, %v1764
      // Predicated region
      $region49: #{decoder_forward.1} parent=43 // pred_check
        %p1798 = pneg %p281
      $region50: #{decoder_forward.1} parent=43 // pred_check_branch
        %1800 = sbr.rel (%p1798) target = $region52
      $region51: #{decoder_forward.1} parent=43 // pred_region
        %v1801 = vld [vmem:[#allocation2] sm:$0xff]
        %v1802 = vld [vmem:[#allocation2 + $0x8] sm:$0xff]
        %v1803 = vld [vmem:[#allocation2 + $0x10] sm:$0xff]
        %v1804 = vld [vmem:[#allocation2 + $0x18] sm:$0xff]
        %v1805 = vld [vmem:[#allocation2 + $0x20] sm:$0xff]
        %v1806 = vld [vmem:[#allocation2 + $0x28] sm:$0xff]
        %v1807 = vld [vmem:[#allocation2 + $0x30] sm:$0xff]
        %v1808 = vld [vmem:[#allocation2 + $0x38] sm:$0xff]
        %v1809 = vld [vmem:[#allocation2 + $0x40] sm:$0xff]
        %v1810 = vld [vmem:[#allocation2 + $0x48] sm:$0xff]
        %v1811 = vld [vmem:[#allocation2 + $0x50] sm:$0xff]
        %v1812 = vld [vmem:[#allocation2 + $0x58] sm:$0xff]
        %v1813 = vld [vmem:[#allocation2 + $0x60] sm:$0xff]
        %v1814 = vld [vmem:[#allocation2 + $0x68] sm:$0xff]
        %v1815 = vld [vmem:[#allocation2 + $0x70] sm:$0xff]
        %v1816 = vld [vmem:[#allocation2 + $0x78] sm:$0xff]
        %v1817 = vld [vmem:[#allocation2 + $0x80] sm:$0xff]
        %v1818 = vld [vmem:[#allocation2 + $0x88] sm:$0xff]
        %v1819 = vld [vmem:[#allocation2 + $0x90] sm:$0xff]
        %v1820 = vld [vmem:[#allocation2 + $0x98] sm:$0xff]
        %v1821 = vld [vmem:[#allocation2 + $0xa0] sm:$0xff]
        %v1822 = vld [vmem:[#allocation2 + $0xa8] sm:$0xff]
        %v1823 = vld [vmem:[#allocation2 + $0xb0] sm:$0xff]
        %v1824 = vld [vmem:[#allocation2 + $0xb8] sm:$0xff]
        %v1825 = vld [vmem:[#allocation2 + $0xc0] sm:$0xff]
        %v1826 = vld [vmem:[#allocation2 + $0xc8] sm:$0xff]
        %v1827 = vld [vmem:[#allocation2 + $0xd0] sm:$0xff]
        %v1828 = vld [vmem:[#allocation2 + $0xd8] sm:$0xff]
        %v1829 = vld [vmem:[#allocation2 + $0xe0] sm:$0xff]
        %v1830 = vld [vmem:[#allocation2 + $0xe8] sm:$0xff]
        %v1831 = vld [vmem:[#allocation2 + $0xf0] sm:$0xff]
        %v1832 = vld [vmem:[#allocation2 + $0xf8] sm:$0xff]
        %v1833 = vmul.f32 %v1801, 0.00390625
        %v1834 = vmul.f32 %v1802, 0.00390625
        %v1835 = vmul.f32 %v1803, 0.00390625
        %v1836 = vmul.f32 %v1804, 0.00390625
        %v1837 = vmul.f32 %v1805, 0.00390625
        %v1838 = vmul.f32 %v1806, 0.00390625
        %v1839 = vmul.f32 %v1807, 0.00390625
        %v1840 = vmul.f32 %v1808, 0.00390625
        %v1841 = vmul.f32 %v1809, 0.00390625
        %v1842 = vmul.f32 %v1810, 0.00390625
        %v1843 = vmul.f32 %v1811, 0.00390625
        %v1844 = vmul.f32 %v1812, 0.00390625
        %v1845 = vmul.f32 %v1813, 0.00390625
        %v1846 = vmul.f32 %v1814, 0.00390625
        %v1847 = vmul.f32 %v1815, 0.00390625
        %v1848 = vmul.f32 %v1816, 0.00390625
        %v1849 = vmul.f32 %v1817, 0.00390625
        %v1850 = vmul.f32 %v1818, 0.00390625
        %v1851 = vmul.f32 %v1819, 0.00390625
        %v1852 = vmul.f32 %v1820, 0.00390625
        %v1853 = vmul.f32 %v1821, 0.00390625
        %v1854 = vmul.f32 %v1822, 0.00390625
        %v1855 = vmul.f32 %v1823, 0.00390625
        %v1856 = vmul.f32 %v1824, 0.00390625
        %v1857 = vmul.f32 %v1825, 0.00390625
        %v1858 = vmul.f32 %v1826, 0.00390625
        %v1859 = vmul.f32 %v1827, 0.00390625
        %v1860 = vmul.f32 %v1828, 0.00390625
        %v1861 = vmul.f32 %v1829, 0.00390625
        %v1862 = vmul.f32 %v1830, 0.00390625
        %v1863 = vmul.f32 %v1831, 0.00390625
        %v1864 = vmul.f32 %v1832, 0.00390625
        %v1865 = vpack.c.bf16 %v1834, %v1833
        %v1866 = vpack.c.bf16 %v1836, %v1835
        %v1867 = vpack.c.bf16 %v1838, %v1837
        %v1868 = vpack.c.bf16 %v1840, %v1839
        %v1869 = vpack.c.bf16 %v1842, %v1841
        %v1870 = vpack.c.bf16 %v1844, %v1843
        %v1871 = vpack.c.bf16 %v1846, %v1845
        %v1872 = vpack.c.bf16 %v1848, %v1847
        %v1873 = vpack.c.bf16 %v1850, %v1849
        %v1874 = vpack.c.bf16 %v1852, %v1851
        %v1875 = vpack.c.bf16 %v1854, %v1853
        %v1876 = vpack.c.bf16 %v1856, %v1855
        %v1877 = vpack.c.bf16 %v1858, %v1857
        %v1878 = vpack.c.bf16 %v1860, %v1859
        %v1879 = vpack.c.bf16 %v1862, %v1861
        %v1880 = vpack.c.bf16 %v1864, %v1863
        %v1881 = vld [vmem:[%s3] sm:$0xff]
        %v1882 = vld [vmem:[%s3 + $0x8] sm:$0xff]
        %v1883 = vld [vmem:[%s3 + $0x10] sm:$0xff]
        %v1884 = vld [vmem:[%s3 + $0x18] sm:$0xff]
        %v1885 = vld [vmem:[%s3 + $0x20] sm:$0xff]
        %v1886 = vld [vmem:[%s3 + $0x28] sm:$0xff]
        %v1887 = vld [vmem:[%s3 + $0x30] sm:$0xff]
        %v1888 = vld [vmem:[%s3 + $0x38] sm:$0xff]
        %v1889 = vld [vmem:[%s3 + $0x40] sm:$0xff]
        %v1890 = vld [vmem:[%s3 + $0x48] sm:$0xff]
        %v1891 = vld [vmem:[%s3 + $0x50] sm:$0xff]
        %v1892 = vld [vmem:[%s3 + $0x58] sm:$0xff]
        %v1893 = vld [vmem:[%s3 + $0x60] sm:$0xff]
        %v1894 = vld [vmem:[%s3 + $0x68] sm:$0xff]
        %v1895 = vld [vmem:[%s3 + $0x70] sm:$0xff]
        %v1896 = vld [vmem:[%s3 + $0x78] sm:$0xff]
        %v1897 = vld [vmem:[%s3 + $0x80] sm:$0xff]
        %v1898 = vld [vmem:[%s3 + $0x88] sm:$0xff]
        %v1899 = vld [vmem:[%s3 + $0x90] sm:$0xff]
        %v1900 = vld [vmem:[%s3 + $0x98] sm:$0xff]
        %v1901 = vld [vmem:[%s3 + $0xa0] sm:$0xff]
        %v1902 = vld [vmem:[%s3 + $0xa8] sm:$0xff]
        %v1903 = vld [vmem:[%s3 + $0xb0] sm:$0xff]
        %v1904 = vld [vmem:[%s3 + $0xb8] sm:$0xff]
        %v1905 = vld [vmem:[%s3 + $0xc0] sm:$0xff]
        %v1906 = vld [vmem:[%s3 + $0xc8] sm:$0xff]
        %v1907 = vld [vmem:[%s3 + $0xd0] sm:$0xff]
        %v1908 = vld [vmem:[%s3 + $0xd8] sm:$0xff]
        %v1909 = vld [vmem:[%s3 + $0xe0] sm:$0xff]
        %v1910 = vld [vmem:[%s3 + $0xe8] sm:$0xff]
        %v1911 = vld [vmem:[%s3 + $0xf0] sm:$0xff]
        %v1912 = vld [vmem:[%s3 + $0xf8] sm:$0xff]
        %v1945 = vunpack.c.l.b16 %v1881
        %v1946 = vunpack.c.h.b16 %v1881
        %v1947 = vunpack.c.l.b16 %v1882
        %v1948 = vunpack.c.h.b16 %v1882
        %v1949 = vunpack.c.l.b16 %v1883
        %v1950 = vunpack.c.h.b16 %v1883
        %v1951 = vunpack.c.l.b16 %v1884
        %v1952 = vunpack.c.h.b16 %v1884
        %v1953 = vunpack.c.l.b16 %v1885
        %v1954 = vunpack.c.h.b16 %v1885
        %v1955 = vunpack.c.l.b16 %v1886
        %v1956 = vunpack.c.h.b16 %v1886
        %v1957 = vunpack.c.l.b16 %v1887
        %v1958 = vunpack.c.h.b16 %v1887
        %v1959 = vunpack.c.l.b16 %v1888
        %v1960 = vunpack.c.h.b16 %v1888
        %v1961 = vunpack.c.l.b16 %v1889
        %v1962 = vunpack.c.h.b16 %v1889
        %v1963 = vunpack.c.l.b16 %v1890
        %v1964 = vunpack.c.h.b16 %v1890
        %v1965 = vunpack.c.l.b16 %v1891
        %v1966 = vunpack.c.h.b16 %v1891
        %v1967 = vunpack.c.l.b16 %v1892
        %v1968 = vunpack.c.h.b16 %v1892
        %v1969 = vunpack.c.l.b16 %v1893
        %v1970 = vunpack.c.h.b16 %v1893
        %v1971 = vunpack.c.l.b16 %v1894
        %v1972 = vunpack.c.h.b16 %v1894
        %v1973 = vunpack.c.l.b16 %v1895
        %v1974 = vunpack.c.h.b16 %v1895
        %v1975 = vunpack.c.l.b16 %v1896
        %v1976 = vunpack.c.h.b16 %v1896
        %v1977 = vunpack.c.l.b16 %v1897
        %v1978 = vunpack.c.h.b16 %v1897
        %v1979 = vunpack.c.l.b16 %v1898
        %v1980 = vunpack.c.h.b16 %v1898
        %v1981 = vunpack.c.l.b16 %v1899
        %v1982 = vunpack.c.h.b16 %v1899
        %v1983 = vunpack.c.l.b16 %v1900
        %v1984 = vunpack.c.h.b16 %v1900
        %v1985 = vunpack.c.l.b16 %v1901
        %v1986 = vunpack.c.h.b16 %v1901
        %v1987 = vunpack.c.l.b16 %v1902
        %v1988 = vunpack.c.h.b16 %v1902
        %v1989 = vunpack.c.l.b16 %v1903
        %v1990 = vunpack.c.h.b16 %v1903
        %v1991 = vunpack.c.l.b16 %v1904
        %v1992 = vunpack.c.h.b16 %v1904
        %v1993 = vunpack.c.l.b16 %v1905
        %v1994 = vunpack.c.h.b16 %v1905
        %v1995 = vunpack.c.l.b16 %v1906
        %v1996 = vunpack.c.h.b16 %v1906
        %v1997 = vunpack.c.l.b16 %v1907
        %v1998 = vunpack.c.h.b16 %v1907
        %v1999 = vunpack.c.l.b16 %v1908
        %v2000 = vunpack.c.h.b16 %v1908
        %v2001 = vunpack.c.l.b16 %v1909
        %v2002 = vunpack.c.h.b16 %v1909
        %v2003 = vunpack.c.l.b16 %v1910
        %v2004 = vunpack.c.h.b16 %v1910
        %v2005 = vunpack.c.l.b16 %v1911
        %v2006 = vunpack.c.h.b16 %v1911
        %v2007 = vunpack.c.l.b16 %v1912
        %v2008 = vunpack.c.h.b16 %v1912
        %v2009 = vpack.c.b16 %v1947, %v1945
        %v2010 = vpack.c.b16 %v1948, %v1946
        %v2011 = vpack.c.b16 %v1951, %v1949
        %v2012 = vpack.c.b16 %v1952, %v1950
        %v2013 = vpack.c.b16 %v1955, %v1953
        %v2014 = vpack.c.b16 %v1956, %v1954
        %v2015 = vpack.c.b16 %v1959, %v1957
        %v2016 = vpack.c.b16 %v1960, %v1958
        %v2017 = vpack.c.b16 %v1963, %v1961
        %v2018 = vpack.c.b16 %v1964, %v1962
        %v2019 = vpack.c.b16 %v1967, %v1965
        %v2020 = vpack.c.b16 %v1968, %v1966
        %v2021 = vpack.c.b16 %v1971, %v1969
        %v2022 = vpack.c.b16 %v1972, %v1970
        %v2023 = vpack.c.b16 %v1975, %v1973
        %v2024 = vpack.c.b16 %v1976, %v1974
        %v2025 = vpack.c.b16 %v1979, %v1977
        %v2026 = vpack.c.b16 %v1980, %v1978
        %v2027 = vpack.c.b16 %v1983, %v1981
        %v2028 = vpack.c.b16 %v1984, %v1982
        %v2029 = vpack.c.b16 %v1987, %v1985
        %v2030 = vpack.c.b16 %v1988, %v1986
        %v2031 = vpack.c.b16 %v1991, %v1989
        %v2032 = vpack.c.b16 %v1992, %v1990
        %v2033 = vpack.c.b16 %v1995, %v1993
        %v2034 = vpack.c.b16 %v1996, %v1994
        %v2035 = vpack.c.b16 %v1999, %v1997
        %v2036 = vpack.c.b16 %v2000, %v1998
        %v2037 = vpack.c.b16 %v2003, %v2001
        %v2038 = vpack.c.b16 %v2004, %v2002
        %v2039 = vpack.c.b16 %v2007, %v2005
        %v2040 = vpack.c.b16 %v2008, %v2006
        %2073 = vmatprep.subr.bf16.mxu0 0
        %2074 = vmatpush1.bf16.msra.mxu0 %v1865
        %2075 = vmatprep.subr.bf16.mxu0 0
        %2076 = vmatpush1.bf16.msra.mxu0 %v1866
        %2077 = vmatprep.subr.bf16.mxu0 0
        %2078 = vmatpush1.bf16.msra.mxu0 %v1867
        %2079 = vmatprep.subr.bf16.mxu0 0
        %2080 = vmatpush1.bf16.msra.mxu0 %v1868
        %2081 = vmatprep.subr.bf16.mxu0 0
        %2082 = vmatpush1.bf16.msra.mxu0 %v1869
        %2083 = vmatprep.subr.bf16.mxu0 0
        %2084 = vmatpush1.bf16.msra.mxu0 %v1870
        %2085 = vmatprep.subr.bf16.mxu0 0
        %2086 = vmatpush1.bf16.msra.mxu0 %v1871
        %2087 = vmatprep.subr.bf16.mxu0 0
        %2088 = vmatpush1.bf16.msra.mxu0 %v1872
        %2089 = vmatprep.subr.bf16.mxu0 0
        %2090 = vmatpush1.bf16.msra.mxu0 %v1873
        %2091 = vmatprep.subr.bf16.mxu0 0
        %2092 = vmatpush1.bf16.msra.mxu0 %v1874
        %2093 = vmatprep.subr.bf16.mxu0 0
        %2094 = vmatpush1.bf16.msra.mxu0 %v1875
        %2095 = vmatprep.subr.bf16.mxu0 0
        %2096 = vmatpush1.bf16.msra.mxu0 %v1876
        %2097 = vmatprep.subr.bf16.mxu0 0
        %2098 = vmatpush1.bf16.msra.mxu0 %v1877
        %2099 = vmatprep.subr.bf16.mxu0 0
        %2100 = vmatpush1.bf16.msra.mxu0 %v1878
        %2101 = vmatprep.subr.bf16.mxu0 0
        %2102 = vmatpush1.bf16.msra.mxu0 %v1879
        %2103 = vmatprep.subr.bf16.mxu0 0
        %2104 = vmatpush1.bf16.msra.mxu0 %v1880
        %2105 = vmatprep.mubr.bf16.mxu0 %v2010
        %2106 = vmatmul.mubr.bf16.gmra.mrb[0].mxu0 %v2009
        %v2107 = vpop.f32.mrb[0].mxu0
        %v2108 = vadd.f32 0.0, %v2107
        %v2109 = vpop.f32.mrb[0].mxu0
        %v2110 = vpop.f32.mrb[0].mxu0
        %v2111 = vadd.f32 0.0, %v2110
        %v2112 = vpop.f32.mrb[0].mxu0
        %2113 = vmatprep.mubr.bf16.mxu0 %v2012
        %2114 = vmatmul.mubr.bf16.gmra.mrb[0].mxu0 %v2011
        %v2115 = vpop.f32.mrb[0].mxu0
        %v2116 = vadd.f32 0.0, %v2115
        %v2117 = vpop.f32.mrb[0].mxu0
        %v2118 = vpop.f32.mrb[0].mxu0
        %v2119 = vadd.f32 0.0, %v2118
        %v2120 = vpop.f32.mrb[0].mxu0
        %2121 = vmatprep.mubr.bf16.mxu0 %v2014
        %2122 = vmatmul.mubr.bf16.gmra.mrb[0].mxu0 %v2013
        %v2123 = vpop.f32.mrb[0].mxu0
        %v2124 = vadd.f32 0.0, %v2123
        %v2125 = vpop.f32.mrb[0].mxu0
        %v2126 = vpop.f32.mrb[0].mxu0
        %v2127 = vadd.f32 0.0, %v2126
        %v2128 = vpop.f32.mrb[0].mxu0
        %2129 = vmatprep.mubr.bf16.mxu0 %v2016
        %2130 = vmatmul.mubr.bf16.gmra.mrb[0].mxu0 %v2015
        %v2131 = vpop.f32.mrb[0].mxu0
        %v2132 = vadd.f32 0.0, %v2131
        %v2133 = vpop.f32.mrb[0].mxu0
        %v2134 = vpop.f32.mrb[0].mxu0
        %v2135 = vadd.f32 0.0, %v2134
        %v2136 = vpop.f32.mrb[0].mxu0
        %2137 = vmatprep.mubr.bf16.mxu0 %v2018
        %2138 = vmatmul.mubr.bf16.gmra.mrb[0].mxu0 %v2017
        %v2139 = vpop.f32.mrb[0].mxu0
        %v2140 = vadd.f32 0.0, %v2139
        %v2141 = vpop.f32.mrb[0].mxu0
        %v2142 = vpop.f32.mrb[0].mxu0
        %v2143 = vadd.f32 0.0, %v2142
        %v2144 = vpop.f32.mrb[0].mxu0
        %2145 = vmatprep.mubr.bf16.mxu0 %v2020
        %2146 = vmatmul.mubr.bf16.gmra.mrb[0].mxu0 %v2019
        %v2147 = vpop.f32.mrb[0].mxu0
        %v2148 = vadd.f32 0.0, %v2147
        %v2149 = vpop.f32.mrb[0].mxu0
        %v2150 = vpop.f32.mrb[0].mxu0
        %v2151 = vadd.f32 0.0, %v2150
        %v2152 = vpop.f32.mrb[0].mxu0
        %2153 = vmatprep.mubr.bf16.mxu0 %v2022
        %2154 = vmatmul.mubr.bf16.gmra.mrb[0].mxu0 %v2021
        %v2155 = vpop.f32.mrb[0].mxu0
        %v2156 = vadd.f32 0.0, %v2155
        %v2157 = vpop.f32.mrb[0].mxu0
        %v2158 = vpop.f32.mrb[0].mxu0
        %v2159 = vadd.f32 0.0, %v2158
        %v2160 = vpop.f32.mrb[0].mxu0
        %2161 = vmatprep.mubr.bf16.mxu0 %v2024
        %2162 = vmatmul.mubr.bf16.gmra.mrb[0].mxu0 %v2023
        %v2163 = vpop.f32.mrb[0].mxu0
        %v2164 = vadd.f32 0.0, %v2163
        %v2165 = vpop.f32.mrb[0].mxu0
        %v2166 = vpop.f32.mrb[0].mxu0
        %v2167 = vadd.f32 0.0, %v2166
        %v2168 = vpop.f32.mrb[0].mxu0
        %2169 = vmatprep.mubr.bf16.mxu0 %v2026
        %2170 = vmatmul.mubr.bf16.gmra.mrb[0].mxu0 %v2025
        %v2171 = vpop.f32.mrb[0].mxu0
        %v2172 = vadd.f32 0.0, %v2171
        %v2173 = vpop.f32.mrb[0].mxu0
        %v2174 = vpop.f32.mrb[0].mxu0
        %v2175 = vadd.f32 0.0, %v2174
        %v2176 = vpop.f32.mrb[0].mxu0
        %2177 = vmatprep.mubr.bf16.mxu0 %v2028
        %2178 = vmatmul.mubr.bf16.gmra.mrb[0].mxu0 %v2027
        %v2179 = vpop.f32.mrb[0].mxu0
        %v2180 = vadd.f32 0.0, %v2179
        %v2181 = vpop.f32.mrb[0].mxu0
        %v2182 = vpop.f32.mrb[0].mxu0
        %v2183 = vadd.f32 0.0, %v2182
        %v2184 = vpop.f32.mrb[0].mxu0
        %2185 = vmatprep.mubr.bf16.mxu0 %v2030
        %2186 = vmatmul.mubr.bf16.gmra.mrb[0].mxu0 %v2029
        %v2187 = vpop.f32.mrb[0].mxu0
        %v2188 = vadd.f32 0.0, %v2187
        %v2189 = vpop.f32.mrb[0].mxu0
        %v2190 = vpop.f32.mrb[0].mxu0
        %v2191 = vadd.f32 0.0, %v2190
        %v2192 = vpop.f32.mrb[0].mxu0
        %2193 = vmatprep.mubr.bf16.mxu0 %v2032
        %2194 = vmatmul.mubr.bf16.gmra.mrb[0].mxu0 %v2031
        %v2195 = vpop.f32.mrb[0].mxu0
        %v2196 = vadd.f32 0.0, %v2195
        %v2197 = vpop.f32.mrb[0].mxu0
        %v2198 = vpop.f32.mrb[0].mxu0
        %v2199 = vadd.f32 0.0, %v2198
        %v2200 = vpop.f32.mrb[0].mxu0
        %2201 = vmatprep.mubr.bf16.mxu0 %v2034
        %2202 = vmatmul.mubr.bf16.gmra.mrb[0].mxu0 %v2033
        %v2203 = vpop.f32.mrb[0].mxu0
        %v2204 = vadd.f32 0.0, %v2203
        %v2205 = vpop.f32.mrb[0].mxu0
        %v2206 = vpop.f32.mrb[0].mxu0
        %v2207 = vadd.f32 0.0, %v2206
        %v2208 = vpop.f32.mrb[0].mxu0
        %2209 = vmatprep.mubr.bf16.mxu0 %v2036
        %2210 = vmatmul.mubr.bf16.gmra.mrb[0].mxu0 %v2035
        %v2211 = vpop.f32.mrb[0].mxu0
        %v2212 = vadd.f32 0.0, %v2211
        %v2213 = vpop.f32.mrb[0].mxu0
        %v2214 = vpop.f32.mrb[0].mxu0
        %v2215 = vadd.f32 0.0, %v2214
        %v2216 = vpop.f32.mrb[0].mxu0
        %2217 = vmatprep.mubr.bf16.mxu0 %v2038
        %2218 = vmatmul.mubr.bf16.gmra.mrb[0].mxu0 %v2037
        %v2219 = vpop.f32.mrb[0].mxu0
        %v2220 = vadd.f32 0.0, %v2219
        %v2221 = vpop.f32.mrb[0].mxu0
        %v2222 = vpop.f32.mrb[0].mxu0
        %v2223 = vadd.f32 0.0, %v2222
        %v2224 = vpop.f32.mrb[0].mxu0
        %2225 = vmatprep.mubr.bf16.mxu0 %v2040
        %2226 = vmatmul.mubr.bf16.gmra.mrb[0].mxu0 %v2039
        %v2227 = vpop.f32.mrb[0].mxu0
        %v2228 = vadd.f32 0.0, %v2227
        %v2229 = vpop.f32.mrb[0].mxu0
        %v2230 = vpop.f32.mrb[0].mxu0
        %v2231 = vadd.f32 0.0, %v2230
        %v2232 = vpop.f32.mrb[0].mxu0
        %2233 = vdwg.mxu0
        %v2234 = vmax.f32 %v2108, 0.0
        %v2235 = vmax.f32 %v2111, 0.0
        %v2236 = vmax.f32 %v2116, 0.0
        %v2237 = vmax.f32 %v2119, 0.0
        %v2238 = vmax.f32 %v2124, 0.0
        %v2239 = vmax.f32 %v2127, 0.0
        %v2240 = vmax.f32 %v2132, 0.0
        %v2241 = vmax.f32 %v2135, 0.0
        %v2242 = vmax.f32 %v2140, 0.0
        %v2243 = vmax.f32 %v2143, 0.0
        %v2244 = vmax.f32 %v2148, 0.0
        %v2245 = vmax.f32 %v2151, 0.0
        %v2246 = vmax.f32 %v2156, 0.0
        %v2247 = vmax.f32 %v2159, 0.0
        %v2248 = vmax.f32 %v2164, 0.0
        %v2249 = vmax.f32 %v2167, 0.0
        %v2250 = vmax.f32 %v2172, 0.0
        %v2251 = vmax.f32 %v2175, 0.0
        %v2252 = vmax.f32 %v2180, 0.0
        %v2253 = vmax.f32 %v2183, 0.0
        %v2254 = vmax.f32 %v2188, 0.0
        %v2255 = vmax.f32 %v2191, 0.0
        %v2256 = vmax.f32 %v2196, 0.0
        %v2257 = vmax.f32 %v2199, 0.0
        %v2258 = vmax.f32 %v2204, 0.0
        %v2259 = vmax.f32 %v2207, 0.0
        %v2260 = vmax.f32 %v2212, 0.0
        %v2261 = vmax.f32 %v2215, 0.0
        %v2262 = vmax.f32 %v2220, 0.0
        %v2263 = vmax.f32 %v2223, 0.0
        %v2264 = vmax.f32 %v2228, 0.0
        %v2265 = vmax.f32 %v2231, 0.0
        %v2266 = vld [vmem:[%s4] sm:$0xff]
        %v2267 = vld [vmem:[%s4 + $0x8] sm:$0xff]
        %v2268 = vld [vmem:[%s4 + $0x10] sm:$0xff]
        %v2269 = vld [vmem:[%s4 + $0x18] sm:$0xff]
        %v2270 = vld [vmem:[%s4 + $0x20] sm:$0xff]
        %v2271 = vld [vmem:[%s4 + $0x28] sm:$0xff]
        %v2272 = vld [vmem:[%s4 + $0x30] sm:$0xff]
        %v2273 = vld [vmem:[%s4 + $0x38] sm:$0xff]
        %v2274 = vld [vmem:[%s4 + $0x40] sm:$0xff]
        %v2275 = vld [vmem:[%s4 + $0x48] sm:$0xff]
        %v2276 = vld [vmem:[%s4 + $0x50] sm:$0xff]
        %v2277 = vld [vmem:[%s4 + $0x58] sm:$0xff]
        %v2278 = vld [vmem:[%s4 + $0x60] sm:$0xff]
        %v2279 = vld [vmem:[%s4 + $0x68] sm:$0xff]
        %v2280 = vld [vmem:[%s4 + $0x70] sm:$0xff]
        %v2281 = vld [vmem:[%s4 + $0x78] sm:$0xff]
        %v2282 = vld [vmem:[%s4 + $0x80] sm:$0xff]
        %v2283 = vld [vmem:[%s4 + $0x88] sm:$0xff]
        %v2284 = vld [vmem:[%s4 + $0x90] sm:$0xff]
        %v2285 = vld [vmem:[%s4 + $0x98] sm:$0xff]
        %v2286 = vld [vmem:[%s4 + $0xa0] sm:$0xff]
        %v2287 = vld [vmem:[%s4 + $0xa8] sm:$0xff]
        %v2288 = vld [vmem:[%s4 + $0xb0] sm:$0xff]
        %v2289 = vld [vmem:[%s4 + $0xb8] sm:$0xff]
        %v2290 = vld [vmem:[%s4 + $0xc0] sm:$0xff]
        %v2291 = vld [vmem:[%s4 + $0xc8] sm:$0xff]
        %v2292 = vld [vmem:[%s4 + $0xd0] sm:$0xff]
        %v2293 = vld [vmem:[%s4 + $0xd8] sm:$0xff]
        %v2294 = vld [vmem:[%s4 + $0xe0] sm:$0xff]
        %v2295 = vld [vmem:[%s4 + $0xe8] sm:$0xff]
        %v2296 = vld [vmem:[%s4 + $0xf0] sm:$0xff]
        %v2297 = vld [vmem:[%s4 + $0xf8] sm:$0xff]
        %v2298 = vpack.c.bf16 %v2235, %v2234
        %v2299 = vpack.c.bf16 %v2237, %v2236
        %v2300 = vpack.c.bf16 %v2239, %v2238
        %v2301 = vpack.c.bf16 %v2241, %v2240
        %v2302 = vpack.c.bf16 %v2243, %v2242
        %v2303 = vpack.c.bf16 %v2245, %v2244
        %v2304 = vpack.c.bf16 %v2247, %v2246
        %v2305 = vpack.c.bf16 %v2249, %v2248
        %v2306 = vpack.c.bf16 %v2251, %v2250
        %v2307 = vpack.c.bf16 %v2253, %v2252
        %v2308 = vpack.c.bf16 %v2255, %v2254
        %v2309 = vpack.c.bf16 %v2257, %v2256
        %v2310 = vpack.c.bf16 %v2259, %v2258
        %v2311 = vpack.c.bf16 %v2261, %v2260
        %v2312 = vpack.c.bf16 %v2263, %v2262
        %v2313 = vpack.c.bf16 %v2265, %v2264
        %v2314 = vld [vmem:[%s5] sm:$0xff]
        %v2315 = vld [vmem:[%s5 + $0x8] sm:$0xff]
        %v2316 = vld [vmem:[%s5 + $0x10] sm:$0xff]
        %v2317 = vld [vmem:[%s5 + $0x18] sm:$0xff]
        %v2318 = vld [vmem:[%s5 + $0x20] sm:$0xff]
        %v2319 = vld [vmem:[%s5 + $0x28] sm:$0xff]
        %v2320 = vld [vmem:[%s5 + $0x30] sm:$0xff]
        %v2321 = vld [vmem:[%s5 + $0x38] sm:$0xff]
        %v2322 = vld [vmem:[%s5 + $0x40] sm:$0xff]
        %v2323 = vld [vmem:[%s5 + $0x48] sm:$0xff]
        %v2324 = vld [vmem:[%s5 + $0x50] sm:$0xff]
        %v2325 = vld [vmem:[%s5 + $0x58] sm:$0xff]
        %v2326 = vld [vmem:[%s5 + $0x60] sm:$0xff]
        %v2327 = vld [vmem:[%s5 + $0x68] sm:$0xff]
        %v2328 = vld [vmem:[%s5 + $0x70] sm:$0xff]
        %v2329 = vld [vmem:[%s5 + $0x78] sm:$0xff]
        %v2330 = vld [vmem:[%s5 + $0x80] sm:$0xff]
        %v2331 = vld [vmem:[%s5 + $0x88] sm:$0xff]
        %v2332 = vld [vmem:[%s5 + $0x90] sm:$0xff]
        %v2333 = vld [vmem:[%s5 + $0x98] sm:$0xff]
        %v2334 = vld [vmem:[%s5 + $0xa0] sm:$0xff]
        %v2335 = vld [vmem:[%s5 + $0xa8] sm:$0xff]
        %v2336 = vld [vmem:[%s5 + $0xb0] sm:$0xff]
        %v2337 = vld [vmem:[%s5 + $0xb8] sm:$0xff]
        %v2338 = vld [vmem:[%s5 + $0xc0] sm:$0xff]
        %v2339 = vld [vmem:[%s5 + $0xc8] sm:$0xff]
        %v2340 = vld [vmem:[%s5 + $0xd0] sm:$0xff]
        %v2341 = vld [vmem:[%s5 + $0xd8] sm:$0xff]
        %v2342 = vld [vmem:[%s5 + $0xe0] sm:$0xff]
        %v2343 = vld [vmem:[%s5 + $0xe8] sm:$0xff]
        %v2344 = vld [vmem:[%s5 + $0xf0] sm:$0xff]
        %v2345 = vld [vmem:[%s5 + $0xf8] sm:$0xff]
        %v2378 = vunpack.c.l.b16 %v2266
        %v2379 = vunpack.c.h.b16 %v2266
        %v2380 = vunpack.c.l.b16 %v2267
        %v2381 = vunpack.c.h.b16 %v2267
        %v2382 = vunpack.c.l.b16 %v2268
        %v2383 = vunpack.c.h.b16 %v2268
        %v2384 = vunpack.c.l.b16 %v2269
        %v2385 = vunpack.c.h.b16 %v2269
        %v2386 = vunpack.c.l.b16 %v2270
        %v2387 = vunpack.c.h.b16 %v2270
        %v2388 = vunpack.c.l.b16 %v2271
        %v2389 = vunpack.c.h.b16 %v2271
        %v2390 = vunpack.c.l.b16 %v2272
        %v2391 = vunpack.c.h.b16 %v2272
        %v2392 = vunpack.c.l.b16 %v2273
        %v2393 = vunpack.c.h.b16 %v2273
        %v2394 = vunpack.c.l.b16 %v2274
        %v2395 = vunpack.c.h.b16 %v2274
        %v2396 = vunpack.c.l.b16 %v2275
        %v2397 = vunpack.c.h.b16 %v2275
        %v2398 = vunpack.c.l.b16 %v2276
        %v2399 = vunpack.c.h.b16 %v2276
        %v2400 = vunpack.c.l.b16 %v2277
        %v2401 = vunpack.c.h.b16 %v2277
        %v2402 = vunpack.c.l.b16 %v2278
        %v2403 = vunpack.c.h.b16 %v2278
        %v2404 = vunpack.c.l.b16 %v2279
        %v2405 = vunpack.c.h.b16 %v2279
        %v2406 = vunpack.c.l.b16 %v2280
        %v2407 = vunpack.c.h.b16 %v2280
        %v2408 = vunpack.c.l.b16 %v2281
        %v2409 = vunpack.c.h.b16 %v2281
        %v2410 = vunpack.c.l.b16 %v2282
        %v2411 = vunpack.c.h.b16 %v2282
        %v2412 = vunpack.c.l.b16 %v2283
        %v2413 = vunpack.c.h.b16 %v2283
        %v2414 = vunpack.c.l.b16 %v2284
        %v2415 = vunpack.c.h.b16 %v2284
        %v2416 = vunpack.c.l.b16 %v2285
        %v2417 = vunpack.c.h.b16 %v2285
        %v2418 = vunpack.c.l.b16 %v2286
        %v2419 = vunpack.c.h.b16 %v2286
        %v2420 = vunpack.c.l.b16 %v2287
        %v2421 = vunpack.c.h.b16 %v2287
        %v2422 = vunpack.c.l.b16 %v2288
        %v2423 = vunpack.c.h.b16 %v2288
        %v2424 = vunpack.c.l.b16 %v2289
        %v2425 = vunpack.c.h.b16 %v2289
        %v2426 = vunpack.c.l.b16 %v2290
        %v2427 = vunpack.c.h.b16 %v2290
        %v2428 = vunpack.c.l.b16 %v2291
        %v2429 = vunpack.c.h.b16 %v2291
        %v2430 = vunpack.c.l.b16 %v2292
        %v2431 = vunpack.c.h.b16 %v2292
        %v2432 = vunpack.c.l.b16 %v2293
        %v2433 = vunpack.c.h.b16 %v2293
        %v2434 = vunpack.c.l.b16 %v2294
        %v2435 = vunpack.c.h.b16 %v2294
        %v2436 = vunpack.c.l.b16 %v2295
        %v2437 = vunpack.c.h.b16 %v2295
        %v2438 = vunpack.c.l.b16 %v2296
        %v2439 = vunpack.c.h.b16 %v2296
        %v2440 = vunpack.c.l.b16 %v2297
        %v2441 = vunpack.c.h.b16 %v2297
        %v2442 = vpack.c.b16 %v2380, %v2378
        %v2443 = vpack.c.b16 %v2381, %v2379
        %v2444 = vpack.c.b16 %v2384, %v2382
        %v2445 = vpack.c.b16 %v2385, %v2383
        %v2446 = vpack.c.b16 %v2388, %v2386
        %v2447 = vpack.c.b16 %v2389, %v2387
        %v2448 = vpack.c.b16 %v2392, %v2390
        %v2449 = vpack.c.b16 %v2393, %v2391
        %v2450 = vpack.c.b16 %v2396, %v2394
        %v2451 = vpack.c.b16 %v2397, %v2395
        %v2452 = vpack.c.b16 %v2400, %v2398
        %v2453 = vpack.c.b16 %v2401, %v2399
        %v2454 = vpack.c.b16 %v2404, %v2402
        %v2455 = vpack.c.b16 %v2405, %v2403
        %v2456 = vpack.c.b16 %v2408, %v2406
        %v2457 = vpack.c.b16 %v2409, %v2407
        %v2458 = vpack.c.b16 %v2412, %v2410
        %v2459 = vpack.c.b16 %v2413, %v2411
        %v2460 = vpack.c.b16 %v2416, %v2414
        %v2461 = vpack.c.b16 %v2417, %v2415
        %v2462 = vpack.c.b16 %v2420, %v2418
        %v2463 = vpack.c.b16 %v2421, %v2419
        %v2464 = vpack.c.b16 %v2424, %v2422
        %v2465 = vpack.c.b16 %v2425, %v2423
        %v2466 = vpack.c.b16 %v2428, %v2426
        %v2467 = vpack.c.b16 %v2429, %v2427
        %v2468 = vpack.c.b16 %v2432, %v2430
        %v2469 = vpack.c.b16 %v2433, %v2431
        %v2470 = vpack.c.b16 %v2436, %v2434
        %v2471 = vpack.c.b16 %v2437, %v2435
        %v2472 = vpack.c.b16 %v2440, %v2438
        %v2473 = vpack.c.b16 %v2441, %v2439
        %2506 = vmatprep.subr.bf16.mxu0 0
        %2507 = vmatpush1.bf16.msra.mxu0 %v2298
        %2508 = vmatprep.subr.bf16.mxu0 0
        %2509 = vmatpush1.bf16.msra.mxu0 %v2299
        %2510 = vmatprep.subr.bf16.mxu0 0
        %2511 = vmatpush1.bf16.msra.mxu0 %v2300
        %2512 = vmatprep.subr.bf16.mxu0 0
        %2513 = vmatpush1.bf16.msra.mxu0 %v2301
        %2514 = vmatprep.subr.bf16.mxu0 0
        %2515 = vmatpush1.bf16.msra.mxu0 %v2302
        %2516 = vmatprep.subr.bf16.mxu0 0
        %2517 = vmatpush1.bf16.msra.mxu0 %v2303
        %2518 = vmatprep.subr.bf16.mxu0 0
        %2519 = vmatpush1.bf16.msra.mxu0 %v2304
        %2520 = vmatprep.subr.bf16.mxu0 0
        %2521 = vmatpush1.bf16.msra.mxu0 %v2305
        %2522 = vmatprep.subr.bf16.mxu0 0
        %2523 = vmatpush1.bf16.msra.mxu0 %v2306
        %2524 = vmatprep.subr.bf16.mxu0 0
        %2525 = vmatpush1.bf16.msra.mxu0 %v2307
        %2526 = vmatprep.subr.bf16.mxu0 0
        %2527 = vmatpush1.bf16.msra.mxu0 %v2308
        %2528 = vmatprep.subr.bf16.mxu0 0
        %2529 = vmatpush1.bf16.msra.mxu0 %v2309
        %2530 = vmatprep.subr.bf16.mxu0 0
        %2531 = vmatpush1.bf16.msra.mxu0 %v2310
        %2532 = vmatprep.subr.bf16.mxu0 0
        %2533 = vmatpush1.bf16.msra.mxu0 %v2311
        %2534 = vmatprep.subr.bf16.mxu0 0
        %2535 = vmatpush1.bf16.msra.mxu0 %v2312
        %2536 = vmatprep.subr.bf16.mxu0 0
        %2537 = vmatpush1.bf16.msra.mxu0 %v2313
        %2538 = vmatprep.mubr.bf16.mxu0 %v2443
        %2539 = vmatmul.mubr.bf16.gmra.mrb[0].mxu0 %v2442
        %v2540 = vpop.f32.mrb[0].mxu0
        %v2541 = vadd.f32 %v2314, %v2540
        %v2542 = vpop.f32.mrb[0].mxu0
        %v2543 = vpop.f32.mrb[0].mxu0
        %v2544 = vadd.f32 %v2315, %v2543
        %v2545 = vpop.f32.mrb[0].mxu0
        %2546 = vmatprep.mubr.bf16.mxu0 %v2445
        %2547 = vmatmul.mubr.bf16.gmra.mrb[0].mxu0 %v2444
        %v2548 = vpop.f32.mrb[0].mxu0
        %v2549 = vadd.f32 %v2316, %v2548
        %v2550 = vpop.f32.mrb[0].mxu0
        %v2551 = vpop.f32.mrb[0].mxu0
        %v2552 = vadd.f32 %v2317, %v2551
        %v2553 = vpop.f32.mrb[0].mxu0
        %2554 = vmatprep.mubr.bf16.mxu0 %v2447
        %2555 = vmatmul.mubr.bf16.gmra.mrb[0].mxu0 %v2446
        %v2556 = vpop.f32.mrb[0].mxu0
        %v2557 = vadd.f32 %v2318, %v2556
        %v2558 = vpop.f32.mrb[0].mxu0
        %v2559 = vpop.f32.mrb[0].mxu0
        %v2560 = vadd.f32 %v2319, %v2559
        %v2561 = vpop.f32.mrb[0].mxu0
        %2562 = vmatprep.mubr.bf16.mxu0 %v2449
        %2563 = vmatmul.mubr.bf16.gmra.mrb[0].mxu0 %v2448
        %v2564 = vpop.f32.mrb[0].mxu0
        %v2565 = vadd.f32 %v2320, %v2564
        %v2566 = vpop.f32.mrb[0].mxu0
        %v2567 = vpop.f32.mrb[0].mxu0
        %v2568 = vadd.f32 %v2321, %v2567
        %v2569 = vpop.f32.mrb[0].mxu0
        %2570 = vmatprep.mubr.bf16.mxu0 %v2451
        %2571 = vmatmul.mubr.bf16.gmra.mrb[0].mxu0 %v2450
        %v2572 = vpop.f32.mrb[0].mxu0
        %v2573 = vadd.f32 %v2322, %v2572
        %v2574 = vpop.f32.mrb[0].mxu0
        %v2575 = vpop.f32.mrb[0].mxu0
        %v2576 = vadd.f32 %v2323, %v2575
        %v2577 = vpop.f32.mrb[0].mxu0
        %2578 = vmatprep.mubr.bf16.mxu0 %v2453
        %2579 = vmatmul.mubr.bf16.gmra.mrb[0].mxu0 %v2452
        %v2580 = vpop.f32.mrb[0].mxu0
        %v2581 = vadd.f32 %v2324, %v2580
        %v2582 = vpop.f32.mrb[0].mxu0
        %v2583 = vpop.f32.mrb[0].mxu0
        %v2584 = vadd.f32 %v2325, %v2583
        %v2585 = vpop.f32.mrb[0].mxu0
        %2586 = vmatprep.mubr.bf16.mxu0 %v2455
        %2587 = vmatmul.mubr.bf16.gmra.mrb[0].mxu0 %v2454
        %v2588 = vpop.f32.mrb[0].mxu0
        %v2589 = vadd.f32 %v2326, %v2588
        %v2590 = vpop.f32.mrb[0].mxu0
        %v2591 = vpop.f32.mrb[0].mxu0
        %v2592 = vadd.f32 %v2327, %v2591
        %v2593 = vpop.f32.mrb[0].mxu0
        %2594 = vmatprep.mubr.bf16.mxu0 %v2457
        %2595 = vmatmul.mubr.bf16.gmra.mrb[0].mxu0 %v2456
        %v2596 = vpop.f32.mrb[0].mxu0
        %v2597 = vadd.f32 %v2328, %v2596
        %v2598 = vpop.f32.mrb[0].mxu0
        %v2599 = vpop.f32.mrb[0].mxu0
        %v2600 = vadd.f32 %v2329, %v2599
        %v2601 = vpop.f32.mrb[0].mxu0
        %2602 = vmatprep.mubr.bf16.mxu0 %v2459
        %2603 = vmatmul.mubr.bf16.gmra.mrb[0].mxu0 %v2458
        %v2604 = vpop.f32.mrb[0].mxu0
        %v2605 = vadd.f32 %v2330, %v2604
        %v2606 = vpop.f32.mrb[0].mxu0
        %v2607 = vpop.f32.mrb[0].mxu0
        %v2608 = vadd.f32 %v2331, %v2607
        %v2609 = vpop.f32.mrb[0].mxu0
        %2610 = vmatprep.mubr.bf16.mxu0 %v2461
        %2611 = vmatmul.mubr.bf16.gmra.mrb[0].mxu0 %v2460
        %v2612 = vpop.f32.mrb[0].mxu0
        %v2613 = vadd.f32 %v2332, %v2612
        %v2614 = vpop.f32.mrb[0].mxu0
        %v2615 = vpop.f32.mrb[0].mxu0
        %v2616 = vadd.f32 %v2333, %v2615
        %v2617 = vpop.f32.mrb[0].mxu0
        %2618 = vmatprep.mubr.bf16.mxu0 %v2463
        %2619 = vmatmul.mubr.bf16.gmra.mrb[0].mxu0 %v2462
        %v2620 = vpop.f32.mrb[0].mxu0
        %v2621 = vadd.f32 %v2334, %v2620
        %v2622 = vpop.f32.mrb[0].mxu0
        %v2623 = vpop.f32.mrb[0].mxu0
        %v2624 = vadd.f32 %v2335, %v2623
        %v2625 = vpop.f32.mrb[0].mxu0
        %2626 = vmatprep.mubr.bf16.mxu0 %v2465
        %2627 = vmatmul.mubr.bf16.gmra.mrb[0].mxu0 %v2464
        %v2628 = vpop.f32.mrb[0].mxu0
        %v2629 = vadd.f32 %v2336, %v2628
        %v2630 = vpop.f32.mrb[0].mxu0
        %v2631 = vpop.f32.mrb[0].mxu0
        %v2632 = vadd.f32 %v2337, %v2631
        %v2633 = vpop.f32.mrb[0].mxu0
        %2634 = vmatprep.mubr.bf16.mxu0 %v2467
        %2635 = vmatmul.mubr.bf16.gmra.mrb[0].mxu0 %v2466
        %v2636 = vpop.f32.mrb[0].mxu0
        %v2637 = vadd.f32 %v2338, %v2636
        %v2638 = vpop.f32.mrb[0].mxu0
        %v2639 = vpop.f32.mrb[0].mxu0
        %v2640 = vadd.f32 %v2339, %v2639
        %v2641 = vpop.f32.mrb[0].mxu0
        %2642 = vmatprep.mubr.bf16.mxu0 %v2469
        %2643 = vmatmul.mubr.bf16.gmra.mrb[0].mxu0 %v2468
        %v2644 = vpop.f32.mrb[0].mxu0
        %v2645 = vadd.f32 %v2340, %v2644
        %v2646 = vpop.f32.mrb[0].mxu0
        %v2647 = vpop.f32.mrb[0].mxu0
        %v2648 = vadd.f32 %v2341, %v2647
        %v2649 = vpop.f32.mrb[0].mxu0
        %2650 = vmatprep.mubr.bf16.mxu0 %v2471
        %2651 = vmatmul.mubr.bf16.gmra.mrb[0].mxu0 %v2470
        %v2652 = vpop.f32.mrb[0].mxu0
        %v2653 = vadd.f32 %v2342, %v2652
        %v2654 = vpop.f32.mrb[0].mxu0
        %v2655 = vpop.f32.mrb[0].mxu0
        %v2656 = vadd.f32 %v2343, %v2655
        %v2657 = vpop.f32.mrb[0].mxu0
        %2658 = vmatprep.mubr.bf16.mxu0 %v2473
        %2659 = vmatmul.mubr.bf16.gmra.mrb[0].mxu0 %v2472
        %v2660 = vpop.f32.mrb[0].mxu0
        %v2661 = vadd.f32 %v2344, %v2660
        %v2662 = vpop.f32.mrb[0].mxu0
        %v2663 = vpop.f32.mrb[0].mxu0
        %v2664 = vadd.f32 %v2345, %v2663
        %v2665 = vpop.f32.mrb[0].mxu0
        %2666 = vdwg.mxu0
        %v2667 = vxor.u32 %v2541, 2147483648
        %v2668 = vxor.u32 %v2544, 2147483648
        %v2669 = vxor.u32 %v2549, 2147483648
        %v2670 = vxor.u32 %v2552, 2147483648
        %v2671 = vxor.u32 %v2557, 2147483648
        %v2672 = vxor.u32 %v2560, 2147483648
        %v2673 = vxor.u32 %v2565, 2147483648
        %v2674 = vxor.u32 %v2568, 2147483648
        %v2675 = vxor.u32 %v2573, 2147483648
        %v2676 = vxor.u32 %v2576, 2147483648
        %v2677 = vxor.u32 %v2581, 2147483648
        %v2678 = vxor.u32 %v2584, 2147483648
        %v2679 = vxor.u32 %v2589, 2147483648
        %v2680 = vxor.u32 %v2592, 2147483648
        %v2681 = vxor.u32 %v2597, 2147483648
        %v2682 = vxor.u32 %v2600, 2147483648
        %v2683 = vxor.u32 %v2605, 2147483648
        %v2684 = vxor.u32 %v2608, 2147483648
        %v2685 = vxor.u32 %v2613, 2147483648
        %v2686 = vxor.u32 %v2616, 2147483648
        %v2687 = vxor.u32 %v2621, 2147483648
        %v2688 = vxor.u32 %v2624, 2147483648
        %v2689 = vxor.u32 %v2629, 2147483648
        %v2690 = vxor.u32 %v2632, 2147483648
        %v2691 = vxor.u32 %v2637, 2147483648
        %v2692 = vxor.u32 %v2640, 2147483648
        %v2693 = vxor.u32 %v2645, 2147483648
        %v2694 = vxor.u32 %v2648, 2147483648
        %v2695 = vxor.u32 %v2653, 2147483648
        %v2696 = vxor.u32 %v2656, 2147483648
        %v2697 = vxor.u32 %v2661, 2147483648
        %v2698 = vxor.u32 %v2664, 2147483648
        %v2699 = vmul.f32 %v2667, 1.442695
        %v2700 = vpow.pop %v2699
        %v2701 = vmul.f32 %v2668, 1.442695
        %v2702 = vpow.pop %v2701
        %v2703 = vmul.f32 %v2669, 1.442695
        %v2704 = vpow.pop %v2703
        %v2705 = vmul.f32 %v2670, 1.442695
        %v2706 = vpow.pop %v2705
        %v2707 = vmul.f32 %v2671, 1.442695
        %v2708 = vpow.pop %v2707
        %v2709 = vmul.f32 %v2672, 1.442695
        %v2710 = vpow.pop %v2709
        %v2711 = vmul.f32 %v2673, 1.442695
        %v2712 = vpow.pop %v2711
        %v2713 = vmul.f32 %v2674, 1.442695
        %v2714 = vpow.pop %v2713
        %v2715 = vmul.f32 %v2675, 1.442695
        %v2716 = vpow.pop %v2715
        %v2717 = vmul.f32 %v2676, 1.442695
        %v2718 = vpow.pop %v2717
        %v2719 = vmul.f32 %v2677, 1.442695
        %v2720 = vpow.pop %v2719
        %v2721 = vmul.f32 %v2678, 1.442695
        %v2722 = vpow.pop %v2721
        %v2723 = vmul.f32 %v2679, 1.442695
        %v2724 = vpow.pop %v2723
        %v2725 = vmul.f32 %v2680, 1.442695
        %v2726 = vpow.pop %v2725
        %v2727 = vmul.f32 %v2681, 1.442695
        %v2728 = vpow.pop %v2727
        %v2729 = vmul.f32 %v2682, 1.442695
        %v2730 = vpow.pop %v2729
        %v2731 = vmul.f32 %v2683, 1.442695
        %v2732 = vpow.pop %v2731
        %v2733 = vmul.f32 %v2684, 1.442695
        %v2734 = vpow.pop %v2733
        %v2735 = vmul.f32 %v2685, 1.442695
        %v2736 = vpow.pop %v2735
        %v2737 = vmul.f32 %v2686, 1.442695
        %v2738 = vpow.pop %v2737
        %v2739 = vmul.f32 %v2687, 1.442695
        %v2740 = vpow.pop %v2739
        %v2741 = vmul.f32 %v2688, 1.442695
        %v2742 = vpow.pop %v2741
        %v2743 = vmul.f32 %v2689, 1.442695
        %v2744 = vpow.pop %v2743
        %v2745 = vmul.f32 %v2690, 1.442695
        %v2746 = vpow.pop %v2745
        %v2747 = vmul.f32 %v2691, 1.442695
        %v2748 = vpow.pop %v2747
        %v2749 = vmul.f32 %v2692, 1.442695
        %v2750 = vpow.pop %v2749
        %v2751 = vmul.f32 %v2693, 1.442695
        %v2752 = vpow.pop %v2751
        %v2753 = vmul.f32 %v2694, 1.442695
        %v2754 = vpow.pop %v2753
        %v2755 = vmul.f32 %v2695, 1.442695
        %v2756 = vpow.pop %v2755
        %v2757 = vmul.f32 %v2696, 1.442695
        %v2758 = vpow.pop %v2757
        %v2759 = vmul.f32 %v2697, 1.442695
        %v2760 = vpow.pop %v2759
        %v2761 = vmul.f32 %v2698, 1.442695
        %v2762 = vpow.pop %v2761
        %v2763 = vadd.f32 %v2700, 1.0
        %v2764 = vadd.f32 %v2702, 1.0
        %v2765 = vadd.f32 %v2704, 1.0
        %v2766 = vadd.f32 %v2706, 1.0
        %v2767 = vadd.f32 %v2708, 1.0
        %v2768 = vadd.f32 %v2710, 1.0
        %v2769 = vadd.f32 %v2712, 1.0
        %v2770 = vadd.f32 %v2714, 1.0
        %v2771 = vadd.f32 %v2716, 1.0
        %v2772 = vadd.f32 %v2718, 1.0
        %v2773 = vadd.f32 %v2720, 1.0
        %v2774 = vadd.f32 %v2722, 1.0
        %v2775 = vadd.f32 %v2724, 1.0
        %v2776 = vadd.f32 %v2726, 1.0
        %v2777 = vadd.f32 %v2728, 1.0
        %v2778 = vadd.f32 %v2730, 1.0
        %v2779 = vadd.f32 %v2732, 1.0
        %v2780 = vadd.f32 %v2734, 1.0
        %v2781 = vadd.f32 %v2736, 1.0
        %v2782 = vadd.f32 %v2738, 1.0
        %v2783 = vadd.f32 %v2740, 1.0
        %v2784 = vadd.f32 %v2742, 1.0
        %v2785 = vadd.f32 %v2744, 1.0
        %v2786 = vadd.f32 %v2746, 1.0
        %v2787 = vadd.f32 %v2748, 1.0
        %v2788 = vadd.f32 %v2750, 1.0
        %v2789 = vadd.f32 %v2752, 1.0
        %v2790 = vadd.f32 %v2754, 1.0
        %v2791 = vadd.f32 %v2756, 1.0
        %v2792 = vadd.f32 %v2758, 1.0
        %v2793 = vadd.f32 %v2760, 1.0
        %v2794 = vadd.f32 %v2762, 1.0
        %v2795 = vrcp.pop %v2763
        %v2796 = vmul.f32 1.0, %v2795
        %v2797 = vrcp.pop %v2764
        %v2798 = vmul.f32 1.0, %v2797
        %v2799 = vrcp.pop %v2765
        %v2800 = vmul.f32 1.0, %v2799
        %v2801 = vrcp.pop %v2766
        %v2802 = vmul.f32 1.0, %v2801
        %v2803 = vrcp.pop %v2767
        %v2804 = vmul.f32 1.0, %v2803
        %v2805 = vrcp.pop %v2768
        %v2806 = vmul.f32 1.0, %v2805
        %v2807 = vrcp.pop %v2769
        %v2808 = vmul.f32 1.0, %v2807
        %v2809 = vrcp.pop %v2770
        %v2810 = vmul.f32 1.0, %v2809
        %v2811 = vrcp.pop %v2771
        %v2812 = vmul.f32 1.0, %v2811
        %v2813 = vrcp.pop %v2772
        %v2814 = vmul.f32 1.0, %v2813
        %v2815 = vrcp.pop %v2773
        %v2816 = vmul.f32 1.0, %v2815
        %v2817 = vrcp.pop %v2774
        %v2818 = vmul.f32 1.0, %v2817
        %v2819 = vrcp.pop %v2775
        %v2820 = vmul.f32 1.0, %v2819
        %v2821 = vrcp.pop %v2776
        %v2822 = vmul.f32 1.0, %v2821
        %v2823 = vrcp.pop %v2777
        %v2824 = vmul.f32 1.0, %v2823
        %v2825 = vrcp.pop %v2778
        %v2826 = vmul.f32 1.0, %v2825
        %v2827 = vrcp.pop %v2779
        %v2828 = vmul.f32 1.0, %v2827
        %v2829 = vrcp.pop %v2780
        %v2830 = vmul.f32 1.0, %v2829
        %v2831 = vrcp.pop %v2781
        %v2832 = vmul.f32 1.0, %v2831
        %v2833 = vrcp.pop %v2782
        %v2834 = vmul.f32 1.0, %v2833
        %v2835 = vrcp.pop %v2783
        %v2836 = vmul.f32 1.0, %v2835
        %v2837 = vrcp.pop %v2784
        %v2838 = vmul.f32 1.0, %v2837
        %v2839 = vrcp.pop %v2785
        %v2840 = vmul.f32 1.0, %v2839
        %v2841 = vrcp.pop %v2786
        %v2842 = vmul.f32 1.0, %v2841
        %v2843 = vrcp.pop %v2787
        %v2844 = vmul.f32 1.0, %v2843
        %v2845 = vrcp.pop %v2788
        %v2846 = vmul.f32 1.0, %v2845
        %v2847 = vrcp.pop %v2789
        %v2848 = vmul.f32 1.0, %v2847
        %v2849 = vrcp.pop %v2790
        %v2850 = vmul.f32 1.0, %v2849
        %v2851 = vrcp.pop %v2791
        %v2852 = vmul.f32 1.0, %v2851
        %v2853 = vrcp.pop %v2792
        %v2854 = vmul.f32 1.0, %v2853
        %v2855 = vrcp.pop %v2793
        %v2856 = vmul.f32 1.0, %v2855
        %v2857 = vrcp.pop %v2794
        %v2858 = vmul.f32 1.0, %v2857
        %v2859 = vadd.f32 %v2796, 1.0
        %v2860 = vadd.f32 %v2798, 1.0
        %v2861 = vadd.f32 %v2800, 1.0
        %v2862 = vadd.f32 %v2802, 1.0
        %v2863 = vadd.f32 %v2804, 1.0
        %v2864 = vadd.f32 %v2806, 1.0
        %v2865 = vadd.f32 %v2808, 1.0
        %v2866 = vadd.f32 %v2810, 1.0
        %v2867 = vadd.f32 %v2812, 1.0
        %v2868 = vadd.f32 %v2814, 1.0
        %v2869 = vadd.f32 %v2816, 1.0
        %v2870 = vadd.f32 %v2818, 1.0
        %v2871 = vadd.f32 %v2820, 1.0
        %v2872 = vadd.f32 %v2822, 1.0
        %v2873 = vadd.f32 %v2824, 1.0
        %v2874 = vadd.f32 %v2826, 1.0
        %v2875 = vadd.f32 %v2828, 1.0
        %v2876 = vadd.f32 %v2830, 1.0
        %v2877 = vadd.f32 %v2832, 1.0
        %v2878 = vadd.f32 %v2834, 1.0
        %v2879 = vadd.f32 %v2836, 1.0
        %v2880 = vadd.f32 %v2838, 1.0
        %v2881 = vadd.f32 %v2840, 1.0
        %v2882 = vadd.f32 %v2842, 1.0
        %v2883 = vadd.f32 %v2844, 1.0
        %v2884 = vadd.f32 %v2846, 1.0
        %v2885 = vadd.f32 %v2848, 1.0
        %v2886 = vadd.f32 %v2850, 1.0
        %v2887 = vadd.f32 %v2852, 1.0
        %v2888 = vadd.f32 %v2854, 1.0
        %v2889 = vadd.f32 %v2856, 1.0
        %v2890 = vadd.f32 %v2858, 1.0
        %v2891 = vld [vmem:[%s279] sm:$0xff]
        %v2892 = vld [vmem:[%s279 + $0x8] sm:$0xff]
        %v2893 = vld [vmem:[%s279 + $0x10] sm:$0xff]
        %v2894 = vld [vmem:[%s279 + $0x18] sm:$0xff]
        %v2895 = vld [vmem:[%s279 + $0x20] sm:$0xff]
        %v2896 = vld [vmem:[%s279 + $0x28] sm:$0xff]
        %v2897 = vld [vmem:[%s279 + $0x30] sm:$0xff]
        %v2898 = vld [vmem:[%s279 + $0x38] sm:$0xff]
        %v2899 = vld [vmem:[%s279 + $0x40] sm:$0xff]
        %v2900 = vld [vmem:[%s279 + $0x48] sm:$0xff]
        %v2901 = vld [vmem:[%s279 + $0x50] sm:$0xff]
        %v2902 = vld [vmem:[%s279 + $0x58] sm:$0xff]
        %v2903 = vld [vmem:[%s279 + $0x60] sm:$0xff]
        %v2904 = vld [vmem:[%s279 + $0x68] sm:$0xff]
        %v2905 = vld [vmem:[%s279 + $0x70] sm:$0xff]
        %v2906 = vld [vmem:[%s279 + $0x78] sm:$0xff]
        %v2907 = vld [vmem:[%s279 + $0x80] sm:$0xff]
        %v2908 = vld [vmem:[%s279 + $0x88] sm:$0xff]
        %v2909 = vld [vmem:[%s279 + $0x90] sm:$0xff]
        %v2910 = vld [vmem:[%s279 + $0x98] sm:$0xff]
        %v2911 = vld [vmem:[%s279 + $0xa0] sm:$0xff]
        %v2912 = vld [vmem:[%s279 + $0xa8] sm:$0xff]
        %v2913 = vld [vmem:[%s279 + $0xb0] sm:$0xff]
        %v2914 = vld [vmem:[%s279 + $0xb8] sm:$0xff]
        %v2915 = vld [vmem:[%s279 + $0xc0] sm:$0xff]
        %v2916 = vld [vmem:[%s279 + $0xc8] sm:$0xff]
        %v2917 = vld [vmem:[%s279 + $0xd0] sm:$0xff]
        %v2918 = vld [vmem:[%s279 + $0xd8] sm:$0xff]
        %v2919 = vld [vmem:[%s279 + $0xe0] sm:$0xff]
        %v2920 = vld [vmem:[%s279 + $0xe8] sm:$0xff]
        %v2921 = vld [vmem:[%s279 + $0xf0] sm:$0xff]
        %v2922 = vld [vmem:[%s279 + $0xf8] sm:$0xff]
        %v2923 = vld [vmem:[%s279 + $0x100] sm:$0xff]
        %v2924 = vld [vmem:[%s279 + $0x108] sm:$0xff]
        %v2925 = vld [vmem:[%s279 + $0x110] sm:$0xff]
        %v2926 = vld [vmem:[%s279 + $0x118] sm:$0xff]
        %v2927 = vld [vmem:[%s279 + $0x120] sm:$0xff]
        %v2928 = vld [vmem:[%s279 + $0x128] sm:$0xff]
        %v2929 = vld [vmem:[%s279 + $0x130] sm:$0xff]
        %v2930 = vld [vmem:[%s279 + $0x138] sm:$0xff]
        %v2931 = vld [vmem:[%s279 + $0x140] sm:$0xff]
        %v2932 = vld [vmem:[%s279 + $0x148] sm:$0xff]
        %v2933 = vld [vmem:[%s279 + $0x150] sm:$0xff]
        %v2934 = vld [vmem:[%s279 + $0x158] sm:$0xff]
        %v2935 = vld [vmem:[%s279 + $0x160] sm:$0xff]
        %v2936 = vld [vmem:[%s279 + $0x168] sm:$0xff]
        %v2937 = vld [vmem:[%s279 + $0x170] sm:$0xff]
        %v2938 = vld [vmem:[%s279 + $0x178] sm:$0xff]
        %v2939 = vld [vmem:[%s279 + $0x180] sm:$0xff]
        %v2940 = vld [vmem:[%s279 + $0x188] sm:$0xff]
        %v2941 = vld [vmem:[%s279 + $0x190] sm:$0xff]
        %v2942 = vld [vmem:[%s279 + $0x198] sm:$0xff]
        %v2943 = vld [vmem:[%s279 + $0x1a0] sm:$0xff]
        %v2944 = vld [vmem:[%s279 + $0x1a8] sm:$0xff]
        %v2945 = vld [vmem:[%s279 + $0x1b0] sm:$0xff]
        %v2946 = vld [vmem:[%s279 + $0x1b8] sm:$0xff]
        %v2947 = vld [vmem:[%s279 + $0x1c0] sm:$0xff]
        %v2948 = vld [vmem:[%s279 + $0x1c8] sm:$0xff]
        %v2949 = vld [vmem:[%s279 + $0x1d0] sm:$0xff]
        %v2950 = vld [vmem:[%s279 + $0x1d8] sm:$0xff]
        %v2951 = vld [vmem:[%s279 + $0x1e0] sm:$0xff]
        %v2952 = vld [vmem:[%s279 + $0x1e8] sm:$0xff]
        %v2953 = vld [vmem:[%s279 + $0x1f0] sm:$0xff]
        %v2954 = vld [vmem:[%s279 + $0x1f8] sm:$0xff]
        %2956 = vset.pattern.permute.xlu0 0
        %2957 = vperm.xlu0 %2956, %v2859
        %v2958 = vpop.permute.xlu0 %2957
        %2961 = vset.pattern.permute.xlu0 0
        %2962 = vperm.xlu0 %2961, %v2860
        %v2963 = vpop.permute.xlu0 %2962
        %2966 = vset.pattern.permute.xlu0 0
        %2967 = vperm.xlu0 %2966, %v2861
        %v2968 = vpop.permute.xlu0 %2967
        %2971 = vset.pattern.permute.xlu0 0
        %2972 = vperm.xlu0 %2971, %v2862
        %v2973 = vpop.permute.xlu0 %2972
        %2976 = vset.pattern.permute.xlu0 0
        %2977 = vperm.xlu0 %2976, %v2863
        %v2978 = vpop.permute.xlu0 %2977
        %2981 = vset.pattern.permute.xlu0 0
        %2982 = vperm.xlu0 %2981, %v2864
        %v2983 = vpop.permute.xlu0 %2982
        %2986 = vset.pattern.permute.xlu0 0
        %2987 = vperm.xlu0 %2986, %v2865
        %v2988 = vpop.permute.xlu0 %2987
        %2991 = vset.pattern.permute.xlu0 0
        %2992 = vperm.xlu0 %2991, %v2866
        %v2993 = vpop.permute.xlu0 %2992
        %2996 = vset.pattern.permute.xlu0 0
        %2997 = vperm.xlu0 %2996, %v2867
        %v2998 = vpop.permute.xlu0 %2997
        %3001 = vset.pattern.permute.xlu0 0
        %3002 = vperm.xlu0 %3001, %v2868
        %v3003 = vpop.permute.xlu0 %3002
        %3006 = vset.pattern.permute.xlu0 0
        %3007 = vperm.xlu0 %3006, %v2869
        %v3008 = vpop.permute.xlu0 %3007
        %3011 = vset.pattern.permute.xlu0 0
        %3012 = vperm.xlu0 %3011, %v2870
        %v3013 = vpop.permute.xlu0 %3012
        %3016 = vset.pattern.permute.xlu0 0
        %3017 = vperm.xlu0 %3016, %v2871
        %v3018 = vpop.permute.xlu0 %3017
        %3021 = vset.pattern.permute.xlu0 0
        %3022 = vperm.xlu0 %3021, %v2872
        %v3023 = vpop.permute.xlu0 %3022
        %3026 = vset.pattern.permute.xlu0 0
        %3027 = vperm.xlu0 %3026, %v2873
        %v3028 = vpop.permute.xlu0 %3027
        %3031 = vset.pattern.permute.xlu0 0
        %3032 = vperm.xlu0 %3031, %v2874
        %v3033 = vpop.permute.xlu0 %3032
        %3036 = vset.pattern.permute.xlu0 0
        %3037 = vperm.xlu0 %3036, %v2875
        %v3038 = vpop.permute.xlu0 %3037
        %3041 = vset.pattern.permute.xlu0 0
        %3042 = vperm.xlu0 %3041, %v2876
        %v3043 = vpop.permute.xlu0 %3042
        %3046 = vset.pattern.permute.xlu0 0
        %3047 = vperm.xlu0 %3046, %v2877
        %v3048 = vpop.permute.xlu0 %3047
        %3051 = vset.pattern.permute.xlu0 0
        %3052 = vperm.xlu0 %3051, %v2878
        %v3053 = vpop.permute.xlu0 %3052
        %3056 = vset.pattern.permute.xlu0 0
        %3057 = vperm.xlu0 %3056, %v2879
        %v3058 = vpop.permute.xlu0 %3057
        %3061 = vset.pattern.permute.xlu0 0
        %3062 = vperm.xlu0 %3061, %v2880
        %v3063 = vpop.permute.xlu0 %3062
        %3066 = vset.pattern.permute.xlu0 0
        %3067 = vperm.xlu0 %3066, %v2881
        %v3068 = vpop.permute.xlu0 %3067
        %3071 = vset.pattern.permute.xlu0 0
        %3072 = vperm.xlu0 %3071, %v2882
        %v3073 = vpop.permute.xlu0 %3072
        %3076 = vset.pattern.permute.xlu0 0
        %3077 = vperm.xlu0 %3076, %v2883
        %v3078 = vpop.permute.xlu0 %3077
        %3081 = vset.pattern.permute.xlu0 0
        %3082 = vperm.xlu0 %3081, %v2884
        %v3083 = vpop.permute.xlu0 %3082
        %3086 = vset.pattern.permute.xlu0 0
        %3087 = vperm.xlu0 %3086, %v2885
        %v3088 = vpop.permute.xlu0 %3087
        %3091 = vset.pattern.permute.xlu0 0
        %3092 = vperm.xlu0 %3091, %v2886
        %v3093 = vpop.permute.xlu0 %3092
        %3096 = vset.pattern.permute.xlu0 0
        %3097 = vperm.xlu0 %3096, %v2887
        %v3098 = vpop.permute.xlu0 %3097
        %3101 = vset.pattern.permute.xlu0 0
        %3102 = vperm.xlu0 %3101, %v2888
        %v3103 = vpop.permute.xlu0 %3102
        %3106 = vset.pattern.permute.xlu0 0
        %3107 = vperm.xlu0 %3106, %v2889
        %v3108 = vpop.permute.xlu0 %3107
        %3111 = vset.pattern.permute.xlu0 0
        %3112 = vperm.xlu0 %3111, %v2890
        %v3113 = vpop.permute.xlu0 %3112
        %v3115 = vmul.f32 %v2891, %v2958
        %v3116 = vmul.f32 %v2892, %v2958
        %v3117 = vmul.f32 %v2893, %v2963
        %v3118 = vmul.f32 %v2894, %v2963
        %v3119 = vmul.f32 %v2895, %v2968
        %v3120 = vmul.f32 %v2896, %v2968
        %v3121 = vmul.f32 %v2897, %v2973
        %v3122 = vmul.f32 %v2898, %v2973
        %v3123 = vmul.f32 %v2899, %v2978
        %v3124 = vmul.f32 %v2900, %v2978
        %v3125 = vmul.f32 %v2901, %v2983
        %v3126 = vmul.f32 %v2902, %v2983
        %v3127 = vmul.f32 %v2903, %v2988
        %v3128 = vmul.f32 %v2904, %v2988
        %v3129 = vmul.f32 %v2905, %v2993
        %v3130 = vmul.f32 %v2906, %v2993
        %v3131 = vmul.f32 %v2907, %v2998
        %v3132 = vmul.f32 %v2908, %v2998
        %v3133 = vmul.f32 %v2909, %v3003
        %v3134 = vmul.f32 %v2910, %v3003
        %v3135 = vmul.f32 %v2911, %v3008
        %v3136 = vmul.f32 %v2912, %v3008
        %v3137 = vmul.f32 %v2913, %v3013
        %v3138 = vmul.f32 %v2914, %v3013
        %v3139 = vmul.f32 %v2915, %v3018
        %v3140 = vmul.f32 %v2916, %v3018
        %v3141 = vmul.f32 %v2917, %v3023
        %v3142 = vmul.f32 %v2918, %v3023
        %v3143 = vmul.f32 %v2919, %v3028
        %v3144 = vmul.f32 %v2920, %v3028
        %v3145 = vmul.f32 %v2921, %v3033
        %v3146 = vmul.f32 %v2922, %v3033
        %v3147 = vmul.f32 %v2923, %v3038
        %v3148 = vmul.f32 %v2924, %v3038
        %v3149 = vmul.f32 %v2925, %v3043
        %v3150 = vmul.f32 %v2926, %v3043
        %v3151 = vmul.f32 %v2927, %v3048
        %v3152 = vmul.f32 %v2928, %v3048
        %v3153 = vmul.f32 %v2929, %v3053
        %v3154 = vmul.f32 %v2930, %v3053
        %v3155 = vmul.f32 %v2931, %v3058
        %v3156 = vmul.f32 %v2932, %v3058
        %v3157 = vmul.f32 %v2933, %v3063
        %v3158 = vmul.f32 %v2934, %v3063
        %v3159 = vmul.f32 %v2935, %v3068
        %v3160 = vmul.f32 %v2936, %v3068
        %v3161 = vmul.f32 %v2937, %v3073
        %v3162 = vmul.f32 %v2938, %v3073
        %v3163 = vmul.f32 %v2939, %v3078
        %v3164 = vmul.f32 %v2940, %v3078
        %v3165 = vmul.f32 %v2941, %v3083
        %v3166 = vmul.f32 %v2942, %v3083
        %v3167 = vmul.f32 %v2943, %v3088
        %v3168 = vmul.f32 %v2944, %v3088
        %v3169 = vmul.f32 %v2945, %v3093
        %v3170 = vmul.f32 %v2946, %v3093
        %v3171 = vmul.f32 %v2947, %v3098
        %v3172 = vmul.f32 %v2948, %v3098
        %v3173 = vmul.f32 %v2949, %v3103
        %v3174 = vmul.f32 %v2950, %v3103
        %v3175 = vmul.f32 %v2951, %v3108
        %v3176 = vmul.f32 %v2952, %v3108
        %v3177 = vmul.f32 %v2953, %v3113
        %v3178 = vmul.f32 %v2954, %v3113
        %3179 = vst [vmem:[%s279] sm:$0xff] %v3115
        %3180 = vst [vmem:[%s279 + $0x8] sm:$0xff] %v3116
        %3181 = vst [vmem:[%s279 + $0x10] sm:$0xff] %v3117
        %3182 = vst [vmem:[%s279 + $0x18] sm:$0xff] %v3118
        %3183 = vst [vmem:[%s279 + $0x20] sm:$0xff] %v3119
        %3184 = vst [vmem:[%s279 + $0x28] sm:$0xff] %v3120
        %3185 = vst [vmem:[%s279 + $0x30] sm:$0xff] %v3121
        %3186 = vst [vmem:[%s279 + $0x38] sm:$0xff] %v3122
        %3187 = vst [vmem:[%s279 + $0x40] sm:$0xff] %v3123
        %3188 = vst [vmem:[%s279 + $0x48] sm:$0xff] %v3124
        %3189 = vst [vmem:[%s279 + $0x50] sm:$0xff] %v3125
        %3190 = vst [vmem:[%s279 + $0x58] sm:$0xff] %v3126
        %3191 = vst [vmem:[%s279 + $0x60] sm:$0xff] %v3127
        %3192 = vst [vmem:[%s279 + $0x68] sm:$0xff] %v3128
        %3193 = vst [vmem:[%s279 + $0x70] sm:$0xff] %v3129
        %3194 = vst [vmem:[%s279 + $0x78] sm:$0xff] %v3130
        %3195 = vst [vmem:[%s279 + $0x80] sm:$0xff] %v3131
        %3196 = vst [vmem:[%s279 + $0x88] sm:$0xff] %v3132
        %3197 = vst [vmem:[%s279 + $0x90] sm:$0xff] %v3133
        %3198 = vst [vmem:[%s279 + $0x98] sm:$0xff] %v3134
        %3199 = vst [vmem:[%s279 + $0xa0] sm:$0xff] %v3135
        %3200 = vst [vmem:[%s279 + $0xa8] sm:$0xff] %v3136
        %3201 = vst [vmem:[%s279 + $0xb0] sm:$0xff] %v3137
        %3202 = vst [vmem:[%s279 + $0xb8] sm:$0xff] %v3138
        %3203 = vst [vmem:[%s279 + $0xc0] sm:$0xff] %v3139
        %3204 = vst [vmem:[%s279 + $0xc8] sm:$0xff] %v3140
        %3205 = vst [vmem:[%s279 + $0xd0] sm:$0xff] %v3141
        %3206 = vst [vmem:[%s279 + $0xd8] sm:$0xff] %v3142
        %3207 = vst [vmem:[%s279 + $0xe0] sm:$0xff] %v3143
        %3208 = vst [vmem:[%s279 + $0xe8] sm:$0xff] %v3144
        %3209 = vst [vmem:[%s279 + $0xf0] sm:$0xff] %v3145
        %3210 = vst [vmem:[%s279 + $0xf8] sm:$0xff] %v3146
        %3211 = vst [vmem:[%s279 + $0x100] sm:$0xff] %v3147
        %3212 = vst [vmem:[%s279 + $0x108] sm:$0xff] %v3148
        %3213 = vst [vmem:[%s279 + $0x110] sm:$0xff] %v3149
        %3214 = vst [vmem:[%s279 + $0x118] sm:$0xff] %v3150
        %3215 = vst [vmem:[%s279 + $0x120] sm:$0xff] %v3151
        %3216 = vst [vmem:[%s279 + $0x128] sm:$0xff] %v3152
        %3217 = vst [vmem:[%s279 + $0x130] sm:$0xff] %v3153
        %3218 = vst [vmem:[%s279 + $0x138] sm:$0xff] %v3154
        %3219 = vst [vmem:[%s279 + $0x140] sm:$0xff] %v3155
        %3220 = vst [vmem:[%s279 + $0x148] sm:$0xff] %v3156
        %3221 = vst [vmem:[%s279 + $0x150] sm:$0xff] %v3157
        %3222 = vst [vmem:[%s279 + $0x158] sm:$0xff] %v3158
        %3223 = vst [vmem:[%s279 + $0x160] sm:$0xff] %v3159
        %3224 = vst [vmem:[%s279 + $0x168] sm:$0xff] %v3160
        %3225 = vst [vmem:[%s279 + $0x170] sm:$0xff] %v3161
        %3226 = vst [vmem:[%s279 + $0x178] sm:$0xff] %v3162
        %3227 = vst [vmem:[%s279 + $0x180] sm:$0xff] %v3163
        %3228 = vst [vmem:[%s279 + $0x188] sm:$0xff] %v3164
        %3229 = vst [vmem:[%s279 + $0x190] sm:$0xff] %v3165
        %3230 = vst [vmem:[%s279 + $0x198] sm:$0xff] %v3166
        %3231 = vst [vmem:[%s279 + $0x1a0] sm:$0xff] %v3167
        %3232 = vst [vmem:[%s279 + $0x1a8] sm:$0xff] %v3168
        %3233 = vst [vmem:[%s279 + $0x1b0] sm:$0xff] %v3169
        %3234 = vst [vmem:[%s279 + $0x1b8] sm:$0xff] %v3170
        %3235 = vst [vmem:[%s279 + $0x1c0] sm:$0xff] %v3171
        %3236 = vst [vmem:[%s279 + $0x1c8] sm:$0xff] %v3172
        %3237 = vst [vmem:[%s279 + $0x1d0] sm:$0xff] %v3173
        %3238 = vst [vmem:[%s279 + $0x1d8] sm:$0xff] %v3174
        %3239 = vst [vmem:[%s279 + $0x1e0] sm:$0xff] %v3175
        %3240 = vst [vmem:[%s279 + $0x1e8] sm:$0xff] %v3176
        %3241 = vst [vmem:[%s279 + $0x1f0] sm:$0xff] %v3177
        %3242 = vst [vmem:[%s279 + $0x1f8] sm:$0xff] %v3178
      $region52: #{decoder_forward.1} parent=43 // pred_fallthru
        _
      %p3243 = scmp.lt.s32.totalorder %s21, 1
      %s3244 = scalar_select %p3243, %s21, 1
      %s3245 = smul.addr %s3244, 64
      %s3246 = smul.addr %s3245, 8
      %s3247 = scalar_lea.vmem %s6, %s3246
      // Predicated region
      $region53: #{decoder_forward.1} parent=43 // pred_check
        %p3248 = pneg %p180
      $region54: #{decoder_forward.1} parent=43 // pred_check_branch
        %3250 = sbr.rel (%p3248) target = $region56
      $region55: #{decoder_forward.1} parent=43 // pred_region
        _
      $region56: #{decoder_forward.1} parent=43 // pred_fallthru
        _
    $region44: #{decoder_forward.1} parent=5 // pred_fallthru
      _
    %p3251 = scmp.le.s32.totalorder 2, %s12
    // Predicated region
    $region57: #{decoder_forward.1} parent=5 // pred_check
      %p3252 = pneg %p3251
    $region58: #{decoder_forward.1} parent=5 // pred_check_branch
      %3254 = sbr.rel (%p3252) target = $region60
    $region59: #{decoder_forward.1} parent=5 // pred_region
      %s3255 = ssub.s32 %s12, 2
      // Predicated region
      $region61: #{decoder_forward.1} parent=59 // pred_check
        %p3256 = pneg %p186
      $region62: #{decoder_forward.1} parent=59 // pred_check_branch
        %3258 = sbr.rel (%p3256) target = $region64
      $region63: #{decoder_forward.1} parent=59 // pred_region
        %p3259 = scmp.lt.s32.totalorder %s23, 1
        %s3260 = scalar_select %p3259, %s23, 1
        %s3261 = smul.addr %s3260, 64
        %s3262 = smul.addr %s3261, 8
        %s3263 = scalar_lea.vmem %s6, %s3262
      $region64: #{decoder_forward.1} parent=59 // pred_fallthru
        _
    $region60: #{decoder_forward.1} parent=5 // pred_fallthru
      _
  $region6: #{decoder_forward.1} parent=0 // loop_footer
    %s16 = sadd.s32 1, %s12
  $region7: #{decoder_forward.1} parent=0 // loop_footer_branch
    %11 = sbr.rel target = $region3
  $region8: #{decoder_forward.1} parent=0 // loop_exit
    _

</llo_original>
